<compile_context>
chip_gen: v7x
topology: tpu7x:2x2x1
jax: 0.10.0
libtpu: 0.0.40
codegen_flags: <defaults>
</compile_context>

<pallas_src>
import functools

import jax
import jax.numpy as jnp
from jax.experimental import pallas as pl
from jax.experimental.pallas import tpu as pltpu


# -----------------------------------------------------------------------------
# Geometry helpers
# -----------------------------------------------------------------------------
def _branch_geom(L, k0, s0, pool0, k_mid, pool_f):
    l0 = (L - k0) // s0 + 1          # conv0 output length
    lp0 = l0 // pool0                # after MaxPool(pool0)
    l3 = lp0 - 3 * (k_mid - 1)       # after the three stride-1 convs
    lf = l3 // pool_f                # after the final MaxPool
    return pool0, lp0, k_mid, pool_f, lf


def _pick_batch_block(batch, max_blk=8):
    """Largest divisor of `batch` <= max_blk that keeps >= 2 grid steps."""
    divs = [k for k in range(1, min(batch, max_blk) + 1) if batch % k == 0]
    pref = [k for k in divs if batch // k >= 2]
    return max(pref) if pref else max(divs)


# -----------------------------------------------------------------------------
# Fused kernel: BOTH branches, conv0(+BN+ReLU)+pool -> 3x conv(+BN+ReLU) -> pool
# -----------------------------------------------------------------------------
def _fused_kernel(pf_ref, wf0_ref, sf0_ref, wfm_ref, sfm_ref,
                  pt_ref, wt0_ref, st0_ref, wtm_ref, stm_ref,
                  o_ref, *, bblk, cfg_f, cfg_t, compute_dtype):
    d = o_ref.shape[-1]

    def branch(p_ref, w0_ref, s0_ref, wm_ref, sm_ref, cfg):
        pool0, lp0, k_mid, pool_f, lf = cfg

        # ---- layer 0: ONE (bblk*pool0*lp0, ck) @ (ck, d) MXU matmul ----------
        p = p_ref[...]                                  # (bblk, pool0*lp0, ck)
        rows = bblk * pool0 * lp0
        y = jnp.dot(p.reshape(rows, p.shape[-1]), w0_ref[...],
                    preferred_element_type=jnp.float32)
        y = jnp.maximum(y + s0_ref[...], 0.0)           # folded BN shift + ReLU
        y = y.reshape(bblk, pool0 * lp0, d)

        # ---- fused MaxPool(pool0): tree-max over contiguous phase slabs ------
        act = y[:, 0:lp0, :]
        for i in range(1, pool0):
            act = jnp.maximum(act, y[:, i * lp0:(i + 1) * lp0, :])

        # ---- 3 stride-1 convs: each ONE combined-K (.., k*d) @ (k*d, d) dot --
        length = lp0
        for layer in range(3):
            l_out = length - (k_mid - 1)
            a = act.astype(compute_dtype)               # one cast, reused
            patch = jnp.concatenate(
                [a[:, k:k + l_out, :] for k in range(k_mid)], axis=2)
            z = jnp.dot(patch.reshape(bblk * l_out, k_mid * d), wm_ref[layer],
                        preferred_element_type=jnp.float32)
            act = jnp.maximum(z + sm_ref[layer], 0.0).reshape(bblk, l_out, d)
            length = l_out

        # ---- final MaxPool(pool_f): tree-max into pooled rows (no stores) ----
        pooled_rows = []
        for j in range(lf):
            r = act[:, j * pool_f:j * pool_f + 1, :]
            for i in range(1, pool_f):
                r = jnp.maximum(r, act[:, j * pool_f + i:j * pool_f + i + 1, :])
            pooled_rows.append(r)
        return pooled_rows                              # lf x (bblk, 1, d) f32

    rows_f = branch(pf_ref, wf0_ref, sf0_ref, wfm_ref, sfm_ref, cfg_f)
    rows_t = branch(pt_ref, wt0_ref, st0_ref, wtm_ref, stm_ref, cfg_t)

    # Single full-block store: rows [0:lf_f] = freq pooled, [lf_f:] = temporal.
    o_ref[...] = jnp.concatenate(rows_f + rows_t, axis=1).astype(o_ref.dtype)


# -----------------------------------------------------------------------------
# Layer-0 im2col (one conv_general_dilated_patches HLO per branch)
# -----------------------------------------------------------------------------
def _layer0_patches(x_ncl, k0, s0, pool0, lp0, ck_pad):
    """Phase-major im2col patches for the strided layer-0 conv.

    x_ncl : (B, C, L)
    out   : (B, pool0*lp0, ck_pad); row i*lp0 + j <-> pool phase i, position j;
            column c*k0 + k <-> input channel c, tap k (matches PyTorch
            weight.view(O, C*K) flattening).  Tail columns are zero-padding.
    """
    B = x_ncl.shape[0]
    p = jax.lax.conv_general_dilated_patches(
        x_ncl, filter_shape=(k0,), window_strides=(s0,), padding='VALID',
        dimension_numbers=('NCH', 'OIH', 'NHC'))        # (B, l0, C*k0), c-major
    ck = p.shape[-1]
    p = p[:, :lp0 * pool0, :]                           # rows kept by floor-pool
    p = p.reshape(B, lp0, pool0, ck).transpose(0, 2, 1, 3)
    p = p.reshape(B, pool0 * lp0, ck)                   # phase-major
    if ck_pad > ck:
        p = jnp.pad(p, ((0, 0), (0, 0), (0, ck_pad - ck)))
    return p


# -----------------------------------------------------------------------------
# Full forward pass
# -----------------------------------------------------------------------------
def feature_extractor_forward(x_ncl, params, *, fs, features=False,
                              compute_dtype=jnp.bfloat16, max_batch_block=8):
    # x_ncl: (B, n_measures, seq_l * fs)  -- PyTorch NCL layout.
    B, _, L = x_ncl.shape
    (wt0, st0), (wtm, stm) = params["temporal"]
    (wf0, sf0), (wfm, sfm) = params["freq"]
    d = wt0.shape[1]

    cfg_t = _branch_geom(L, fs // 2 + 1, fs // 8, 8, 8, 4)
    cfg_f = _branch_geom(L, fs * 4, fs // 3, 4, 6, 2)
    lf_t, lf_f = cfg_t[-1], cfg_f[-1]

    xc = x_ncl.astype(compute_dtype)
    pt = _layer0_patches(xc, fs // 2 + 1, fs // 8, cfg_t[0], cfg_t[1],
                         wt0.shape[0])
    pf = _layer0_patches(xc, fs * 4, fs // 3, cfg_f[0], cfg_f[1],
                         wf0.shape[0])

    bblk = _pick_batch_block(B, max_batch_block)
    kernel = functools.partial(_fused_kernel, bblk=bblk, cfg_f=cfg_f,
                               cfg_t=cfg_t, compute_dtype=compute_dtype)

    pooled = pl.pallas_call(
        kernel,
        out_shape=jax.ShapeDtypeStruct((B, lf_f + lf_t, d), jnp.float32),
        grid_spec=pltpu.PrefetchScalarGridSpec(
            num_scalar_prefetch=0,
            grid=(B // bblk,),
            in_specs=[
                pl.BlockSpec((bblk,) + pf.shape[1:], lambda b: (b, 0, 0)),
                pl.BlockSpec(wf0.shape, lambda b: (0, 0)),
                pl.BlockSpec(sf0.shape, lambda b: (0, 0)),
                pl.BlockSpec(wfm.shape, lambda b: (0, 0, 0)),
                pl.BlockSpec(sfm.shape, lambda b: (0, 0, 0)),
                pl.BlockSpec((bblk,) + pt.shape[1:], lambda b: (b, 0, 0)),
                pl.BlockSpec(wt0.shape, lambda b: (0, 0)),
                pl.BlockSpec(st0.shape, lambda b: (0, 0)),
                pl.BlockSpec(wtm.shape, lambda b: (0, 0, 0)),
                pl.BlockSpec(stm.shape, lambda b: (0, 0, 0)),
            ],
            out_specs=pl.BlockSpec((bblk, lf_f + lf_t, d), lambda b: (b, 0, 0)),
        ),
        compiler_params=pltpu.CompilerParams(
            dimension_semantics=("parallel",)),   # megacore: shard batch blocks
    )(pf, wf0, sf0, wfm, sfm, pt, wt0, st0, wtm, stm)

    # PyTorch: x.view(B, -1) on (B, C, L) flattens channel-major; cat([x_f, x_t]).
    xf = jnp.transpose(pooled[:, :lf_f, :], (0, 2, 1)).reshape(B, lf_f * d)
    xt = jnp.transpose(pooled[:, lf_f:, :], (0, 2, 1)).reshape(B, lf_t * d)
    feat = jnp.concatenate([xf, xt], axis=1)
    if features:
        return feat
    # Tiny (B, n_feat) @ (n_feat, 5) head: plain XLA (a standalone pallas_call
    # here is pure launch overhead).
    return feat @ params["lin_w"] + params["lin_b"]


# -----------------------------------------------------------------------------
# Parameter construction (deterministic, synthetic) + BN folding
# -----------------------------------------------------------------------------
def _make_raw_conv_bn(key, in_ch, out_ch, ksize):
    kw, kb, kg, kbeta, km, kv = jax.random.split(key, 6)
    w = jax.random.normal(kw, (out_ch, in_ch, ksize), jnp.float32) * 0.05
    bias = jax.random.normal(kb, (out_ch,), jnp.float32) * 0.05
    gamma = jax.random.uniform(kg, (out_ch,), jnp.float32, 0.5, 1.5)
    beta = jax.random.normal(kbeta, (out_ch,), jnp.float32) * 0.1
    rmean = jax.random.normal(km, (out_ch,), jnp.float32) * 0.1
    rvar = jax.random.uniform(kv, (out_ch,), jnp.float32, 0.5, 1.5)
    return w, bias, gamma, beta, rmean, rvar


def _fold_bn(raw, eps=1e-5):
    w, bias, gamma, beta, rmean, rvar = raw
    scale = gamma / jnp.sqrt(rvar + eps)
    shift = beta + (bias - rmean) * scale
    return w, scale, shift


def _fold_first(raw, ck_pad, dtype):
    """Layer-0 conv: (O, C, K) -> (ck_pad, O) with BN scale folded in."""
    w, scale, shift = _fold_bn(raw)
    o, c, k = w.shape
    wmat = w.reshape(o, c * k).T * scale[None, :]
    if ck_pad > c * k:
        wmat = jnp.pad(wmat, ((0, ck_pad - c * k), (0, 0)))
    return wmat.astype(dtype), shift.reshape(1, o).astype(jnp.float32)


def _fold_mid_stack(raws, dtype):
    """Stride-1 convs: each (O, I, K) -> (K*I, O) combined-K, stacked."""
    ws, ss = [], []
    for raw in raws:
        w, scale, shift = _fold_bn(raw)
        o, i, k = w.shape
        wm = jnp.transpose(w, (2, 1, 0)).reshape(k * i, o) * scale[None, :]
        ws.append(wm)
        ss.append(shift.reshape(1, o))
    return jnp.stack(ws).astype(dtype), jnp.stack(ss).astype(jnp.float32)


def make_params(key, n_measures, fs, L, d=64, n_out=5, dtype=jnp.bfloat16):
    ks = jax.random.split(key, 10)
    k0_t, kmid_t = fs // 2 + 1, 8
    k0_f, kmid_f = fs * 4, 6
    ck_t_pad = -(-(n_measures * k0_t) // 64) * 64   # e.g. 36 -> 64 (lane align)
    ck_f_pad = -(-(n_measures * k0_f) // 64) * 64   # e.g. 256 -> 256

    temporal = (
        _fold_first(_make_raw_conv_bn(ks[0], n_measures, 64, k0_t), ck_t_pad, dtype),
        _fold_mid_stack([_make_raw_conv_bn(ks[1], 64, d, kmid_t),
                         _make_raw_conv_bn(ks[2], d, d, kmid_t),
                         _make_raw_conv_bn(ks[3], d, d, kmid_t)], dtype),
    )
    freq = (
        _fold_first(_make_raw_conv_bn(ks[4], n_measures, 64, k0_f), ck_f_pad, dtype),
        _fold_mid_stack([_make_raw_conv_bn(ks[5], 64, d, kmid_f),
                         _make_raw_conv_bn(ks[6], d, d, kmid_f),
                         _make_raw_conv_bn(ks[7], d, d, kmid_f)], dtype),
    )
    # n_features derived from the same conv arithmetic the kernel uses.
    lf_t = _branch_geom(L, k0_t, fs // 8, 8, kmid_t, 4)[-1]
    lf_f = _branch_geom(L, k0_f, fs // 3, 4, kmid_f, 2)[-1]
    n_features = (lf_t + lf_f) * d
    lin_w = jax.random.normal(ks[8], (n_features, n_out), jnp.float32) * 0.05
    lin_b = jax.random.normal(ks[9], (n_out,), jnp.float32) * 0.05
    return {"temporal": temporal, "freq": freq, "lin_w": lin_w, "lin_b": lin_b}


# -----------------------------------------------------------------------------
if __name__ == "__main__":
    # Small, consistent hyper-params: n_measures=4, fs=16, seq_l=30 -> L=480.
    n_measures, fs, seq_l = 4, 16, 30
    B = 2
    L = seq_l * fs  # 480

    key = jax.random.PRNGKey(0)
    kx, kp = jax.random.split(key)
    params = make_params(kp, n_measures, fs, L)
    x = jax.random.normal(kx, (B, n_measures, L), jnp.float32)

    fwd = jax.jit(functools.partial(feature_extractor_forward, fs=fs,
                                    features=False))
    out = jax.block_until_ready(fwd(x, params))

    assert out.shape == (B, 5), out.shape
    assert bool(jnp.all(jnp.isfinite(out)))
    print("KERNEL_OK")
</pallas_src>

<mosaic_0001>
module attributes {stable_mosaic.version = 11 : i64} {
  func.func @_fused_kernel(%arg0: i32, %arg1: memref<1x84x256xbf16, #tpu.memory_space<vmem>>, %arg2: memref<256x64xbf16, #tpu.memory_space<vmem>>, %arg3: memref<1x64xf32, #tpu.memory_space<vmem>>, %arg4: memref<3x384x64xbf16, #tpu.memory_space<vmem>>, %arg5: memref<3x1x64xf32, #tpu.memory_space<vmem>>, %arg6: memref<1x232x64xbf16, #tpu.memory_space<vmem>>, %arg7: memref<64x64xbf16, #tpu.memory_space<vmem>>, %arg8: memref<1x64xf32, #tpu.memory_space<vmem>>, %arg9: memref<3x512x64xbf16, #tpu.memory_space<vmem>>, %arg10: memref<3x1x64xf32, #tpu.memory_space<vmem>>, %arg11: memref<1x5x64xf32, #tpu.memory_space<vmem>>) attributes {dimension_semantics = [#tpu.dimension_semantics<parallel>], iteration_bounds = array<i64: 2>, scalar_prefetch = 0 : i64, scratch_operands = 0 : i64, tpu.core_type = #tpu.core_type<tc>, window_params = [{transform_indices = @transform_0, window_bounds = array<i64: 1, 84, 256>}, {pipeline_mode = #tpu.pipeline_mode<synchronous>, transform_indices = @transform_1, window_bounds = array<i64: 256, 64>}, {pipeline_mode = #tpu.pipeline_mode<synchronous>, transform_indices = @transform_2, window_bounds = array<i64: 1, 64>}, {pipeline_mode = #tpu.pipeline_mode<synchronous>, transform_indices = @transform_3, window_bounds = array<i64: 3, 384, 64>}, {pipeline_mode = #tpu.pipeline_mode<synchronous>, transform_indices = @transform_4, window_bounds = array<i64: 3, 1, 64>}, {transform_indices = @transform_5, window_bounds = array<i64: 1, 232, 64>}, {pipeline_mode = #tpu.pipeline_mode<synchronous>, transform_indices = @transform_6, window_bounds = array<i64: 64, 64>}, {pipeline_mode = #tpu.pipeline_mode<synchronous>, transform_indices = @transform_7, window_bounds = array<i64: 1, 64>}, {pipeline_mode = #tpu.pipeline_mode<synchronous>, transform_indices = @transform_8, window_bounds = array<i64: 3, 512, 64>}, {pipeline_mode = #tpu.pipeline_mode<synchronous>, transform_indices = @transform_9, window_bounds = array<i64: 3, 1, 64>}, {transform_indices = @transform_10, window_bounds = array<i64: 1, 5, 64>}]} {
    %c0 = arith.constant 0 : index
    %c0_0 = arith.constant 0 : index
    %c0_1 = arith.constant 0 : index
    %0 = vector.load %arg1[%c0, %c0_0, %c0_1] : memref<1x84x256xbf16, #tpu.memory_space<vmem>>, vector<1x84x256xbf16>
    %1 = vector.shape_cast %0 : vector<1x84x256xbf16> to vector<84x256xbf16>
    %c0_2 = arith.constant 0 : index
    %c0_3 = arith.constant 0 : index
    %2 = vector.load %arg2[%c0_2, %c0_3] : memref<256x64xbf16, #tpu.memory_space<vmem>>, vector<256x64xbf16>
    %cst = arith.constant dense<0.000000e+00> : vector<84x64xf32>
    %3 = tpu.matmul %1, %2, %cst {dimension_numbers = #tpu.dot_dimension_numbers<[1], [0], [0], [1], [0, 0, 1, 1], [], []>} : vector<84x256xbf16>, vector<256x64xbf16>, vector<84x64xf32> -> vector<84x64xf32>
    %c0_4 = arith.constant 0 : index
    %c0_5 = arith.constant 0 : index
    %4 = vector.load %arg3[%c0_4, %c0_5] : memref<1x64xf32, #tpu.memory_space<vmem>>, vector<1x64xf32>
    %5 = vector.broadcast %4 : vector<1x64xf32> to vector<84x64xf32>
    %6 = arith.addf %3, %5 : vector<84x64xf32>
    %cst_6 = arith.constant 0.000000e+00 : f32
    %7 = vector.broadcast %cst_6 : f32 to vector<84x64xf32>
    %8 = arith.maximumf %6, %7 : vector<84x64xf32>
    %9 = vector.shape_cast %8 : vector<84x64xf32> to vector<1x84x64xf32>
    %10 = vector.extract_strided_slice %9 {offsets = [0, 0, 0], sizes = [1, 21, 64], strides = [1, 1, 1]} : vector<1x84x64xf32> to vector<1x21x64xf32>
    %11 = vector.extract_strided_slice %9 {offsets = [0, 21, 0], sizes = [1, 21, 64], strides = [1, 1, 1]} : vector<1x84x64xf32> to vector<1x21x64xf32>
    %12 = arith.maximumf %10, %11 : vector<1x21x64xf32>
    %13 = vector.extract_strided_slice %9 {offsets = [0, 42, 0], sizes = [1, 21, 64], strides = [1, 1, 1]} : vector<1x84x64xf32> to vector<1x21x64xf32>
    %14 = arith.maximumf %12, %13 : vector<1x21x64xf32>
    %15 = vector.extract_strided_slice %9 {offsets = [0, 63, 0], sizes = [1, 21, 64], strides = [1, 1, 1]} : vector<1x84x64xf32> to vector<1x21x64xf32>
    %16 = arith.maximumf %14, %15 : vector<1x21x64xf32>
    %17 = arith.truncf %16 : vector<1x21x64xf32> to vector<1x21x64xbf16>
    %18 = vector.extract_strided_slice %17 {offsets = [0, 0, 0], sizes = [1, 16, 64], strides = [1, 1, 1]} : vector<1x21x64xbf16> to vector<1x16x64xbf16>
    %19 = vector.extract_strided_slice %17 {offsets = [0, 1, 0], sizes = [1, 16, 64], strides = [1, 1, 1]} : vector<1x21x64xbf16> to vector<1x16x64xbf16>
    %20 = vector.extract_strided_slice %17 {offsets = [0, 2, 0], sizes = [1, 16, 64], strides = [1, 1, 1]} : vector<1x21x64xbf16> to vector<1x16x64xbf16>
    %21 = vector.extract_strided_slice %17 {offsets = [0, 3, 0], sizes = [1, 16, 64], strides = [1, 1, 1]} : vector<1x21x64xbf16> to vector<1x16x64xbf16>
    %22 = vector.extract_strided_slice %17 {offsets = [0, 4, 0], sizes = [1, 16, 64], strides = [1, 1, 1]} : vector<1x21x64xbf16> to vector<1x16x64xbf16>
    %23 = vector.extract_strided_slice %17 {offsets = [0, 5, 0], sizes = [1, 16, 64], strides = [1, 1, 1]} : vector<1x21x64xbf16> to vector<1x16x64xbf16>
    %24 = tpu.concatenate %18, %19, %20, %21, %22, %23 in 2 : vector<1x16x64xbf16>, vector<1x16x64xbf16>, vector<1x16x64xbf16>, vector<1x16x64xbf16>, vector<1x16x64xbf16>, vector<1x16x64xbf16> -> vector<1x16x384xbf16>
    %25 = vector.shape_cast %24 : vector<1x16x384xbf16> to vector<16x384xbf16>
    %c0_7 = arith.constant 0 : index
    %c0_8 = arith.constant 0 : index
    %c0_9 = arith.constant 0 : index
    %26 = vector.load %arg4[%c0_7, %c0_8, %c0_9] : memref<3x384x64xbf16, #tpu.memory_space<vmem>>, vector<1x384x64xbf16>
    %27 = vector.shape_cast %26 : vector<1x384x64xbf16> to vector<384x64xbf16>
    %cst_10 = arith.constant dense<0.000000e+00> : vector<16x64xf32>
    %28 = tpu.matmul %25, %27, %cst_10 {dimension_numbers = #tpu.dot_dimension_numbers<[1], [0], [0], [1], [0, 0, 1, 1], [], []>} : vector<16x384xbf16>, vector<384x64xbf16>, vector<16x64xf32> -> vector<16x64xf32>
    %c0_11 = arith.constant 0 : index
    %c0_12 = arith.constant 0 : index
    %c0_13 = arith.constant 0 : index
    %29 = vector.load %arg5[%c0_11, %c0_12, %c0_13] : memref<3x1x64xf32, #tpu.memory_space<vmem>>, vector<1x1x64xf32>
    %30 = vector.shape_cast %29 : vector<1x1x64xf32> to vector<1x64xf32>
    %31 = vector.broadcast %30 : vector<1x64xf32> to vector<16x64xf32>
    %32 = arith.addf %28, %31 : vector<16x64xf32>
    %cst_14 = arith.constant 0.000000e+00 : f32
    %33 = vector.broadcast %cst_14 : f32 to vector<16x64xf32>
    %34 = arith.maximumf %32, %33 : vector<16x64xf32>
    %35 = vector.shape_cast %34 : vector<16x64xf32> to vector<1x16x64xf32>
    %36 = arith.truncf %35 : vector<1x16x64xf32> to vector<1x16x64xbf16>
    %37 = vector.extract_strided_slice %36 {offsets = [0, 0, 0], sizes = [1, 11, 64], strides = [1, 1, 1]} : vector<1x16x64xbf16> to vector<1x11x64xbf16>
    %38 = vector.extract_strided_slice %36 {offsets = [0, 1, 0], sizes = [1, 11, 64], strides = [1, 1, 1]} : vector<1x16x64xbf16> to vector<1x11x64xbf16>
    %39 = vector.extract_strided_slice %36 {offsets = [0, 2, 0], sizes = [1, 11, 64], strides = [1, 1, 1]} : vector<1x16x64xbf16> to vector<1x11x64xbf16>
    %40 = vector.extract_strided_slice %36 {offsets = [0, 3, 0], sizes = [1, 11, 64], strides = [1, 1, 1]} : vector<1x16x64xbf16> to vector<1x11x64xbf16>
    %41 = vector.extract_strided_slice %36 {offsets = [0, 4, 0], sizes = [1, 11, 64], strides = [1, 1, 1]} : vector<1x16x64xbf16> to vector<1x11x64xbf16>
    %42 = vector.extract_strided_slice %36 {offsets = [0, 5, 0], sizes = [1, 11, 64], strides = [1, 1, 1]} : vector<1x16x64xbf16> to vector<1x11x64xbf16>
    %43 = tpu.concatenate %37, %38, %39, %40, %41, %42 in 2 : vector<1x11x64xbf16>, vector<1x11x64xbf16>, vector<1x11x64xbf16>, vector<1x11x64xbf16>, vector<1x11x64xbf16>, vector<1x11x64xbf16> -> vector<1x11x384xbf16>
    %44 = vector.shape_cast %43 : vector<1x11x384xbf16> to vector<11x384xbf16>
    %c1 = arith.constant 1 : index
    %c0_15 = arith.constant 0 : index
    %c0_16 = arith.constant 0 : index
    %45 = vector.load %arg4[%c1, %c0_15, %c0_16] : memref<3x384x64xbf16, #tpu.memory_space<vmem>>, vector<1x384x64xbf16>
    %46 = vector.shape_cast %45 : vector<1x384x64xbf16> to vector<384x64xbf16>
    %cst_17 = arith.constant dense<0.000000e+00> : vector<11x64xf32>
    %47 = tpu.matmul %44, %46, %cst_17 {dimension_numbers = #tpu.dot_dimension_numbers<[1], [0], [0], [1], [0, 0, 1, 1], [], []>} : vector<11x384xbf16>, vector<384x64xbf16>, vector<11x64xf32> -> vector<11x64xf32>
    %c1_18 = arith.constant 1 : index
    %c0_19 = arith.constant 0 : index
    %c0_20 = arith.constant 0 : index
    %48 = vector.load %arg5[%c1_18, %c0_19, %c0_20] : memref<3x1x64xf32, #tpu.memory_space<vmem>>, vector<1x1x64xf32>
    %49 = vector.shape_cast %48 : vector<1x1x64xf32> to vector<1x64xf32>
    %50 = vector.broadcast %49 : vector<1x64xf32> to vector<11x64xf32>
    %51 = arith.addf %47, %50 : vector<11x64xf32>
    %cst_21 = arith.constant 0.000000e+00 : f32
    %52 = vector.broadcast %cst_21 : f32 to vector<11x64xf32>
    %53 = arith.maximumf %51, %52 : vector<11x64xf32>
    %54 = vector.shape_cast %53 : vector<11x64xf32> to vector<1x11x64xf32>
    %55 = arith.truncf %54 : vector<1x11x64xf32> to vector<1x11x64xbf16>
    %56 = vector.extract_strided_slice %55 {offsets = [0, 0, 0], sizes = [1, 6, 64], strides = [1, 1, 1]} : vector<1x11x64xbf16> to vector<1x6x64xbf16>
    %57 = vector.extract_strided_slice %55 {offsets = [0, 1, 0], sizes = [1, 6, 64], strides = [1, 1, 1]} : vector<1x11x64xbf16> to vector<1x6x64xbf16>
    %58 = vector.extract_strided_slice %55 {offsets = [0, 2, 0], sizes = [1, 6, 64], strides = [1, 1, 1]} : vector<1x11x64xbf16> to vector<1x6x64xbf16>
    %59 = vector.extract_strided_slice %55 {offsets = [0, 3, 0], sizes = [1, 6, 64], strides = [1, 1, 1]} : vector<1x11x64xbf16> to vector<1x6x64xbf16>
    %60 = vector.extract_strided_slice %55 {offsets = [0, 4, 0], sizes = [1, 6, 64], strides = [1, 1, 1]} : vector<1x11x64xbf16> to vector<1x6x64xbf16>
    %61 = vector.extract_strided_slice %55 {offsets = [0, 5, 0], sizes = [1, 6, 64], strides = [1, 1, 1]} : vector<1x11x64xbf16> to vector<1x6x64xbf16>
    %62 = tpu.concatenate %56, %57, %58, %59, %60, %61 in 2 : vector<1x6x64xbf16>, vector<1x6x64xbf16>, vector<1x6x64xbf16>, vector<1x6x64xbf16>, vector<1x6x64xbf16>, vector<1x6x64xbf16> -> vector<1x6x384xbf16>
    %63 = vector.shape_cast %62 : vector<1x6x384xbf16> to vector<6x384xbf16>
    %c2 = arith.constant 2 : index
    %c0_22 = arith.constant 0 : index
    %c0_23 = arith.constant 0 : index
    %64 = vector.load %arg4[%c2, %c0_22, %c0_23] : memref<3x384x64xbf16, #tpu.memory_space<vmem>>, vector<1x384x64xbf16>
    %65 = vector.shape_cast %64 : vector<1x384x64xbf16> to vector<384x64xbf16>
    %cst_24 = arith.constant dense<0.000000e+00> : vector<6x64xf32>
    %66 = tpu.matmul %63, %65, %cst_24 {dimension_numbers = #tpu.dot_dimension_numbers<[1], [0], [0], [1], [0, 0, 1, 1], [], []>} : vector<6x384xbf16>, vector<384x64xbf16>, vector<6x64xf32> -> vector<6x64xf32>
    %c2_25 = arith.constant 2 : index
    %c0_26 = arith.constant 0 : index
    %c0_27 = arith.constant 0 : index
    %67 = vector.load %arg5[%c2_25, %c0_26, %c0_27] : memref<3x1x64xf32, #tpu.memory_space<vmem>>, vector<1x1x64xf32>
    %68 = vector.shape_cast %67 : vector<1x1x64xf32> to vector<1x64xf32>
    %69 = vector.broadcast %68 : vector<1x64xf32> to vector<6x64xf32>
    %70 = arith.addf %66, %69 : vector<6x64xf32>
    %cst_28 = arith.constant 0.000000e+00 : f32
    %71 = vector.broadcast %cst_28 : f32 to vector<6x64xf32>
    %72 = arith.maximumf %70, %71 : vector<6x64xf32>
    %73 = vector.shape_cast %72 : vector<6x64xf32> to vector<1x6x64xf32>
    %74 = vector.extract_strided_slice %73 {offsets = [0, 0, 0], sizes = [1, 1, 64], strides = [1, 1, 1]} : vector<1x6x64xf32> to vector<1x1x64xf32>
    %75 = vector.extract_strided_slice %73 {offsets = [0, 1, 0], sizes = [1, 1, 64], strides = [1, 1, 1]} : vector<1x6x64xf32> to vector<1x1x64xf32>
    %76 = arith.maximumf %74, %75 : vector<1x1x64xf32>
    %77 = vector.extract_strided_slice %73 {offsets = [0, 2, 0], sizes = [1, 1, 64], strides = [1, 1, 1]} : vector<1x6x64xf32> to vector<1x1x64xf32>
    %78 = vector.extract_strided_slice %73 {offsets = [0, 3, 0], sizes = [1, 1, 64], strides = [1, 1, 1]} : vector<1x6x64xf32> to vector<1x1x64xf32>
    %79 = arith.maximumf %77, %78 : vector<1x1x64xf32>
    %80 = vector.extract_strided_slice %73 {offsets = [0, 4, 0], sizes = [1, 1, 64], strides = [1, 1, 1]} : vector<1x6x64xf32> to vector<1x1x64xf32>
    %81 = vector.extract_strided_slice %73 {offsets = [0, 5, 0], sizes = [1, 1, 64], strides = [1, 1, 1]} : vector<1x6x64xf32> to vector<1x1x64xf32>
    %82 = arith.maximumf %80, %81 : vector<1x1x64xf32>
    %c0_29 = arith.constant 0 : index
    %c0_30 = arith.constant 0 : index
    %c0_31 = arith.constant 0 : index
    %83 = vector.load %arg6[%c0_29, %c0_30, %c0_31] : memref<1x232x64xbf16, #tpu.memory_space<vmem>>, vector<1x232x64xbf16>
    %84 = vector.shape_cast %83 : vector<1x232x64xbf16> to vector<232x64xbf16>
    %c0_32 = arith.constant 0 : index
    %c0_33 = arith.constant 0 : index
    %85 = vector.load %arg7[%c0_32, %c0_33] : memref<64x64xbf16, #tpu.memory_space<vmem>>, vector<64x64xbf16>
    %cst_34 = arith.constant dense<0.000000e+00> : vector<232x64xf32>
    %86 = tpu.matmul %84, %85, %cst_34 {dimension_numbers = #tpu.dot_dimension_numbers<[1], [0], [0], [1], [0, 0, 1, 1], [], []>} : vector<232x64xbf16>, vector<64x64xbf16>, vector<232x64xf32> -> vector<232x64xf32>
    %c0_35 = arith.constant 0 : index
    %c0_36 = arith.constant 0 : index
    %87 = vector.load %arg8[%c0_35, %c0_36] : memref<1x64xf32, #tpu.memory_space<vmem>>, vector<1x64xf32>
    %88 = vector.broadcast %87 : vector<1x64xf32> to vector<232x64xf32>
    %89 = arith.addf %86, %88 : vector<232x64xf32>
    %cst_37 = arith.constant 0.000000e+00 : f32
    %90 = vector.broadcast %cst_37 : f32 to vector<232x64xf32>
    %91 = arith.maximumf %89, %90 : vector<232x64xf32>
    %92 = vector.shape_cast %91 : vector<232x64xf32> to vector<1x232x64xf32>
    %93 = vector.extract_strided_slice %92 {offsets = [0, 0, 0], sizes = [1, 29, 64], strides = [1, 1, 1]} : vector<1x232x64xf32> to vector<1x29x64xf32>
    %94 = vector.extract_strided_slice %92 {offsets = [0, 29, 0], sizes = [1, 29, 64], strides = [1, 1, 1]} : vector<1x232x64xf32> to vector<1x29x64xf32>
    %95 = arith.maximumf %93, %94 : vector<1x29x64xf32>
    %96 = vector.extract_strided_slice %92 {offsets = [0, 58, 0], sizes = [1, 29, 64], strides = [1, 1, 1]} : vector<1x232x64xf32> to vector<1x29x64xf32>
    %97 = arith.maximumf %95, %96 : vector<1x29x64xf32>
    %98 = vector.extract_strided_slice %92 {offsets = [0, 87, 0], sizes = [1, 29, 64], strides = [1, 1, 1]} : vector<1x232x64xf32> to vector<1x29x64xf32>
    %99 = arith.maximumf %97, %98 : vector<1x29x64xf32>
    %100 = vector.extract_strided_slice %92 {offsets = [0, 116, 0], sizes = [1, 29, 64], strides = [1, 1, 1]} : vector<1x232x64xf32> to vector<1x29x64xf32>
    %101 = arith.maximumf %99, %100 : vector<1x29x64xf32>
    %102 = vector.extract_strided_slice %92 {offsets = [0, 145, 0], sizes = [1, 29, 64], strides = [1, 1, 1]} : vector<1x232x64xf32> to vector<1x29x64xf32>
    %103 = arith.maximumf %101, %102 : vector<1x29x64xf32>
    %104 = vector.extract_strided_slice %92 {offsets = [0, 174, 0], sizes = [1, 29, 64], strides = [1, 1, 1]} : vector<1x232x64xf32> to vector<1x29x64xf32>
    %105 = arith.maximumf %103, %104 : vector<1x29x64xf32>
    %106 = vector.extract_strided_slice %92 {offsets = [0, 203, 0], sizes = [1, 29, 64], strides = [1, 1, 1]} : vector<1x232x64xf32> to vector<1x29x64xf32>
    %107 = arith.maximumf %105, %106 : vector<1x29x64xf32>
    %108 = arith.truncf %107 : vector<1x29x64xf32> to vector<1x29x64xbf16>
    %109 = vector.extract_strided_slice %108 {offsets = [0, 0, 0], sizes = [1, 22, 64], strides = [1, 1, 1]} : vector<1x29x64xbf16> to vector<1x22x64xbf16>
    %110 = vector.extract_strided_slice %108 {offsets = [0, 1, 0], sizes = [1, 22, 64], strides = [1, 1, 1]} : vector<1x29x64xbf16> to vector<1x22x64xbf16>
    %111 = vector.extract_strided_slice %108 {offsets = [0, 2, 0], sizes = [1, 22, 64], strides = [1, 1, 1]} : vector<1x29x64xbf16> to vector<1x22x64xbf16>
    %112 = vector.extract_strided_slice %108 {offsets = [0, 3, 0], sizes = [1, 22, 64], strides = [1, 1, 1]} : vector<1x29x64xbf16> to vector<1x22x64xbf16>
    %113 = vector.extract_strided_slice %108 {offsets = [0, 4, 0], sizes = [1, 22, 64], strides = [1, 1, 1]} : vector<1x29x64xbf16> to vector<1x22x64xbf16>
    %114 = vector.extract_strided_slice %108 {offsets = [0, 5, 0], sizes = [1, 22, 64], strides = [1, 1, 1]} : vector<1x29x64xbf16> to vector<1x22x64xbf16>
    %115 = vector.extract_strided_slice %108 {offsets = [0, 6, 0], sizes = [1, 22, 64], strides = [1, 1, 1]} : vector<1x29x64xbf16> to vector<1x22x64xbf16>
    %116 = vector.extract_strided_slice %108 {offsets = [0, 7, 0], sizes = [1, 22, 64], strides = [1, 1, 1]} : vector<1x29x64xbf16> to vector<1x22x64xbf16>
    %117 = tpu.concatenate %109, %110, %111, %112, %113, %114, %115, %116 in 2 : vector<1x22x64xbf16>, vector<1x22x64xbf16>, vector<1x22x64xbf16>, vector<1x22x64xbf16>, vector<1x22x64xbf16>, vector<1x22x64xbf16>, vector<1x22x64xbf16>, vector<1x22x64xbf16> -> vector<1x22x512xbf16>
    %118 = vector.shape_cast %117 : vector<1x22x512xbf16> to vector<22x512xbf16>
    %c0_38 = arith.constant 0 : index
    %c0_39 = arith.constant 0 : index
    %c0_40 = arith.constant 0 : index
    %119 = vector.load %arg9[%c0_38, %c0_39, %c0_40] : memref<3x512x64xbf16, #tpu.memory_space<vmem>>, vector<1x512x64xbf16>
    %120 = vector.shape_cast %119 : vector<1x512x64xbf16> to vector<512x64xbf16>
    %cst_41 = arith.constant dense<0.000000e+00> : vector<22x64xf32>
    %121 = tpu.matmul %118, %120, %cst_41 {dimension_numbers = #tpu.dot_dimension_numbers<[1], [0], [0], [1], [0, 0, 1, 1], [], []>} : vector<22x512xbf16>, vector<512x64xbf16>, vector<22x64xf32> -> vector<22x64xf32>
    %c0_42 = arith.constant 0 : index
    %c0_43 = arith.constant 0 : index
    %c0_44 = arith.constant 0 : index
    %122 = vector.load %arg10[%c0_42, %c0_43, %c0_44] : memref<3x1x64xf32, #tpu.memory_space<vmem>>, vector<1x1x64xf32>
    %123 = vector.shape_cast %122 : vector<1x1x64xf32> to vector<1x64xf32>
    %124 = vector.broadcast %123 : vector<1x64xf32> to vector<22x64xf32>
    %125 = arith.addf %121, %124 : vector<22x64xf32>
    %cst_45 = arith.constant 0.000000e+00 : f32
    %126 = vector.broadcast %cst_45 : f32 to vector<22x64xf32>
    %127 = arith.maximumf %125, %126 : vector<22x64xf32>
    %128 = vector.shape_cast %127 : vector<22x64xf32> to vector<1x22x64xf32>
    %129 = arith.truncf %128 : vector<1x22x64xf32> to vector<1x22x64xbf16>
    %130 = vector.extract_strided_slice %129 {offsets = [0, 0, 0], sizes = [1, 15, 64], strides = [1, 1, 1]} : vector<1x22x64xbf16> to vector<1x15x64xbf16>
    %131 = vector.extract_strided_slice %129 {offsets = [0, 1, 0], sizes = [1, 15, 64], strides = [1, 1, 1]} : vector<1x22x64xbf16> to vector<1x15x64xbf16>
    %132 = vector.extract_strided_slice %129 {offsets = [0, 2, 0], sizes = [1, 15, 64], strides = [1, 1, 1]} : vector<1x22x64xbf16> to vector<1x15x64xbf16>
    %133 = vector.extract_strided_slice %129 {offsets = [0, 3, 0], sizes = [1, 15, 64], strides = [1, 1, 1]} : vector<1x22x64xbf16> to vector<1x15x64xbf16>
    %134 = vector.extract_strided_slice %129 {offsets = [0, 4, 0], sizes = [1, 15, 64], strides = [1, 1, 1]} : vector<1x22x64xbf16> to vector<1x15x64xbf16>
    %135 = vector.extract_strided_slice %129 {offsets = [0, 5, 0], sizes = [1, 15, 64], strides = [1, 1, 1]} : vector<1x22x64xbf16> to vector<1x15x64xbf16>
    %136 = vector.extract_strided_slice %129 {offsets = [0, 6, 0], sizes = [1, 15, 64], strides = [1, 1, 1]} : vector<1x22x64xbf16> to vector<1x15x64xbf16>
    %137 = vector.extract_strided_slice %129 {offsets = [0, 7, 0], sizes = [1, 15, 64], strides = [1, 1, 1]} : vector<1x22x64xbf16> to vector<1x15x64xbf16>
    %138 = tpu.concatenate %130, %131, %132, %133, %134, %135, %136, %137 in 2 : vector<1x15x64xbf16>, vector<1x15x64xbf16>, vector<1x15x64xbf16>, vector<1x15x64xbf16>, vector<1x15x64xbf16>, vector<1x15x64xbf16>, vector<1x15x64xbf16>, vector<1x15x64xbf16> -> vector<1x15x512xbf16>
    %139 = vector.shape_cast %138 : vector<1x15x512xbf16> to vector<15x512xbf16>
    %c1_46 = arith.constant 1 : index
    %c0_47 = arith.constant 0 : index
    %c0_48 = arith.constant 0 : index
    %140 = vector.load %arg9[%c1_46, %c0_47, %c0_48] : memref<3x512x64xbf16, #tpu.memory_space<vmem>>, vector<1x512x64xbf16>
    %141 = vector.shape_cast %140 : vector<1x512x64xbf16> to vector<512x64xbf16>
    %cst_49 = arith.constant dense<0.000000e+00> : vector<15x64xf32>
    %142 = tpu.matmul %139, %141, %cst_49 {dimension_numbers = #tpu.dot_dimension_numbers<[1], [0], [0], [1], [0, 0, 1, 1], [], []>} : vector<15x512xbf16>, vector<512x64xbf16>, vector<15x64xf32> -> vector<15x64xf32>
    %c1_50 = arith.constant 1 : index
    %c0_51 = arith.constant 0 : index
    %c0_52 = arith.constant 0 : index
    %143 = vector.load %arg10[%c1_50, %c0_51, %c0_52] : memref<3x1x64xf32, #tpu.memory_space<vmem>>, vector<1x1x64xf32>
    %144 = vector.shape_cast %143 : vector<1x1x64xf32> to vector<1x64xf32>
    %145 = vector.broadcast %144 : vector<1x64xf32> to vector<15x64xf32>
    %146 = arith.addf %142, %145 : vector<15x64xf32>
    %cst_53 = arith.constant 0.000000e+00 : f32
    %147 = vector.broadcast %cst_53 : f32 to vector<15x64xf32>
    %148 = arith.maximumf %146, %147 : vector<15x64xf32>
    %149 = vector.shape_cast %148 : vector<15x64xf32> to vector<1x15x64xf32>
    %150 = arith.truncf %149 : vector<1x15x64xf32> to vector<1x15x64xbf16>
    %151 = vector.extract_strided_slice %150 {offsets = [0, 0, 0], sizes = [1, 8, 64], strides = [1, 1, 1]} : vector<1x15x64xbf16> to vector<1x8x64xbf16>
    %152 = vector.extract_strided_slice %150 {offsets = [0, 1, 0], sizes = [1, 8, 64], strides = [1, 1, 1]} : vector<1x15x64xbf16> to vector<1x8x64xbf16>
    %153 = vector.extract_strided_slice %150 {offsets = [0, 2, 0], sizes = [1, 8, 64], strides = [1, 1, 1]} : vector<1x15x64xbf16> to vector<1x8x64xbf16>
    %154 = vector.extract_strided_slice %150 {offsets = [0, 3, 0], sizes = [1, 8, 64], strides = [1, 1, 1]} : vector<1x15x64xbf16> to vector<1x8x64xbf16>
    %155 = vector.extract_strided_slice %150 {offsets = [0, 4, 0], sizes = [1, 8, 64], strides = [1, 1, 1]} : vector<1x15x64xbf16> to vector<1x8x64xbf16>
    %156 = vector.extract_strided_slice %150 {offsets = [0, 5, 0], sizes = [1, 8, 64], strides = [1, 1, 1]} : vector<1x15x64xbf16> to vector<1x8x64xbf16>
    %157 = vector.extract_strided_slice %150 {offsets = [0, 6, 0], sizes = [1, 8, 64], strides = [1, 1, 1]} : vector<1x15x64xbf16> to vector<1x8x64xbf16>
    %158 = vector.extract_strided_slice %150 {offsets = [0, 7, 0], sizes = [1, 8, 64], strides = [1, 1, 1]} : vector<1x15x64xbf16> to vector<1x8x64xbf16>
    %159 = tpu.concatenate %151, %152, %153, %154, %155, %156, %157, %158 in 2 : vector<1x8x64xbf16>, vector<1x8x64xbf16>, vector<1x8x64xbf16>, vector<1x8x64xbf16>, vector<1x8x64xbf16>, vector<1x8x64xbf16>, vector<1x8x64xbf16>, vector<1x8x64xbf16> -> vector<1x8x512xbf16>
    %160 = vector.shape_cast %159 : vector<1x8x512xbf16> to vector<8x512xbf16>
    %c2_54 = arith.constant 2 : index
    %c0_55 = arith.constant 0 : index
    %c0_56 = arith.constant 0 : index
    %161 = vector.load %arg9[%c2_54, %c0_55, %c0_56] : memref<3x512x64xbf16, #tpu.memory_space<vmem>>, vector<1x512x64xbf16>
    %162 = vector.shape_cast %161 : vector<1x512x64xbf16> to vector<512x64xbf16>
    %cst_57 = arith.constant dense<0.000000e+00> : vector<8x64xf32>
    %163 = tpu.matmul %160, %162, %cst_57 {dimension_numbers = #tpu.dot_dimension_numbers<[1], [0], [0], [1], [0, 0, 1, 1], [], []>} : vector<8x512xbf16>, vector<512x64xbf16>, vector<8x64xf32> -> vector<8x64xf32>
    %c2_58 = arith.constant 2 : index
    %c0_59 = arith.constant 0 : index
    %c0_60 = arith.constant 0 : index
    %164 = vector.load %arg10[%c2_58, %c0_59, %c0_60] : memref<3x1x64xf32, #tpu.memory_space<vmem>>, vector<1x1x64xf32>
    %165 = vector.shape_cast %164 : vector<1x1x64xf32> to vector<1x64xf32>
    %166 = vector.broadcast %165 : vector<1x64xf32> to vector<8x64xf32>
    %167 = arith.addf %163, %166 : vector<8x64xf32>
    %cst_61 = arith.constant 0.000000e+00 : f32
    %168 = vector.broadcast %cst_61 : f32 to vector<8x64xf32>
    %169 = arith.maximumf %167, %168 : vector<8x64xf32>
    %170 = vector.shape_cast %169 : vector<8x64xf32> to vector<1x8x64xf32>
    %171 = vector.extract_strided_slice %170 {offsets = [0, 0, 0], sizes = [1, 1, 64], strides = [1, 1, 1]} : vector<1x8x64xf32> to vector<1x1x64xf32>
    %172 = vector.extract_strided_slice %170 {offsets = [0, 1, 0], sizes = [1, 1, 64], strides = [1, 1, 1]} : vector<1x8x64xf32> to vector<1x1x64xf32>
    %173 = arith.maximumf %171, %172 : vector<1x1x64xf32>
    %174 = vector.extract_strided_slice %170 {offsets = [0, 2, 0], sizes = [1, 1, 64], strides = [1, 1, 1]} : vector<1x8x64xf32> to vector<1x1x64xf32>
    %175 = arith.maximumf %173, %174 : vector<1x1x64xf32>
    %176 = vector.extract_strided_slice %170 {offsets = [0, 3, 0], sizes = [1, 1, 64], strides = [1, 1, 1]} : vector<1x8x64xf32> to vector<1x1x64xf32>
    %177 = arith.maximumf %175, %176 : vector<1x1x64xf32>
    %178 = vector.extract_strided_slice %170 {offsets = [0, 4, 0], sizes = [1, 1, 64], strides = [1, 1, 1]} : vector<1x8x64xf32> to vector<1x1x64xf32>
    %179 = vector.extract_strided_slice %170 {offsets = [0, 5, 0], sizes = [1, 1, 64], strides = [1, 1, 1]} : vector<1x8x64xf32> to vector<1x1x64xf32>
    %180 = arith.maximumf %178, %179 : vector<1x1x64xf32>
    %181 = vector.extract_strided_slice %170 {offsets = [0, 6, 0], sizes = [1, 1, 64], strides = [1, 1, 1]} : vector<1x8x64xf32> to vector<1x1x64xf32>
    %182 = arith.maximumf %180, %181 : vector<1x1x64xf32>
    %183 = vector.extract_strided_slice %170 {offsets = [0, 7, 0], sizes = [1, 1, 64], strides = [1, 1, 1]} : vector<1x8x64xf32> to vector<1x1x64xf32>
    %184 = arith.maximumf %182, %183 : vector<1x1x64xf32>
    %185 = tpu.concatenate %76, %79, %82, %177, %184 in 1 : vector<1x1x64xf32>, vector<1x1x64xf32>, vector<1x1x64xf32>, vector<1x1x64xf32>, vector<1x1x64xf32> -> vector<1x5x64xf32>
    %c0_62 = arith.constant 0 : index
    %c0_63 = arith.constant 0 : index
    %c0_64 = arith.constant 0 : index
    %186 = vector.load %arg11[%c0_62, %c0_63, %c0_64] : memref<1x5x64xf32, #tpu.memory_space<vmem>>, vector<1x5x64xf32>
    tpu.vector_store %arg11[%c0_62, %c0_63, %c0_64], %185 {strides = array<i32>} : memref<1x5x64xf32, #tpu.memory_space<vmem>>, vector<1x5x64xf32>,
    return
  }
  func.func @transform_0(%arg0: i32) -> (i32, i32, i32) {
    %c0_i32 = arith.constant 0 : i32
    %c0_i32_0 = arith.constant 0 : i32
    %c0_i32_1 = arith.constant 0 : i32
    return %arg0, %c0_i32, %c0_i32_0 : i32, i32, i32
  }
  func.func @transform_1(%arg0: i32) -> (i32, i32) {
    %c0_i32 = arith.constant 0 : i32
    %c0_i32_0 = arith.constant 0 : i32
    %c0_i32_1 = arith.constant 0 : i32
    return %c0_i32, %c0_i32_0 : i32, i32
  }
  func.func @transform_2(%arg0: i32) -> (i32, i32) {
    %c0_i32 = arith.constant 0 : i32
    %c0_i32_0 = arith.constant 0 : i32
    %c0_i32_1 = arith.constant 0 : i32
    return %c0_i32, %c0_i32_0 : i32, i32
  }
  func.func @transform_3(%arg0: i32) -> (i32, i32, i32) {
    %c0_i32 = arith.constant 0 : i32
    %c0_i32_0 = arith.constant 0 : i32
    %c0_i32_1 = arith.constant 0 : i32
    %c0_i32_2 = arith.constant 0 : i32
    return %c0_i32, %c0_i32_0, %c0_i32_1 : i32, i32, i32
  }
  func.func @transform_4(%arg0: i32) -> (i32, i32, i32) {
    %c0_i32 = arith.constant 0 : i32
    %c0_i32_0 = arith.constant 0 : i32
    %c0_i32_1 = arith.constant 0 : i32
    %c0_i32_2 = arith.constant 0 : i32
    return %c0_i32, %c0_i32_0, %c0_i32_1 : i32, i32, i32
  }
  func.func @transform_5(%arg0: i32) -> (i32, i32, i32) {
    %c0_i32 = arith.constant 0 : i32
    %c0_i32_0 = arith.constant 0 : i32
    %c0_i32_1 = arith.constant 0 : i32
    return %arg0, %c0_i32, %c0_i32_0 : i32, i32, i32
  }
  func.func @transform_6(%arg0: i32) -> (i32, i32) {
    %c0_i32 = arith.constant 0 : i32
    %c0_i32_0 = arith.constant 0 : i32
    %c0_i32_1 = arith.constant 0 : i32
    return %c0_i32, %c0_i32_0 : i32, i32
  }
  func.func @transform_7(%arg0: i32) -> (i32, i32) {
    %c0_i32 = arith.constant 0 : i32
    %c0_i32_0 = arith.constant 0 : i32
    %c0_i32_1 = arith.constant 0 : i32
    return %c0_i32, %c0_i32_0 : i32, i32
  }
  func.func @transform_8(%arg0: i32) -> (i32, i32, i32) {
    %c0_i32 = arith.constant 0 : i32
    %c0_i32_0 = arith.constant 0 : i32
    %c0_i32_1 = arith.constant 0 : i32
    %c0_i32_2 = arith.constant 0 : i32
    return %c0_i32, %c0_i32_0, %c0_i32_1 : i32, i32, i32
  }
  func.func @transform_9(%arg0: i32) -> (i32, i32, i32) {
    %c0_i32 = arith.constant 0 : i32
    %c0_i32_0 = arith.constant 0 : i32
    %c0_i32_1 = arith.constant 0 : i32
    %c0_i32_2 = arith.constant 0 : i32
    return %c0_i32, %c0_i32_0, %c0_i32_1 : i32, i32, i32
  }
  func.func @transform_10(%arg0: i32) -> (i32, i32, i32) {
    %c0_i32 = arith.constant 0 : i32
    %c0_i32_0 = arith.constant 0 : i32
    %c0_i32_1 = arith.constant 0 : i32
    return %arg0, %c0_i32, %c0_i32_0 : i32, i32, i32
  }
}

</mosaic_0001>

<llo_original>
// kernel: feature_extractor_forward.1
$region0: #{feature_extractor_forward.1}
  #allocation0 [shape = 'u32[]', space=smem, size = 0x4, offset = 0x4, fixed_abs, tag = 'smem constant byte address 0x4 - core index']
  #allocation1 [shape = 'u32[144,128]{1,0:T(1,128)}', space=vmem, size = 0x12000, scoped, tag = 'internal scratch']
  %s0 = inlined_call_operand.vmem [shape: bf16[2,84,256], index: 0, kind: input, shape index: {}]
  %s1 = inlined_call_operand.vmem [shape: bf16[256,64], index: 1, kind: input, shape index: {}]
  %s2 = inlined_call_operand.vmem [shape: f32[1,64], index: 2, kind: input, shape index: {}]
  %s3 = inlined_call_operand.vmem [shape: bf16[3,384,64], index: 3, kind: input, shape index: {}]
  %s4 = inlined_call_operand.vmem [shape: f32[3,1,64], index: 4, kind: input, shape index: {}]
  %s5 = inlined_call_operand.vmem [shape: bf16[2,232,64], index: 5, kind: input, shape index: {}]
  %s6 = inlined_call_operand.vmem [shape: bf16[64,64], index: 6, kind: input, shape index: {}]
  %s7 = inlined_call_operand.vmem [shape: f32[1,64], index: 7, kind: input, shape index: {}]
  %s8 = inlined_call_operand.vmem [shape: bf16[3,512,64], index: 8, kind: input, shape index: {}]
  %s9 = inlined_call_operand.vmem [shape: f32[3,1,64], index: 9, kind: input, shape index: {}]
  %s10 = inlined_call_operand.vmem [shape: f32[2,5,64], index: 10, kind: output, shape index: {}]
  %s11 = sld [smem:[#allocation0]]
  $region73: #{feature_extractor_forward.1} parent=0
    _
  %s13 = ssub.s32 1, %s11
  %s14 = scalar_select 0, %s13, %s11
  loop: start=0, step=1, limit=4
  $region2: #{feature_extractor_forward.1} parent=0 // loop_pre_header
    _
  $region3: #{feature_extractor_forward.1} parent=0 // loop_header
    %s16 = sphi 0, %s20
    %p17 = scmp.ge.s32.totalorder %s16, 4
    %s26 = sphi 0, %s28
    %s29 = sphi 0, %s26
    %s30 = sphi 0, %s29
    %s46 = sphi 0, %s30
    %s50 = sphi 0, %s50
    %s52 = sphi 0, %s50
    %s53 = sphi 0, %s52
    %s67 = sphi 0, %s53
    %s71 = sphi 0, %s71
    %s73 = sphi 0, %s71
    %s74 = sphi 0, %s73
    %s88 = sphi 0, %s74
    %s92 = sphi 0, %s92
    %s94 = sphi 0, %s92
    %s95 = sphi 0, %s94
    %s109 = sphi 0, %s95
    %s113 = sphi 0, %s113
    %s115 = sphi 0, %s113
    %s116 = sphi 0, %s115
    %s130 = sphi 0, %s116
    %s136 = sphi 0, %s138
    %s139 = sphi 0, %s136
    %s140 = sphi 0, %s139
    %s156 = sphi 0, %s140
    %s160 = sphi 0, %s160
    %s162 = sphi 0, %s160
    %s163 = sphi 0, %s162
    %s177 = sphi 0, %s163
    %s181 = sphi 0, %s181
    %s183 = sphi 0, %s181
    %s184 = sphi 0, %s183
    %s198 = sphi 0, %s184
    %s202 = sphi 0, %s202
    %s204 = sphi 0, %s202
    %s205 = sphi 0, %s204
    %s219 = sphi 0, %s205
    %s223 = sphi 0, %s223
    %s225 = sphi 0, %s223
    %s226 = sphi 0, %s225
    %s240 = sphi 0, %s226
    %s246 = sphi 0, %s248
    %s249 = sphi 0, %s246
    %s250 = sphi 0, %s249
    %s266 = sphi 0, %s250
  $region4: #{feature_extractor_forward.1} parent=0 // loop_header_branch
    %19 = sbr.rel (%p17) target = $region8
  $region5: #{feature_extractor_forward.1} parent=0 // loop_body
    %s21 = ssub.s32 %s16, 1
    %s22 = ssub.s32 %s16, 2
    %s23 = sadd.s32 %s16, 1
    %s24 = ssub.s32 %s16, %s23
    %p25 = scmp.eq.s32.totalorder %s24, 0
    %s27 = sadd.s32 %s26, 1
    %s28 = scalar_select %p25, %s26, %s27
    %p31 = pneg %p25
    %p32 = scmp.eq.s32.totalorder %s16, 1
    %p33 = por %p31, %p32
    %p34 = scmp.ne.s32.totalorder %s26, %s29
    %p35 = scmp.eq.s32.totalorder %s16, 0
    %p36 = por %p34, %p35
    %p37 = scmp.ne.s32.totalorder %s26, %s29
    %p38 = scmp.eq.s32.totalorder %s21, 1
    %p39 = por %p37, %p38
    %p40 = scmp.ne.s32.totalorder %s29, %s30
    %p41 = scmp.eq.s32.totalorder %s21, 0
    %p42 = por %p40, %p41
    %p43 = scmp.ne.s32.totalorder %s29, %s30
    %p44 = scmp.eq.s32.totalorder %s22, 1
    %p45 = por %p43, %p44
    %p47 = scmp.ne.s32.totalorder %s30, %s46
    %p48 = scmp.eq.s32.totalorder %s22, 0
    %p49 = por %p47, %p48
    %s51 = sadd.s32 %s50, 1
    %p54 = scmp.eq.s32.totalorder %s16, 1
    %p55 = scmp.ne.s32.totalorder %s50, %s52
    %p56 = scmp.eq.s32.totalorder %s16, 0
    %p57 = por %p55, %p56
    %p58 = scmp.ne.s32.totalorder %s50, %s52
    %p59 = scmp.eq.s32.totalorder %s21, 1
    %p60 = por %p58, %p59
    %p61 = scmp.ne.s32.totalorder %s52, %s53
    %p62 = scmp.eq.s32.totalorder %s21, 0
    %p63 = por %p61, %p62
    %p64 = scmp.ne.s32.totalorder %s52, %s53
    %p65 = scmp.eq.s32.totalorder %s22, 1
    %p66 = por %p64, %p65
    %p68 = scmp.ne.s32.totalorder %s53, %s67
    %p69 = scmp.eq.s32.totalorder %s22, 0
    %p70 = por %p68, %p69
    %s72 = sadd.s32 %s71, 1
    %p75 = scmp.eq.s32.totalorder %s16, 1
    %p76 = scmp.ne.s32.totalorder %s71, %s73
    %p77 = scmp.eq.s32.totalorder %s16, 0
    %p78 = por %p76, %p77
    %p79 = scmp.ne.s32.totalorder %s71, %s73
    %p80 = scmp.eq.s32.totalorder %s21, 1
    %p81 = por %p79, %p80
    %p82 = scmp.ne.s32.totalorder %s73, %s74
    %p83 = scmp.eq.s32.totalorder %s21, 0
    %p84 = por %p82, %p83
    %p85 = scmp.ne.s32.totalorder %s73, %s74
    %p86 = scmp.eq.s32.totalorder %s22, 1
    %p87 = por %p85, %p86
    %p89 = scmp.ne.s32.totalorder %s74, %s88
    %p90 = scmp.eq.s32.totalorder %s22, 0
    %p91 = por %p89, %p90
    %s93 = sadd.s32 %s92, 1
    %p96 = scmp.eq.s32.totalorder %s16, 1
    %p97 = scmp.ne.s32.totalorder %s92, %s94
    %p98 = scmp.eq.s32.totalorder %s16, 0
    %p99 = por %p97, %p98
    %p100 = scmp.ne.s32.totalorder %s92, %s94
    %p101 = scmp.eq.s32.totalorder %s21, 1
    %p102 = por %p100, %p101
    %p103 = scmp.ne.s32.totalorder %s94, %s95
    %p104 = scmp.eq.s32.totalorder %s21, 0
    %p105 = por %p103, %p104
    %p106 = scmp.ne.s32.totalorder %s94, %s95
    %p107 = scmp.eq.s32.totalorder %s22, 1
    %p108 = por %p106, %p107
    %p110 = scmp.ne.s32.totalorder %s95, %s109
    %p111 = scmp.eq.s32.totalorder %s22, 0
    %p112 = por %p110, %p111
    %s114 = sadd.s32 %s113, 1
    %p117 = scmp.eq.s32.totalorder %s16, 1
    %p118 = scmp.ne.s32.totalorder %s113, %s115
    %p119 = scmp.eq.s32.totalorder %s16, 0
    %p120 = por %p118, %p119
    %p121 = scmp.ne.s32.totalorder %s113, %s115
    %p122 = scmp.eq.s32.totalorder %s21, 1
    %p123 = por %p121, %p122
    %p124 = scmp.ne.s32.totalorder %s115, %s116
    %p125 = scmp.eq.s32.totalorder %s21, 0
    %p126 = por %p124, %p125
    %p127 = scmp.ne.s32.totalorder %s115, %s116
    %p128 = scmp.eq.s32.totalorder %s22, 1
    %p129 = por %p127, %p128
    %p131 = scmp.ne.s32.totalorder %s116, %s130
    %p132 = scmp.eq.s32.totalorder %s22, 0
    %p133 = por %p131, %p132
    %s134 = ssub.s32 %s16, %s23
    %p135 = scmp.eq.s32.totalorder %s134, 0
    %s137 = sadd.s32 %s136, 1
    %s138 = scalar_select %p135, %s136, %s137
    %p141 = pneg %p135
    %p142 = scmp.eq.s32.totalorder %s16, 1
    %p143 = por %p141, %p142
    %p144 = scmp.ne.s32.totalorder %s136, %s139
    %p145 = scmp.eq.s32.totalorder %s16, 0
    %p146 = por %p144, %p145
    %p147 = scmp.ne.s32.totalorder %s136, %s139
    %p148 = scmp.eq.s32.totalorder %s21, 1
    %p149 = por %p147, %p148
    %p150 = scmp.ne.s32.totalorder %s139, %s140
    %p151 = scmp.eq.s32.totalorder %s21, 0
    %p152 = por %p150, %p151
    %p153 = scmp.ne.s32.totalorder %s139, %s140
    %p154 = scmp.eq.s32.totalorder %s22, 1
    %p155 = por %p153, %p154
    %p157 = scmp.ne.s32.totalorder %s140, %s156
    %p158 = scmp.eq.s32.totalorder %s22, 0
    %p159 = por %p157, %p158
    %s161 = sadd.s32 %s160, 1
    %p164 = scmp.eq.s32.totalorder %s16, 1
    %p165 = scmp.ne.s32.totalorder %s160, %s162
    %p166 = scmp.eq.s32.totalorder %s16, 0
    %p167 = por %p165, %p166
    %p168 = scmp.ne.s32.totalorder %s160, %s162
    %p169 = scmp.eq.s32.totalorder %s21, 1
    %p170 = por %p168, %p169
    %p171 = scmp.ne.s32.totalorder %s162, %s163
    %p172 = scmp.eq.s32.totalorder %s21, 0
    %p173 = por %p171, %p172
    %p174 = scmp.ne.s32.totalorder %s162, %s163
    %p175 = scmp.eq.s32.totalorder %s22, 1
    %p176 = por %p174, %p175
    %p178 = scmp.ne.s32.totalorder %s163, %s177
    %p179 = scmp.eq.s32.totalorder %s22, 0
    %p180 = por %p178, %p179
    %s182 = sadd.s32 %s181, 1
    %p185 = scmp.eq.s32.totalorder %s16, 1
    %p186 = scmp.ne.s32.totalorder %s181, %s183
    %p187 = scmp.eq.s32.totalorder %s16, 0
    %p188 = por %p186, %p187
    %p189 = scmp.ne.s32.totalorder %s181, %s183
    %p190 = scmp.eq.s32.totalorder %s21, 1
    %p191 = por %p189, %p190
    %p192 = scmp.ne.s32.totalorder %s183, %s184
    %p193 = scmp.eq.s32.totalorder %s21, 0
    %p194 = por %p192, %p193
    %p195 = scmp.ne.s32.totalorder %s183, %s184
    %p196 = scmp.eq.s32.totalorder %s22, 1
    %p197 = por %p195, %p196
    %p199 = scmp.ne.s32.totalorder %s184, %s198
    %p200 = scmp.eq.s32.totalorder %s22, 0
    %p201 = por %p199, %p200
    %s203 = sadd.s32 %s202, 1
    %p206 = scmp.eq.s32.totalorder %s16, 1
    %p207 = scmp.ne.s32.totalorder %s202, %s204
    %p208 = scmp.eq.s32.totalorder %s16, 0
    %p209 = por %p207, %p208
    %p210 = scmp.ne.s32.totalorder %s202, %s204
    %p211 = scmp.eq.s32.totalorder %s21, 1
    %p212 = por %p210, %p211
    %p213 = scmp.ne.s32.totalorder %s204, %s205
    %p214 = scmp.eq.s32.totalorder %s21, 0
    %p215 = por %p213, %p214
    %p216 = scmp.ne.s32.totalorder %s204, %s205
    %p217 = scmp.eq.s32.totalorder %s22, 1
    %p218 = por %p216, %p217
    %p220 = scmp.ne.s32.totalorder %s205, %s219
    %p221 = scmp.eq.s32.totalorder %s22, 0
    %p222 = por %p220, %p221
    %s224 = sadd.s32 %s223, 1
    %p227 = scmp.eq.s32.totalorder %s16, 1
    %p228 = scmp.ne.s32.totalorder %s223, %s225
    %p229 = scmp.eq.s32.totalorder %s16, 0
    %p230 = por %p228, %p229
    %p231 = scmp.ne.s32.totalorder %s223, %s225
    %p232 = scmp.eq.s32.totalorder %s21, 1
    %p233 = por %p231, %p232
    %p234 = scmp.ne.s32.totalorder %s225, %s226
    %p235 = scmp.eq.s32.totalorder %s21, 0
    %p236 = por %p234, %p235
    %p237 = scmp.ne.s32.totalorder %s225, %s226
    %p238 = scmp.eq.s32.totalorder %s22, 1
    %p239 = por %p237, %p238
    %p241 = scmp.ne.s32.totalorder %s226, %s240
    %p242 = scmp.eq.s32.totalorder %s22, 0
    %p243 = por %p241, %p242
    %s244 = ssub.s32 %s16, %s23
    %p245 = scmp.eq.s32.totalorder %s244, 0
    %s247 = sadd.s32 %s246, 1
    %s248 = scalar_select %p245, %s246, %s247
    %p251 = pneg %p245
    %p252 = scmp.eq.s32.totalorder %s16, 1
    %p253 = por %p251, %p252
    %p254 = scmp.ne.s32.totalorder %s246, %s249
    %p255 = scmp.eq.s32.totalorder %s16, 0
    %p256 = por %p254, %p255
    %p257 = scmp.ne.s32.totalorder %s246, %s249
    %p258 = scmp.eq.s32.totalorder %s21, 1
    %p259 = por %p257, %p258
    %p260 = scmp.ne.s32.totalorder %s249, %s250
    %p261 = scmp.eq.s32.totalorder %s21, 0
    %p262 = por %p260, %p261
    %p263 = scmp.ne.s32.totalorder %s249, %s250
    %p264 = scmp.eq.s32.totalorder %s22, 1
    %p265 = por %p263, %p264
    %p267 = scmp.ne.s32.totalorder %s250, %s266
    %p268 = scmp.eq.s32.totalorder %s22, 0
    %p269 = por %p267, %p268
    %p270 = scmp.le.s32.totalorder 1, %s16
    %p271 = scmp.lt.s32.totalorder %s16, 3
    %p272 = pnand %p270, %p271
    %p273 = pneg %p272
    // Predicated region
    $region9: #{feature_extractor_forward.1} parent=5 // pred_check
      _
    $region10: #{feature_extractor_forward.1} parent=5 // pred_check_branch
      %275 = sbr.rel (%p272) target = $region12
    $region11: #{feature_extractor_forward.1} parent=5 // pred_region
      %s276 = ssub.s32 %s16, 1
      // Predicated region
      $region13: #{feature_extractor_forward.1} parent=11 // pred_check
        %p277 = pneg %p63
      $region14: #{feature_extractor_forward.1} parent=11 // pred_check_branch
        %279 = sbr.rel (%p277) target = $region16
      $region15: #{feature_extractor_forward.1} parent=11 // pred_region
        _
      $region16: #{feature_extractor_forward.1} parent=11 // pred_fallthru
        _
      // Predicated region
      $region17: #{feature_extractor_forward.1} parent=11 // pred_check
        %p280 = pneg %p84
      $region18: #{feature_extractor_forward.1} parent=11 // pred_check_branch
        %282 = sbr.rel (%p280) target = $region20
      $region19: #{feature_extractor_forward.1} parent=11 // pred_region
        _
      $region20: #{feature_extractor_forward.1} parent=11 // pred_fallthru
        _
      // Predicated region
      $region21: #{feature_extractor_forward.1} parent=11 // pred_check
        %p283 = pneg %p105
      $region22: #{feature_extractor_forward.1} parent=11 // pred_check_branch
        %285 = sbr.rel (%p283) target = $region24
      $region23: #{feature_extractor_forward.1} parent=11 // pred_region
        _
      $region24: #{feature_extractor_forward.1} parent=11 // pred_fallthru
        _
      // Predicated region
      $region25: #{feature_extractor_forward.1} parent=11 // pred_check
        %p286 = pneg %p126
      $region26: #{feature_extractor_forward.1} parent=11 // pred_check_branch
        %288 = sbr.rel (%p286) target = $region28
      $region27: #{feature_extractor_forward.1} parent=11 // pred_region
        _
      $region28: #{feature_extractor_forward.1} parent=11 // pred_fallthru
        _
      // Predicated region
      $region29: #{feature_extractor_forward.1} parent=11 // pred_check
        %p289 = pneg %p173
      $region30: #{feature_extractor_forward.1} parent=11 // pred_check_branch
        %291 = sbr.rel (%p289) target = $region32
      $region31: #{feature_extractor_forward.1} parent=11 // pred_region
        _
      $region32: #{feature_extractor_forward.1} parent=11 // pred_fallthru
        _
      // Predicated region
      $region33: #{feature_extractor_forward.1} parent=11 // pred_check
        %p292 = pneg %p194
      $region34: #{feature_extractor_forward.1} parent=11 // pred_check_branch
        %294 = sbr.rel (%p292) target = $region36
      $region35: #{feature_extractor_forward.1} parent=11 // pred_region
        _
      $region36: #{feature_extractor_forward.1} parent=11 // pred_fallthru
        _
      // Predicated region
      $region37: #{feature_extractor_forward.1} parent=11 // pred_check
        %p295 = pneg %p215
      $region38: #{feature_extractor_forward.1} parent=11 // pred_check_branch
        %297 = sbr.rel (%p295) target = $region40
      $region39: #{feature_extractor_forward.1} parent=11 // pred_region
        _
      $region40: #{feature_extractor_forward.1} parent=11 // pred_fallthru
        _
      // Predicated region
      $region41: #{feature_extractor_forward.1} parent=11 // pred_check
        %p298 = pneg %p236
      $region42: #{feature_extractor_forward.1} parent=11 // pred_check_branch
        %300 = sbr.rel (%p298) target = $region44
      $region43: #{feature_extractor_forward.1} parent=11 // pred_region
        _
      $region44: #{feature_extractor_forward.1} parent=11 // pred_fallthru
        _
    $region12: #{feature_extractor_forward.1} parent=5 // pred_fallthru
      _
    %p301 = scmp.lt.s32.totalorder %s16, 2
    // Predicated region
    $region45: #{feature_extractor_forward.1} parent=5 // pred_check
      %p302 = pneg %p301
    $region46: #{feature_extractor_forward.1} parent=5 // pred_check_branch
      %304 = sbr.rel (%p302) target = $region48
    $region47: #{feature_extractor_forward.1} parent=5 // pred_region
      // Predicated region
      $region49: #{feature_extractor_forward.1} parent=47 // pred_check
        %p305 = pneg %p36
      $region50: #{feature_extractor_forward.1} parent=47 // pred_check_branch
        %307 = sbr.rel (%p305) target = $region52
      $region51: #{feature_extractor_forward.1} parent=47 // pred_region
        %p308 = scmp.lt.s32.totalorder %s16, 1
        %s309 = scalar_select %p308, %s16, 1
        %s310 = smul.addr %s309, 22
        %s311 = smul.addr %s310, 4
        %s312 = scalar_lea.vmem %s0, %s311
      $region52: #{feature_extractor_forward.1} parent=47 // pred_fallthru
        _
      // Predicated region
      $region53: #{feature_extractor_forward.1} parent=47 // pred_check
        %p313 = pneg %p146
      $region54: #{feature_extractor_forward.1} parent=47 // pred_check_branch
        %315 = sbr.rel (%p313) target = $region56
      $region55: #{feature_extractor_forward.1} parent=47 // pred_region
        %p316 = scmp.lt.s32.totalorder %s16, 1
        %s317 = scalar_select %p316, %s16, 1
        %s318 = smul.addr %s317, 29
        %s319 = smul.addr %s318, 4
        %s320 = scalar_lea.vmem %s5, %s319
      $region56: #{feature_extractor_forward.1} parent=47 // pred_fallthru
        _
    $region48: #{feature_extractor_forward.1} parent=5 // pred_fallthru
      _
    %p321 = scmp.le.s32.totalorder 1, %s16
    %p322 = scmp.lt.s32.totalorder %s16, 3
    %p323 = pnand %p321, %p322
    %p324 = pneg %p323
    // Predicated region
    $region57: #{feature_extractor_forward.1} parent=5 // pred_check
      _
    $region58: #{feature_extractor_forward.1} parent=5 // pred_check_branch
      %326 = sbr.rel (%p323) target = $region60
    $region59: #{feature_extractor_forward.1} parent=5 // pred_region
      %s327 = ssub.s32 %s16, 1
      %p328 = scmp.lt.s32.totalorder %s21, 1
      %s329 = scalar_select %p328, %s21, 1
      %s330 = smul.addr %s329, 22
      %s331 = smul.addr %s330, 4
      %s332 = scalar_lea.vmem %s0, %s331
      %p333 = pneg %p42
      %p334 = pneg %p39
      %p335 = pneg %p63
      %p336 = pneg %p60
      %p337 = pneg %p84
      %p338 = pneg %p81
      %p339 = pneg %p105
      %p340 = pneg %p102
      %p341 = pneg %p126
      %p342 = pneg %p123
      %p343 = scmp.lt.s32.totalorder %s21, 1
      %s344 = scalar_select %p343, %s21, 1
      %s345 = smul.addr %s344, 29
      %s346 = smul.addr %s345, 4
      %s347 = scalar_lea.vmem %s5, %s346
      %p348 = pneg %p152
      %p349 = pneg %p149
      %p350 = pneg %p173
      %p351 = pneg %p170
      %p352 = pneg %p194
      %p353 = pneg %p191
      %p354 = pneg %p215
      %p355 = pneg %p212
      %p356 = pneg %p236
      %p357 = pneg %p233
      %p358 = pneg %p262
      %p359 = pneg %p259
      %p360 = scmp.lt.s32.totalorder %s21, 1
      %s361 = scalar_select %p360, %s21, 1
      %s362 = smul.addr %s361, 8
      %s363 = scalar_lea.vmem %s10, %s362
      %p364 = scmp.lt.s32.totalorder %s21, 1
      %s365 = scalar_select %p364, %s21, 1
      %s366 = smul.addr %s365, 22
      %s367 = smul.addr %s366, 4
      %s368 = scalar_lea.vmem %s0, %s367
      %p369 = scmp.lt.s32.totalorder %s21, 1
      %s370 = scalar_select %p369, %s21, 1
      %s371 = smul.addr %s370, 29
      %s372 = smul.addr %s371, 4
      %s373 = scalar_lea.vmem %s5, %s372
      %p374 = scmp.lt.s32.totalorder %s21, 1
      %s375 = scalar_select %p374, %s21, 1
      %s376 = smul.addr %s375, 8
      %s377 = scalar_lea.vmem %s10, %s376
      %v379 = vld [vmem:[%s368] sm:$0xff]
      %v380 = vld [vmem:[%s368 + $0x8] sm:$0xff]
      %v381 = vld [vmem:[%s368 + $0x10] sm:$0xff]
      %v382 = vld [vmem:[%s368 + $0x18] sm:$0xff]
      %v383 = vld [vmem:[%s368 + $0x20] sm:$0xff]
      %v384 = vld [vmem:[%s368 + $0x28] sm:$0xff]
      %v385 = vld [vmem:[%s368 + $0x30] sm:$0xff]
      %v386 = vld [vmem:[%s368 + $0x38] sm:$0xff]
      %v387 = vld [vmem:[%s368 + $0x40] sm:$0xff]
      %v388 = vld [vmem:[%s368 + $0x48] sm:$0xff]
      %v389 = vld [vmem:[%s368 + $0x50] sm:$0x33]
      %v390 = vld [vmem:[%s1] sm:$0xf]
      %v391 = vld [vmem:[%s1 + $0x4] sm:$0xf]
      %v392 = vld [vmem:[%s1 + $0x8] sm:$0xf]
      %v393 = vld [vmem:[%s1 + $0xc] sm:$0xf]
      %v394 = vld [vmem:[%s1 + $0x10] sm:$0xf]
      %v395 = vld [vmem:[%s1 + $0x14] sm:$0xf]
      %v396 = vld [vmem:[%s1 + $0x18] sm:$0xf]
      %v397 = vld [vmem:[%s1 + $0x1c] sm:$0xf]
      %v398 = vld [vmem:[%s1 + $0x20] sm:$0xf]
      %v399 = vld [vmem:[%s1 + $0x24] sm:$0xf]
      %v400 = vld [vmem:[%s1 + $0x28] sm:$0xf]
      %v401 = vld [vmem:[%s1 + $0x2c] sm:$0xf]
      %v402 = vld [vmem:[%s1 + $0x30] sm:$0xf]
      %v403 = vld [vmem:[%s1 + $0x34] sm:$0xf]
      %v404 = vld [vmem:[%s1 + $0x38] sm:$0xf]
      %v405 = vld [vmem:[%s1 + $0x3c] sm:$0xf]
      %v406 = vld [vmem:[%s1 + $0x40] sm:$0xf]
      %v407 = vld [vmem:[%s1 + $0x44] sm:$0xf]
      %v408 = vld [vmem:[%s1 + $0x48] sm:$0xf]
      %v409 = vld [vmem:[%s1 + $0x4c] sm:$0xf]
      %v410 = vld [vmem:[%s1 + $0x50] sm:$0xf]
      %v411 = vld [vmem:[%s1 + $0x54] sm:$0xf]
      %v412 = vld [vmem:[%s1 + $0x58] sm:$0xf]
      %v413 = vld [vmem:[%s1 + $0x5c] sm:$0xf]
      %v414 = vld [vmem:[%s1 + $0x60] sm:$0xf]
      %v415 = vld [vmem:[%s1 + $0x64] sm:$0xf]
      %v416 = vld [vmem:[%s1 + $0x68] sm:$0xf]
      %v417 = vld [vmem:[%s1 + $0x6c] sm:$0xf]
      %v418 = vld [vmem:[%s1 + $0x70] sm:$0xf]
      %v419 = vld [vmem:[%s1 + $0x74] sm:$0xf]
      %v420 = vld [vmem:[%s1 + $0x78] sm:$0xf]
      %v421 = vld [vmem:[%s1 + $0x7c] sm:$0xf]
      %v422 = vld [vmem:[%s2] sm:$0x1]
      %v424 = vlaneseq
      %v425 = vshrl.u32 %v424, 7
      %v426 = vsub.s32 0, %v425
      %v427 = vrot.slane %v422, %v426
      %v440 = vunpack.c.l.b16 %v379
      %v441 = vunpack.c.h.b16 %v379
      %v442 = vunpack.c.l.b16 %v380
      %v443 = vunpack.c.h.b16 %v380
      %v444 = vunpack.c.l.b16 %v381
      %v445 = vunpack.c.h.b16 %v381
      %v446 = vunpack.c.l.b16 %v382
      %v447 = vunpack.c.h.b16 %v382
      %v448 = vunpack.c.l.b16 %v383
      %v449 = vunpack.c.h.b16 %v383
      %v450 = vunpack.c.l.b16 %v384
      %v451 = vunpack.c.h.b16 %v384
      %v452 = vunpack.c.l.b16 %v385
      %v453 = vunpack.c.h.b16 %v385
      %v454 = vunpack.c.l.b16 %v386
      %v455 = vunpack.c.h.b16 %v386
      %v456 = vunpack.c.l.b16 %v387
      %v457 = vunpack.c.h.b16 %v387
      %v458 = vunpack.c.l.b16 %v388
      %v459 = vunpack.c.h.b16 %v388
      %v460 = vunpack.c.l.b16 %v389
      %v461 = vunpack.c.h.b16 %v389
      %v462 = vpack.c.b16 %v442, %v440
      %v463 = vpack.c.b16 %v443, %v441
      %v464 = vpack.c.b16 %v446, %v444
      %v465 = vpack.c.b16 %v447, %v445
      %v466 = vpack.c.b16 %v450, %v448
      %v467 = vpack.c.b16 %v451, %v449
      %v468 = vpack.c.b16 %v454, %v452
      %v469 = vpack.c.b16 %v455, %v453
      %v470 = vpack.c.b16 %v458, %v456
      %v471 = vpack.c.b16 %v459, %v457
      %v472 = vpack.c.b16 %v460, %v460
      %v473 = vpack.c.b16 %v461, %v461
      %v518 = vunpack.c.l.b16 %v390
      %v519 = vunpack.c.l.b16 %v391
      %v520 = vunpack.c.l.b16 %v392
      %v521 = vunpack.c.l.b16 %v393
      %v522 = vunpack.c.l.b16 %v394
      %v523 = vunpack.c.l.b16 %v395
      %v524 = vunpack.c.l.b16 %v396
      %v525 = vunpack.c.l.b16 %v397
      %v526 = vunpack.c.l.b16 %v398
      %v527 = vunpack.c.l.b16 %v399
      %v528 = vunpack.c.l.b16 %v400
      %v529 = vunpack.c.l.b16 %v401
      %v530 = vunpack.c.l.b16 %v402
      %v531 = vunpack.c.l.b16 %v403
      %v532 = vunpack.c.l.b16 %v404
      %v533 = vunpack.c.l.b16 %v405
      %v534 = vunpack.c.l.b16 %v406
      %v535 = vunpack.c.l.b16 %v407
      %v536 = vunpack.c.l.b16 %v408
      %v537 = vunpack.c.l.b16 %v409
      %v538 = vunpack.c.l.b16 %v410
      %v539 = vunpack.c.l.b16 %v411
      %v540 = vunpack.c.l.b16 %v412
      %v541 = vunpack.c.l.b16 %v413
      %v542 = vunpack.c.l.b16 %v414
      %v543 = vunpack.c.l.b16 %v415
      %v544 = vunpack.c.l.b16 %v416
      %v545 = vunpack.c.l.b16 %v417
      %v546 = vunpack.c.l.b16 %v418
      %v547 = vunpack.c.l.b16 %v419
      %v548 = vunpack.c.l.b16 %v420
      %v549 = vunpack.c.l.b16 %v421
      %v550 = vpack.c.b16 %v519, %v518
      %v551 = vpack.c.b16 %v521, %v520
      %v552 = vpack.c.b16 %v523, %v522
      %v553 = vpack.c.b16 %v525, %v524
      %v554 = vpack.c.b16 %v527, %v526
      %v555 = vpack.c.b16 %v529, %v528
      %v556 = vpack.c.b16 %v531, %v530
      %v557 = vpack.c.b16 %v533, %v532
      %v558 = vpack.c.b16 %v535, %v534
      %v559 = vpack.c.b16 %v537, %v536
      %v560 = vpack.c.b16 %v539, %v538
      %v561 = vpack.c.b16 %v541, %v540
      %v562 = vpack.c.b16 %v543, %v542
      %v563 = vpack.c.b16 %v545, %v544
      %v564 = vpack.c.b16 %v547, %v546
      %v565 = vpack.c.b16 %v549, %v548
      %582 = vmatprep.subr.bf16.mxu0 0
      %583 = vmatpush1.bf16.msra.mxu0 %v550
      %584 = vmatprep.subr.bf16.mxu0 0
      %585 = vmatpush1.bf16.msra.mxu0 %v551
      %586 = vmatprep.subr.bf16.mxu0 0
      %587 = vmatpush1.bf16.msra.mxu0 %v552
      %588 = vmatprep.subr.bf16.mxu0 0
      %589 = vmatpush1.bf16.msra.mxu0 %v553
      %590 = vmatprep.subr.bf16.mxu0 0
      %591 = vmatpush1.bf16.msra.mxu0 %v554
      %592 = vmatprep.subr.bf16.mxu0 0
      %593 = vmatpush1.bf16.msra.mxu0 %v555
      %594 = vmatprep.subr.bf16.mxu0 0
      %595 = vmatpush1.bf16.msra.mxu0 %v556
      %596 = vmatprep.subr.bf16.mxu0 0
      %597 = vmatpush1.bf16.msra.mxu0 %v557
      %598 = vmatprep.subr.bf16.mxu0 0
      %599 = vmatpush1.bf16.msra.mxu0 %v558
      %600 = vmatprep.subr.bf16.mxu0 0
      %601 = vmatpush1.bf16.msra.mxu0 %v559
      %602 = vmatprep.subr.bf16.mxu0 0
      %603 = vmatpush1.bf16.msra.mxu0 %v560
      %604 = vmatprep.subr.bf16.mxu0 0
      %605 = vmatpush1.bf16.msra.mxu0 %v561
      %606 = vmatprep.subr.bf16.mxu0 0
      %607 = vmatpush1.bf16.msra.mxu0 %v562
      %608 = vmatprep.subr.bf16.mxu0 0
      %609 = vmatpush1.bf16.msra.mxu0 %v563
      %610 = vmatprep.subr.bf16.mxu0 0
      %611 = vmatpush1.bf16.msra.mxu0 %v564
      %612 = vmatprep.subr.bf16.mxu0 0
      %613 = vmatpush1.bf16.msra.mxu0 %v565
      %614 = vmatprep.mubr.bf16.mxu0 %v463
      %615 = vmatmul.mubr.bf16.gmra.mrb[0].mxu0 %v462
      %v616 = vpop.f32.mrb[0].mxu0
      %v617 = vadd.f32 %v427, %v616
      %v618 = vpop.f32.mrb[0].mxu0
      %v619 = vpop.f32.mrb[0].mxu0
      %v620 = vadd.f32 %v427, %v619
      %v621 = vpop.f32.mrb[0].mxu0
      %622 = vmatprep.mubr.bf16.mxu0 %v465
      %623 = vmatmul.mubr.bf16.gmra.mrb[0].mxu0 %v464
      %v624 = vpop.f32.mrb[0].mxu0
      %v625 = vadd.f32 %v427, %v624
      %v626 = vpop.f32.mrb[0].mxu0
      %v627 = vpop.f32.mrb[0].mxu0
      %v628 = vadd.f32 %v427, %v627
      %v629 = vpop.f32.mrb[0].mxu0
      %630 = vmatprep.mubr.bf16.mxu0 %v467
      %631 = vmatmul.mubr.bf16.gmra.mrb[0].mxu0 %v466
      %v632 = vpop.f32.mrb[0].mxu0
      %v633 = vadd.f32 %v427, %v632
      %v634 = vpop.f32.mrb[0].mxu0
      %v635 = vpop.f32.mrb[0].mxu0
      %v636 = vadd.f32 %v427, %v635
      %v637 = vpop.f32.mrb[0].mxu0
      %638 = vmatprep.mubr.bf16.mxu0 %v469
      %639 = vmatmul.mubr.bf16.gmra.mrb[0].mxu0 %v468
      %v640 = vpop.f32.mrb[0].mxu0
      %v641 = vadd.f32 %v427, %v640
      %v642 = vpop.f32.mrb[0].mxu0
      %v643 = vpop.f32.mrb[0].mxu0
      %v644 = vadd.f32 %v427, %v643
      %v645 = vpop.f32.mrb[0].mxu0
      %646 = vmatprep.mubr.bf16.mxu0 %v471
      %647 = vmatmul.mubr.bf16.gmra.mrb[0].mxu0 %v470
      %v648 = vpop.f32.mrb[0].mxu0
      %v649 = vadd.f32 %v427, %v648
      %v650 = vpop.f32.mrb[0].mxu0
      %v651 = vpop.f32.mrb[0].mxu0
      %v652 = vadd.f32 %v427, %v651
      %v653 = vpop.f32.mrb[0].mxu0
      %654 = vmatprep.mubr.bf16.mxu0 %v473
      %655 = vmatmul.mubr.bf16.gmra.mrb[0].mxu0 %v472
      %v656 = vpop.f32.mrb[0].mxu0
      %v657 = vadd.f32 %v427, %v656
      %v658 = vpop.f32.mrb[0].mxu0
      %v659 = vpop.f32.mrb[0].mxu0
      %v660 = vpop.f32.mrb[0].mxu0
      %661 = vdwg.mxu0
      %v662 = vmax.f32 %v617, 0.0
      %v663 = vmax.f32 %v620, 0.0
      %v664 = vmax.f32 %v625, 0.0
      %v665 = vmax.f32 %v628, 0.0
      %v666 = vmax.f32 %v633, 0.0
      %v667 = vmax.f32 %v636, 0.0
      %v668 = vmax.f32 %v641, 0.0
      %v669 = vmax.f32 %v644, 0.0
      %v670 = vmax.f32 %v649, 0.0
      %v671 = vmax.f32 %v652, 0.0
      %v672 = vmax.f32 %v657, 0.0
      %vm677 = vcmask 1042432
      %v678 = vrot.slane %v664, 5
      %v679 = vrot.slane %v665, 5
      %v680 = vsel %vm677, %v678, %v679
      %v681 = vrot.slane %v666, 5
      %v682 = vsel %vm677, %v679, %v681
      %v683 = vrot.slane %v667, 5
      %v684 = vsel %vm677, %v681, %v683
      %v688 = vmax.f32 %v662, %v680
      %v689 = vmax.f32 %v663, %v682
      %v690 = vmax.f32 %v664, %v684
      %vm693 = vcmask 1045504
      %v694 = vrot.slane %v667, 2
      %v695 = vrot.slane %v668, 2
      %v696 = vsel %vm693, %v694, %v695
      %v697 = vrot.slane %v669, 2
      %v698 = vsel %vm693, %v695, %v697
      %v702 = vmax.f32 %v688, %v696
      %v703 = vmax.f32 %v689, %v698
      %v704 = vmax.f32 %v690, %v697
      %vm708 = vcmask 1040384
      %v709 = vrot.slane %v669, 7
      %v710 = vrot.slane %v670, 7
      %v711 = vsel %vm708, %v709, %v710
      %v712 = vrot.slane %v671, 7
      %v713 = vsel %vm708, %v710, %v712
      %v714 = vrot.slane %v672, 7
      %v715 = vsel %vm708, %v712, %v714
      %v719 = vmax.f32 %v702, %v711
      %v720 = vmax.f32 %v703, %v713
      %v721 = vmax.f32 %v704, %v715
      %v722 = vpack.c.bf16 %v720, %v719
      %v723 = vpack.c.bf16 %v721, %v721
      %vm724 = vsmask.f32 7424
      %v726 = vshrl.u32 %v722, 16
      %v728 = vshll.u32 %v722, 16
      %v730 = vrot.slane %v728, 1
      %v731 = vor.u32 %v726, %v730
      %v733 = vshll.u32 %v723, 16
      %v735 = vrot.slane %v733, 1
      %v736 = vsel %vm724, %v731, %v735
      %737 = vrot.lane.b32.xlu0 %v736, 64
      %v738 = vpop.permute.xlu0 %737
      %vm741 = vcmask 1046528
      %v742 = vrot.slane %v722, 1
      %v743 = vrot.slane %v723, 1
      %v744 = vsel %vm741, %v742, %v743
      %vm745 = vsmask.f32 6400
      %v746 = vrot.slane %v726, 1
      %v747 = vrot.slane %v728, 2
      %v748 = vor.u32 %v746, %v747
      %v749 = vshrl.u32 %v723, 16
      %v751 = vrot.slane %v749, 1
      %v752 = vrot.slane %v733, 2
      %v753 = vor.u32 %v751, %v752
      %v754 = vsel %vm745, %v748, %v753
      %755 = vrot.lane.b32.xlu0 %v754, 64
      %v756 = vpop.permute.xlu0 %755
      %vm757 = vcmask 1045504
      %v758 = vrot.slane %v722, 2
      %v759 = vrot.slane %v723, 2
      %v760 = vsel %vm757, %v758, %v759
      %vm761 = vsmask.f32 5376
      %v762 = vrot.slane %v726, 2
      %v763 = vrot.slane %v728, 3
      %v764 = vor.u32 %v762, %v763
      %v765 = vrot.slane %v749, 2
      %v766 = vrot.slane %v733, 3
      %v767 = vor.u32 %v765, %v766
      %v768 = vsel %vm761, %v764, %v767
      %769 = vrot.lane.b32.xlu0 %v768, 64
      %v770 = vpop.permute.xlu0 %769
      %vm771 = vcmask 523264
      %v773 = vsel %vm771, %v722, %v738
      %v777 = vsel %vm771, %v744, %v756
      %v781 = vsel %vm771, %v760, %v770
      %v783 = vld [vmem:[%s3] sm:$0xf]
      %v784 = vld [vmem:[%s3 + $0x4] sm:$0xf]
      %v785 = vld [vmem:[%s3 + $0x8] sm:$0xf]
      %v786 = vld [vmem:[%s3 + $0xc] sm:$0xf]
      %v787 = vld [vmem:[%s3 + $0x10] sm:$0xf]
      %v788 = vld [vmem:[%s3 + $0x14] sm:$0xf]
      %v789 = vld [vmem:[%s3 + $0x18] sm:$0xf]
      %v790 = vld [vmem:[%s3 + $0x1c] sm:$0xf]
      %v791 = vld [vmem:[%s3 + $0x20] sm:$0xf]
      %v792 = vld [vmem:[%s3 + $0x24] sm:$0xf]
      %v793 = vld [vmem:[%s3 + $0x28] sm:$0xf]
      %v794 = vld [vmem:[%s3 + $0x2c] sm:$0xf]
      %v795 = vld [vmem:[%s3 + $0x30] sm:$0xf]
      %v796 = vld [vmem:[%s3 + $0x34] sm:$0xf]
      %v797 = vld [vmem:[%s3 + $0x38] sm:$0xf]
      %v798 = vld [vmem:[%s3 + $0x3c] sm:$0xf]
      %v799 = vld [vmem:[%s3 + $0x40] sm:$0xf]
      %v800 = vld [vmem:[%s3 + $0x44] sm:$0xf]
      %v801 = vld [vmem:[%s3 + $0x48] sm:$0xf]
      %v802 = vld [vmem:[%s3 + $0x4c] sm:$0xf]
      %v803 = vld [vmem:[%s3 + $0x50] sm:$0xf]
      %v804 = vld [vmem:[%s3 + $0x54] sm:$0xf]
      %v805 = vld [vmem:[%s3 + $0x58] sm:$0xf]
      %v806 = vld [vmem:[%s3 + $0x5c] sm:$0xf]
      %v807 = vld [vmem:[%s3 + $0x60] sm:$0xf]
      %v808 = vld [vmem:[%s3 + $0x64] sm:$0xf]
      %v809 = vld [vmem:[%s3 + $0x68] sm:$0xf]
      %v810 = vld [vmem:[%s3 + $0x6c] sm:$0xf]
      %v811 = vld [vmem:[%s3 + $0x70] sm:$0xf]
      %v812 = vld [vmem:[%s3 + $0x74] sm:$0xf]
      %v813 = vld [vmem:[%s3 + $0x78] sm:$0xf]
      %v814 = vld [vmem:[%s3 + $0x7c] sm:$0xf]
      %v815 = vld [vmem:[%s3 + $0x80] sm:$0xf]
      %v816 = vld [vmem:[%s3 + $0x84] sm:$0xf]
      %v817 = vld [vmem:[%s3 + $0x88] sm:$0xf]
      %v818 = vld [vmem:[%s3 + $0x8c] sm:$0xf]
      %v819 = vld [vmem:[%s3 + $0x90] sm:$0xf]
      %v820 = vld [vmem:[%s3 + $0x94] sm:$0xf]
      %v821 = vld [vmem:[%s3 + $0x98] sm:$0xf]
      %v822 = vld [vmem:[%s3 + $0x9c] sm:$0xf]
      %v823 = vld [vmem:[%s3 + $0xa0] sm:$0xf]
      %v824 = vld [vmem:[%s3 + $0xa4] sm:$0xf]
      %v825 = vld [vmem:[%s3 + $0xa8] sm:$0xf]
      %v826 = vld [vmem:[%s3 + $0xac] sm:$0xf]
      %v827 = vld [vmem:[%s3 + $0xb0] sm:$0xf]
      %v828 = vld [vmem:[%s3 + $0xb4] sm:$0xf]
      %v829 = vld [vmem:[%s3 + $0xb8] sm:$0xf]
      %v830 = vld [vmem:[%s3 + $0xbc] sm:$0xf]
      %v831 = vld [vmem:[%s4] sm:$0x1]
      %v833 = vlaneseq
      %v834 = vshrl.u32 %v833, 7
      %v835 = vsub.s32 0, %v834
      %v836 = vrot.slane %v831, %v835
      %v886 = vunpack.c.l.b16 %v783
      %v887 = vunpack.c.l.b16 %v784
      %v888 = vunpack.c.l.b16 %v785
      %v889 = vunpack.c.l.b16 %v786
      %v890 = vunpack.c.l.b16 %v787
      %v891 = vunpack.c.l.b16 %v788
      %v892 = vunpack.c.l.b16 %v789
      %v893 = vunpack.c.l.b16 %v790
      %v894 = vunpack.c.l.b16 %v791
      %v895 = vunpack.c.l.b16 %v792
      %v896 = vunpack.c.l.b16 %v793
      %v897 = vunpack.c.l.b16 %v794
      %v898 = vunpack.c.l.b16 %v795
      %v899 = vunpack.c.l.b16 %v796
      %v900 = vunpack.c.l.b16 %v797
      %v901 = vunpack.c.l.b16 %v798
      %v902 = vunpack.c.l.b16 %v799
      %v903 = vunpack.c.l.b16 %v800
      %v904 = vunpack.c.l.b16 %v801
      %v905 = vunpack.c.l.b16 %v802
      %v906 = vunpack.c.l.b16 %v803
      %v907 = vunpack.c.l.b16 %v804
      %v908 = vunpack.c.l.b16 %v805
      %v909 = vunpack.c.l.b16 %v806
      %v910 = vunpack.c.l.b16 %v807
      %v911 = vunpack.c.l.b16 %v808
      %v912 = vunpack.c.l.b16 %v809
      %v913 = vunpack.c.l.b16 %v810
      %v914 = vunpack.c.l.b16 %v811
      %v915 = vunpack.c.l.b16 %v812
      %v916 = vunpack.c.l.b16 %v813
      %v917 = vunpack.c.l.b16 %v814
      %v918 = vunpack.c.l.b16 %v815
      %v919 = vunpack.c.l.b16 %v816
      %v920 = vunpack.c.l.b16 %v817
      %v921 = vunpack.c.l.b16 %v818
      %v922 = vunpack.c.l.b16 %v819
      %v923 = vunpack.c.l.b16 %v820
      %v924 = vunpack.c.l.b16 %v821
      %v925 = vunpack.c.l.b16 %v822
      %v926 = vunpack.c.l.b16 %v823
      %v927 = vunpack.c.l.b16 %v824
      %v928 = vunpack.c.l.b16 %v825
      %v929 = vunpack.c.l.b16 %v826
      %v930 = vunpack.c.l.b16 %v827
      %v931 = vunpack.c.l.b16 %v828
      %v932 = vunpack.c.l.b16 %v829
      %v933 = vunpack.c.l.b16 %v830
      %v934 = vpack.c.b16 %v887, %v886
      %v935 = vpack.c.b16 %v889, %v888
      %v936 = vpack.c.b16 %v891, %v890
      %v937 = vpack.c.b16 %v893, %v892
      %v938 = vpack.c.b16 %v895, %v894
      %v939 = vpack.c.b16 %v897, %v896
      %v940 = vpack.c.b16 %v899, %v898
      %v941 = vpack.c.b16 %v901, %v900
      %v942 = vpack.c.b16 %v903, %v902
      %v943 = vpack.c.b16 %v905, %v904
      %v944 = vpack.c.b16 %v907, %v906
      %v945 = vpack.c.b16 %v909, %v908
      %v946 = vpack.c.b16 %v911, %v910
      %v947 = vpack.c.b16 %v913, %v912
      %v948 = vpack.c.b16 %v915, %v914
      %v949 = vpack.c.b16 %v917, %v916
      %v950 = vpack.c.b16 %v919, %v918
      %v951 = vpack.c.b16 %v921, %v920
      %v952 = vpack.c.b16 %v923, %v922
      %v953 = vpack.c.b16 %v925, %v924
      %v954 = vpack.c.b16 %v927, %v926
      %v955 = vpack.c.b16 %v929, %v928
      %v956 = vpack.c.b16 %v931, %v930
      %v957 = vpack.c.b16 %v933, %v932
      %982 = vmatprep.subr.bf16.mxu0 0
      %983 = vmatpush1.bf16.msra.mxu0 %v934
      %984 = vmatprep.subr.bf16.mxu0 0
      %985 = vmatpush1.bf16.msra.mxu0 %v935
      %986 = vmatprep.subr.bf16.mxu0 0
      %987 = vmatpush1.bf16.msra.mxu0 %v936
      %988 = vmatprep.subr.bf16.mxu0 0
      %989 = vmatpush1.bf16.msra.mxu0 %v937
      %990 = vmatprep.subr.bf16.mxu0 0
      %991 = vmatpush1.bf16.msra.mxu0 %v938
      %992 = vmatprep.subr.bf16.mxu0 0
      %993 = vmatpush1.bf16.msra.mxu0 %v939
      %994 = vmatprep.subr.bf16.mxu0 0
      %995 = vmatpush1.bf16.msra.mxu0 %v940
      %996 = vmatprep.subr.bf16.mxu0 0
      %997 = vmatpush1.bf16.msra.mxu0 %v941
      %998 = vmatprep.subr.bf16.mxu0 0
      %999 = vmatpush1.bf16.msra.mxu0 %v942
      %1000 = vmatprep.subr.bf16.mxu0 0
      %1001 = vmatpush1.bf16.msra.mxu0 %v943
      %1002 = vmatprep.subr.bf16.mxu0 0
      %1003 = vmatpush1.bf16.msra.mxu0 %v944
      %1004 = vmatprep.subr.bf16.mxu0 0
      %1005 = vmatpush1.bf16.msra.mxu0 %v945
      %1006 = vmatprep.subr.bf16.mxu0 0
      %1007 = vmatpush1.bf16.msra.mxu0 %v946
      %1008 = vmatprep.subr.bf16.mxu0 0
      %1009 = vmatpush1.bf16.msra.mxu0 %v947
      %1010 = vmatprep.subr.bf16.mxu0 0
      %1011 = vmatpush1.bf16.msra.mxu0 %v948
      %1012 = vmatprep.subr.bf16.mxu0 0
      %1013 = vmatpush1.bf16.msra.mxu0 %v949
      %1014 = vmatprep.mubr.bf16.mxu0 %v777
      %1015 = vmatmul.mubr.bf16.gmra.mrb[0].mxu0 %v773
      %v1016 = vpop.f32.mrb[0].mxu0
      %v1017 = vadd.f32 %v836, %v1016
      %v1018 = vpop.f32.mrb[0].mxu0
      %v1019 = vpop.f32.mrb[0].mxu0
      %v1020 = vadd.f32 %v836, %v1019
      %v1021 = vpop.f32.mrb[0].mxu0
      %1022 = vdwg.mxu0
      %1023 = vmatprep.subr.bf16.mxu0 0
      %1024 = vmatpush1.bf16.msra.mxu0 %v950
      %1025 = vmatprep.subr.bf16.mxu0 0
      %1026 = vmatpush1.bf16.msra.mxu0 %v951
      %1027 = vmatprep.subr.bf16.mxu0 0
      %1028 = vmatpush1.bf16.msra.mxu0 %v952
      %1029 = vmatprep.subr.bf16.mxu0 0
      %1030 = vmatpush1.bf16.msra.mxu0 %v953
      %1031 = vmatprep.subr.bf16.mxu0 0
      %1032 = vmatpush1.bf16.msra.mxu0 %v954
      %1033 = vmatprep.subr.bf16.mxu0 0
      %1034 = vmatpush1.bf16.msra.mxu0 %v955
      %1035 = vmatprep.subr.bf16.mxu0 0
      %1036 = vmatpush1.bf16.msra.mxu0 %v956
      %1037 = vmatprep.subr.bf16.mxu0 0
      %1038 = vmatpush1.bf16.msra.mxu0 %v957
      %1039 = vmatprep.subr.bf16.mxu0 0
      %1040 = vmatpush1.bf16.msra.mxu0 0
      %1041 = vmatprep.subr.bf16.mxu0 0
      %1042 = vmatpush1.bf16.msra.mxu0 0
      %1043 = vmatprep.subr.bf16.mxu0 0
      %1044 = vmatpush1.bf16.msra.mxu0 0
      %1045 = vmatprep.subr.bf16.mxu0 0
      %1046 = vmatpush1.bf16.msra.mxu0 0
      %1047 = vmatprep.subr.bf16.mxu0 0
      %1048 = vmatpush1.bf16.msra.mxu0 0
      %1049 = vmatprep.subr.bf16.mxu0 0
      %1050 = vmatpush1.bf16.msra.mxu0 0
      %1051 = vmatprep.subr.bf16.mxu0 0
      %1052 = vmatpush1.bf16.msra.mxu0 0
      %1053 = vmatprep.subr.bf16.mxu0 0
      %1054 = vmatpush1.bf16.msra.mxu0 0
      %1055 = vmatprep.mubr.bf16.mxu0 0
      %1056 = vmatmul.mubr.bf16.gmra.mrb[0].mxu0 %v781
      %v1057 = vpop.f32.mrb[0].mxu0
      %v1058 = vadd.f32 %v1017, %v1057
      %v1059 = vpop.f32.mrb[0].mxu0
      %v1060 = vpop.f32.mrb[0].mxu0
      %v1061 = vadd.f32 %v1020, %v1060
      %v1062 = vpop.f32.mrb[0].mxu0
      %1063 = vdwg.mxu0
      %v1064 = vmax.f32 %v1058, 0.0
      %v1065 = vmax.f32 %v1061, 0.0
      %v1066 = vpack.c.bf16 %v1065, %v1064
      %v1068 = vshrl.u32 %v1066, 16
      %v1070 = vshll.u32 %v1066, 16
      %v1072 = vrot.slane %v1070, 1
      %v1073 = vor.u32 %v1068, %v1072
      %1074 = vrot.lane.b32.xlu0 %v1073, 64
      %v1075 = vpop.permute.xlu0 %1074
      %v1077 = vrot.slane %v1066, 1
      %v1078 = vrot.slane %v1068, 1
      %v1079 = vrot.slane %v1070, 2
      %v1080 = vor.u32 %v1078, %v1079
      %1081 = vrot.lane.b32.xlu0 %v1080, 64
      %v1082 = vpop.permute.xlu0 %1081
      %v1083 = vrot.slane %v1066, 2
      %v1084 = vrot.slane %v1068, 2
      %v1085 = vrot.slane %v1070, 3
      %v1086 = vor.u32 %v1084, %v1085
      %1087 = vrot.lane.b32.xlu0 %v1086, 64
      %v1088 = vpop.permute.xlu0 %1087
      %v1090 = vsel %vm771, %v1066, %v1075
      %v1094 = vsel %vm771, %v1077, %v1082
      %v1098 = vsel %vm771, %v1083, %v1088
      %s1100 = scalar_lea.vmem %s3, 192
      %v1101 = vld [vmem:[%s1100] sm:$0xf]
      %v1102 = vld [vmem:[%s1100 + $0x4] sm:$0xf]
      %v1103 = vld [vmem:[%s1100 + $0x8] sm:$0xf]
      %v1104 = vld [vmem:[%s1100 + $0xc] sm:$0xf]
      %v1105 = vld [vmem:[%s1100 + $0x10] sm:$0xf]
      %v1106 = vld [vmem:[%s1100 + $0x14] sm:$0xf]
      %v1107 = vld [vmem:[%s1100 + $0x18] sm:$0xf]
      %v1108 = vld [vmem:[%s1100 + $0x1c] sm:$0xf]
      %v1109 = vld [vmem:[%s1100 + $0x20] sm:$0xf]
      %v1110 = vld [vmem:[%s1100 + $0x24] sm:$0xf]
      %v1111 = vld [vmem:[%s1100 + $0x28] sm:$0xf]
      %v1112 = vld [vmem:[%s1100 + $0x2c] sm:$0xf]
      %v1113 = vld [vmem:[%s1100 + $0x30] sm:$0xf]
      %v1114 = vld [vmem:[%s1100 + $0x34] sm:$0xf]
      %v1115 = vld [vmem:[%s1100 + $0x38] sm:$0xf]
      %v1116 = vld [vmem:[%s1100 + $0x3c] sm:$0xf]
      %v1117 = vld [vmem:[%s1100 + $0x40] sm:$0xf]
      %v1118 = vld [vmem:[%s1100 + $0x44] sm:$0xf]
      %v1119 = vld [vmem:[%s1100 + $0x48] sm:$0xf]
      %v1120 = vld [vmem:[%s1100 + $0x4c] sm:$0xf]
      %v1121 = vld [vmem:[%s1100 + $0x50] sm:$0xf]
      %v1122 = vld [vmem:[%s1100 + $0x54] sm:$0xf]
      %v1123 = vld [vmem:[%s1100 + $0x58] sm:$0xf]
      %v1124 = vld [vmem:[%s1100 + $0x5c] sm:$0xf]
      %v1125 = vld [vmem:[%s1100 + $0x60] sm:$0xf]
      %v1126 = vld [vmem:[%s1100 + $0x64] sm:$0xf]
      %v1127 = vld [vmem:[%s1100 + $0x68] sm:$0xf]
      %v1128 = vld [vmem:[%s1100 + $0x6c] sm:$0xf]
      %v1129 = vld [vmem:[%s1100 + $0x70] sm:$0xf]
      %v1130 = vld [vmem:[%s1100 + $0x74] sm:$0xf]
      %v1131 = vld [vmem:[%s1100 + $0x78] sm:$0xf]
      %v1132 = vld [vmem:[%s1100 + $0x7c] sm:$0xf]
      %v1133 = vld [vmem:[%s1100 + $0x80] sm:$0xf]
      %v1134 = vld [vmem:[%s1100 + $0x84] sm:$0xf]
      %v1135 = vld [vmem:[%s1100 + $0x88] sm:$0xf]
      %v1136 = vld [vmem:[%s1100 + $0x8c] sm:$0xf]
      %v1137 = vld [vmem:[%s1100 + $0x90] sm:$0xf]
      %v1138 = vld [vmem:[%s1100 + $0x94] sm:$0xf]
      %v1139 = vld [vmem:[%s1100 + $0x98] sm:$0xf]
      %v1140 = vld [vmem:[%s1100 + $0x9c] sm:$0xf]
      %v1141 = vld [vmem:[%s1100 + $0xa0] sm:$0xf]
      %v1142 = vld [vmem:[%s1100 + $0xa4] sm:$0xf]
      %v1143 = vld [vmem:[%s1100 + $0xa8] sm:$0xf]
      %v1144 = vld [vmem:[%s1100 + $0xac] sm:$0xf]
      %v1145 = vld [vmem:[%s1100 + $0xb0] sm:$0xf]
      %v1146 = vld [vmem:[%s1100 + $0xb4] sm:$0xf]
      %v1147 = vld [vmem:[%s1100 + $0xb8] sm:$0xf]
      %v1148 = vld [vmem:[%s1100 + $0xbc] sm:$0xf]
      %s1149 = scalar_lea.vmem %s4, 1
      %v1150 = vld [vmem:[%s1149] sm:$0x1]
      %v1152 = vlaneseq
      %v1153 = vshrl.u32 %v1152, 7
      %v1154 = vsub.s32 0, %v1153
      %v1155 = vrot.slane %v1150, %v1154
      %v1205 = vunpack.c.l.b16 %v1101
      %v1206 = vunpack.c.l.b16 %v1102
      %v1207 = vunpack.c.l.b16 %v1103
      %v1208 = vunpack.c.l.b16 %v1104
      %v1209 = vunpack.c.l.b16 %v1105
      %v1210 = vunpack.c.l.b16 %v1106
      %v1211 = vunpack.c.l.b16 %v1107
      %v1212 = vunpack.c.l.b16 %v1108
      %v1213 = vunpack.c.l.b16 %v1109
      %v1214 = vunpack.c.l.b16 %v1110
      %v1215 = vunpack.c.l.b16 %v1111
      %v1216 = vunpack.c.l.b16 %v1112
      %v1217 = vunpack.c.l.b16 %v1113
      %v1218 = vunpack.c.l.b16 %v1114
      %v1219 = vunpack.c.l.b16 %v1115
      %v1220 = vunpack.c.l.b16 %v1116
      %v1221 = vunpack.c.l.b16 %v1117
      %v1222 = vunpack.c.l.b16 %v1118
      %v1223 = vunpack.c.l.b16 %v1119
      %v1224 = vunpack.c.l.b16 %v1120
      %v1225 = vunpack.c.l.b16 %v1121
      %v1226 = vunpack.c.l.b16 %v1122
      %v1227 = vunpack.c.l.b16 %v1123
      %v1228 = vunpack.c.l.b16 %v1124
      %v1229 = vunpack.c.l.b16 %v1125
      %v1230 = vunpack.c.l.b16 %v1126
      %v1231 = vunpack.c.l.b16 %v1127
      %v1232 = vunpack.c.l.b16 %v1128
      %v1233 = vunpack.c.l.b16 %v1129
      %v1234 = vunpack.c.l.b16 %v1130
      %v1235 = vunpack.c.l.b16 %v1131
      %v1236 = vunpack.c.l.b16 %v1132
      %v1237 = vunpack.c.l.b16 %v1133
      %v1238 = vunpack.c.l.b16 %v1134
      %v1239 = vunpack.c.l.b16 %v1135
      %v1240 = vunpack.c.l.b16 %v1136
      %v1241 = vunpack.c.l.b16 %v1137
      %v1242 = vunpack.c.l.b16 %v1138
      %v1243 = vunpack.c.l.b16 %v1139
      %v1244 = vunpack.c.l.b16 %v1140
      %v1245 = vunpack.c.l.b16 %v1141
      %v1246 = vunpack.c.l.b16 %v1142
      %v1247 = vunpack.c.l.b16 %v1143
      %v1248 = vunpack.c.l.b16 %v1144
      %v1249 = vunpack.c.l.b16 %v1145
      %v1250 = vunpack.c.l.b16 %v1146
      %v1251 = vunpack.c.l.b16 %v1147
      %v1252 = vunpack.c.l.b16 %v1148
      %v1253 = vpack.c.b16 %v1206, %v1205
      %v1254 = vpack.c.b16 %v1208, %v1207
      %v1255 = vpack.c.b16 %v1210, %v1209
      %v1256 = vpack.c.b16 %v1212, %v1211
      %v1257 = vpack.c.b16 %v1214, %v1213
      %v1258 = vpack.c.b16 %v1216, %v1215
      %v1259 = vpack.c.b16 %v1218, %v1217
      %v1260 = vpack.c.b16 %v1220, %v1219
      %v1261 = vpack.c.b16 %v1222, %v1221
      %v1262 = vpack.c.b16 %v1224, %v1223
      %v1263 = vpack.c.b16 %v1226, %v1225
      %v1264 = vpack.c.b16 %v1228, %v1227
      %v1265 = vpack.c.b16 %v1230, %v1229
      %v1266 = vpack.c.b16 %v1232, %v1231
      %v1267 = vpack.c.b16 %v1234, %v1233
      %v1268 = vpack.c.b16 %v1236, %v1235
      %v1269 = vpack.c.b16 %v1238, %v1237
      %v1270 = vpack.c.b16 %v1240, %v1239
      %v1271 = vpack.c.b16 %v1242, %v1241
      %v1272 = vpack.c.b16 %v1244, %v1243
      %v1273 = vpack.c.b16 %v1246, %v1245
      %v1274 = vpack.c.b16 %v1248, %v1247
      %v1275 = vpack.c.b16 %v1250, %v1249
      %v1276 = vpack.c.b16 %v1252, %v1251
      %1301 = vmatprep.subr.bf16.mxu0 0
      %1302 = vmatpush1.bf16.msra.mxu0 %v1253
      %1303 = vmatprep.subr.bf16.mxu0 0
      %1304 = vmatpush1.bf16.msra.mxu0 %v1254
      %1305 = vmatprep.subr.bf16.mxu0 0
      %1306 = vmatpush1.bf16.msra.mxu0 %v1255
      %1307 = vmatprep.subr.bf16.mxu0 0
      %1308 = vmatpush1.bf16.msra.mxu0 %v1256
      %1309 = vmatprep.subr.bf16.mxu0 0
      %1310 = vmatpush1.bf16.msra.mxu0 %v1257
      %1311 = vmatprep.subr.bf16.mxu0 0
      %1312 = vmatpush1.bf16.msra.mxu0 %v1258
      %1313 = vmatprep.subr.bf16.mxu0 0
      %1314 = vmatpush1.bf16.msra.mxu0 %v1259
      %1315 = vmatprep.subr.bf16.mxu0 0
      %1316 = vmatpush1.bf16.msra.mxu0 %v1260
      %1317 = vmatprep.subr.bf16.mxu0 0
      %1318 = vmatpush1.bf16.msra.mxu0 %v1261
      %1319 = vmatprep.subr.bf16.mxu0 0
      %1320 = vmatpush1.bf16.msra.mxu0 %v1262
      %1321 = vmatprep.subr.bf16.mxu0 0
      %1322 = vmatpush1.bf16.msra.mxu0 %v1263
      %1323 = vmatprep.subr.bf16.mxu0 0
      %1324 = vmatpush1.bf16.msra.mxu0 %v1264
      %1325 = vmatprep.subr.bf16.mxu0 0
      %1326 = vmatpush1.bf16.msra.mxu0 %v1265
      %1327 = vmatprep.subr.bf16.mxu0 0
      %1328 = vmatpush1.bf16.msra.mxu0 %v1266
      %1329 = vmatprep.subr.bf16.mxu0 0
      %1330 = vmatpush1.bf16.msra.mxu0 %v1267
      %1331 = vmatprep.subr.bf16.mxu0 0
      %1332 = vmatpush1.bf16.msra.mxu0 %v1268
      %1333 = vmatprep.mubr.bf16.mxu0 %v1094
      %1334 = vmatmul.mubr.bf16.gmra.mrb[0].mxu0 %v1090
      %v1335 = vpop.f32.mrb[0].mxu0
      %v1336 = vadd.f32 %v1155, %v1335
      %v1337 = vpop.f32.mrb[0].mxu0
      %v1338 = vpop.f32.mrb[0].mxu0
      %v1339 = vadd.f32 %v1155, %v1338
      %v1340 = vpop.f32.mrb[0].mxu0
      %1341 = vdwg.mxu0
      %1342 = vmatprep.subr.bf16.mxu0 0
      %1343 = vmatpush1.bf16.msra.mxu0 %v1269
      %1344 = vmatprep.subr.bf16.mxu0 0
      %1345 = vmatpush1.bf16.msra.mxu0 %v1270
      %1346 = vmatprep.subr.bf16.mxu0 0
      %1347 = vmatpush1.bf16.msra.mxu0 %v1271
      %1348 = vmatprep.subr.bf16.mxu0 0
      %1349 = vmatpush1.bf16.msra.mxu0 %v1272
      %1350 = vmatprep.subr.bf16.mxu0 0
      %1351 = vmatpush1.bf16.msra.mxu0 %v1273
      %1352 = vmatprep.subr.bf16.mxu0 0
      %1353 = vmatpush1.bf16.msra.mxu0 %v1274
      %1354 = vmatprep.subr.bf16.mxu0 0
      %1355 = vmatpush1.bf16.msra.mxu0 %v1275
      %1356 = vmatprep.subr.bf16.mxu0 0
      %1357 = vmatpush1.bf16.msra.mxu0 %v1276
      %1358 = vmatprep.subr.bf16.mxu0 0
      %1359 = vmatpush1.bf16.msra.mxu0 0
      %1360 = vmatprep.subr.bf16.mxu0 0
      %1361 = vmatpush1.bf16.msra.mxu0 0
      %1362 = vmatprep.subr.bf16.mxu0 0
      %1363 = vmatpush1.bf16.msra.mxu0 0
      %1364 = vmatprep.subr.bf16.mxu0 0
      %1365 = vmatpush1.bf16.msra.mxu0 0
      %1366 = vmatprep.subr.bf16.mxu0 0
      %1367 = vmatpush1.bf16.msra.mxu0 0
      %1368 = vmatprep.subr.bf16.mxu0 0
      %1369 = vmatpush1.bf16.msra.mxu0 0
      %1370 = vmatprep.subr.bf16.mxu0 0
      %1371 = vmatpush1.bf16.msra.mxu0 0
      %1372 = vmatprep.subr.bf16.mxu0 0
      %1373 = vmatpush1.bf16.msra.mxu0 0
      %1374 = vmatprep.mubr.bf16.mxu0 0
      %1375 = vmatmul.mubr.bf16.gmra.mrb[0].mxu0 %v1098
      %v1376 = vpop.f32.mrb[0].mxu0
      %v1377 = vadd.f32 %v1336, %v1376
      %v1378 = vpop.f32.mrb[0].mxu0
      %v1379 = vpop.f32.mrb[0].mxu0
      %v1380 = vadd.f32 %v1339, %v1379
      %v1381 = vpop.f32.mrb[0].mxu0
      %1382 = vdwg.mxu0
      %v1383 = vmax.f32 %v1377, 0.0
      %v1384 = vmax.f32 %v1380, 0.0
      %v1385 = vpack.c.bf16 %v1384, %v1383
      %v1387 = vshrl.u32 %v1385, 16
      %v1389 = vshll.u32 %v1385, 16
      %v1391 = vrot.slane %v1389, 1
      %v1392 = vor.u32 %v1387, %v1391
      %1393 = vrot.lane.b32.xlu0 %v1392, 64
      %v1394 = vpop.permute.xlu0 %1393
      %v1396 = vrot.slane %v1385, 1
      %v1397 = vrot.slane %v1387, 1
      %v1398 = vrot.slane %v1389, 2
      %v1399 = vor.u32 %v1397, %v1398
      %1400 = vrot.lane.b32.xlu0 %v1399, 64
      %v1401 = vpop.permute.xlu0 %1400
      %v1402 = vrot.slane %v1385, 2
      %v1403 = vrot.slane %v1387, 2
      %v1404 = vrot.slane %v1389, 3
      %v1405 = vor.u32 %v1403, %v1404
      %1406 = vrot.lane.b32.xlu0 %v1405, 64
      %v1407 = vpop.permute.xlu0 %1406
      %v1409 = vsel %vm771, %v1385, %v1394
      %v1413 = vsel %vm771, %v1396, %v1401
      %v1417 = vsel %vm771, %v1402, %v1407
      %s1419 = scalar_lea.vmem %s3, 384
      %v1420 = vld [vmem:[%s1419] sm:$0xf]
      %v1421 = vld [vmem:[%s1419 + $0x4] sm:$0xf]
      %v1422 = vld [vmem:[%s1419 + $0x8] sm:$0xf]
      %v1423 = vld [vmem:[%s1419 + $0xc] sm:$0xf]
      %v1424 = vld [vmem:[%s1419 + $0x10] sm:$0xf]
      %v1425 = vld [vmem:[%s1419 + $0x14] sm:$0xf]
      %v1426 = vld [vmem:[%s1419 + $0x18] sm:$0xf]
      %v1427 = vld [vmem:[%s1419 + $0x1c] sm:$0xf]
      %v1428 = vld [vmem:[%s1419 + $0x20] sm:$0xf]
      %v1429 = vld [vmem:[%s1419 + $0x24] sm:$0xf]
      %v1430 = vld [vmem:[%s1419 + $0x28] sm:$0xf]
      %v1431 = vld [vmem:[%s1419 + $0x2c] sm:$0xf]
      %v1432 = vld [vmem:[%s1419 + $0x30] sm:$0xf]
      %v1433 = vld [vmem:[%s1419 + $0x34] sm:$0xf]
      %v1434 = vld [vmem:[%s1419 + $0x38] sm:$0xf]
      %v1435 = vld [vmem:[%s1419 + $0x3c] sm:$0xf]
      %v1436 = vld [vmem:[%s1419 + $0x40] sm:$0xf]
      %v1437 = vld [vmem:[%s1419 + $0x44] sm:$0xf]
      %v1438 = vld [vmem:[%s1419 + $0x48] sm:$0xf]
      %v1439 = vld [vmem:[%s1419 + $0x4c] sm:$0xf]
      %v1440 = vld [vmem:[%s1419 + $0x50] sm:$0xf]
      %v1441 = vld [vmem:[%s1419 + $0x54] sm:$0xf]
      %v1442 = vld [vmem:[%s1419 + $0x58] sm:$0xf]
      %v1443 = vld [vmem:[%s1419 + $0x5c] sm:$0xf]
      %v1444 = vld [vmem:[%s1419 + $0x60] sm:$0xf]
      %v1445 = vld [vmem:[%s1419 + $0x64] sm:$0xf]
      %v1446 = vld [vmem:[%s1419 + $0x68] sm:$0xf]
      %v1447 = vld [vmem:[%s1419 + $0x6c] sm:$0xf]
      %v1448 = vld [vmem:[%s1419 + $0x70] sm:$0xf]
      %v1449 = vld [vmem:[%s1419 + $0x74] sm:$0xf]
      %v1450 = vld [vmem:[%s1419 + $0x78] sm:$0xf]
      %v1451 = vld [vmem:[%s1419 + $0x7c] sm:$0xf]
      %v1452 = vld [vmem:[%s1419 + $0x80] sm:$0xf]
      %v1453 = vld [vmem:[%s1419 + $0x84] sm:$0xf]
      %v1454 = vld [vmem:[%s1419 + $0x88] sm:$0xf]
      %v1455 = vld [vmem:[%s1419 + $0x8c] sm:$0xf]
      %v1456 = vld [vmem:[%s1419 + $0x90] sm:$0xf]
      %v1457 = vld [vmem:[%s1419 + $0x94] sm:$0xf]
      %v1458 = vld [vmem:[%s1419 + $0x98] sm:$0xf]
      %v1459 = vld [vmem:[%s1419 + $0x9c] sm:$0xf]
      %v1460 = vld [vmem:[%s1419 + $0xa0] sm:$0xf]
      %v1461 = vld [vmem:[%s1419 + $0xa4] sm:$0xf]
      %v1462 = vld [vmem:[%s1419 + $0xa8] sm:$0xf]
      %v1463 = vld [vmem:[%s1419 + $0xac] sm:$0xf]
      %v1464 = vld [vmem:[%s1419 + $0xb0] sm:$0xf]
      %v1465 = vld [vmem:[%s1419 + $0xb4] sm:$0xf]
      %v1466 = vld [vmem:[%s1419 + $0xb8] sm:$0xf]
      %v1467 = vld [vmem:[%s1419 + $0xbc] sm:$0xf]
      %s1468 = scalar_lea.vmem %s4, 2
      %v1469 = vld [vmem:[%s1468] sm:$0x1]
      %v1471 = vlaneseq
      %v1472 = vshrl.u32 %v1471, 7
      %v1473 = vsub.s32 0, %v1472
      %v1474 = vrot.slane %v1469, %v1473
      %v1524 = vunpack.c.l.b16 %v1420
      %v1525 = vunpack.c.l.b16 %v1421
      %v1526 = vunpack.c.l.b16 %v1422
      %v1527 = vunpack.c.l.b16 %v1423
      %v1528 = vunpack.c.l.b16 %v1424
      %v1529 = vunpack.c.l.b16 %v1425
      %v1530 = vunpack.c.l.b16 %v1426
      %v1531 = vunpack.c.l.b16 %v1427
      %v1532 = vunpack.c.l.b16 %v1428
      %v1533 = vunpack.c.l.b16 %v1429
      %v1534 = vunpack.c.l.b16 %v1430
      %v1535 = vunpack.c.l.b16 %v1431
      %v1536 = vunpack.c.l.b16 %v1432
      %v1537 = vunpack.c.l.b16 %v1433
      %v1538 = vunpack.c.l.b16 %v1434
      %v1539 = vunpack.c.l.b16 %v1435
      %v1540 = vunpack.c.l.b16 %v1436
      %v1541 = vunpack.c.l.b16 %v1437
      %v1542 = vunpack.c.l.b16 %v1438
      %v1543 = vunpack.c.l.b16 %v1439
      %v1544 = vunpack.c.l.b16 %v1440
      %v1545 = vunpack.c.l.b16 %v1441
      %v1546 = vunpack.c.l.b16 %v1442
      %v1547 = vunpack.c.l.b16 %v1443
      %v1548 = vunpack.c.l.b16 %v1444
      %v1549 = vunpack.c.l.b16 %v1445
      %v1550 = vunpack.c.l.b16 %v1446
      %v1551 = vunpack.c.l.b16 %v1447
      %v1552 = vunpack.c.l.b16 %v1448
      %v1553 = vunpack.c.l.b16 %v1449
      %v1554 = vunpack.c.l.b16 %v1450
      %v1555 = vunpack.c.l.b16 %v1451
      %v1556 = vunpack.c.l.b16 %v1452
      %v1557 = vunpack.c.l.b16 %v1453
      %v1558 = vunpack.c.l.b16 %v1454
      %v1559 = vunpack.c.l.b16 %v1455
      %v1560 = vunpack.c.l.b16 %v1456
      %v1561 = vunpack.c.l.b16 %v1457
      %v1562 = vunpack.c.l.b16 %v1458
      %v1563 = vunpack.c.l.b16 %v1459
      %v1564 = vunpack.c.l.b16 %v1460
      %v1565 = vunpack.c.l.b16 %v1461
      %v1566 = vunpack.c.l.b16 %v1462
      %v1567 = vunpack.c.l.b16 %v1463
      %v1568 = vunpack.c.l.b16 %v1464
      %v1569 = vunpack.c.l.b16 %v1465
      %v1570 = vunpack.c.l.b16 %v1466
      %v1571 = vunpack.c.l.b16 %v1467
      %v1572 = vpack.c.b16 %v1525, %v1524
      %v1573 = vpack.c.b16 %v1527, %v1526
      %v1574 = vpack.c.b16 %v1529, %v1528
      %v1575 = vpack.c.b16 %v1531, %v1530
      %v1576 = vpack.c.b16 %v1533, %v1532
      %v1577 = vpack.c.b16 %v1535, %v1534
      %v1578 = vpack.c.b16 %v1537, %v1536
      %v1579 = vpack.c.b16 %v1539, %v1538
      %v1580 = vpack.c.b16 %v1541, %v1540
      %v1581 = vpack.c.b16 %v1543, %v1542
      %v1582 = vpack.c.b16 %v1545, %v1544
      %v1583 = vpack.c.b16 %v1547, %v1546
      %v1584 = vpack.c.b16 %v1549, %v1548
      %v1585 = vpack.c.b16 %v1551, %v1550
      %v1586 = vpack.c.b16 %v1553, %v1552
      %v1587 = vpack.c.b16 %v1555, %v1554
      %v1588 = vpack.c.b16 %v1557, %v1556
      %v1589 = vpack.c.b16 %v1559, %v1558
      %v1590 = vpack.c.b16 %v1561, %v1560
      %v1591 = vpack.c.b16 %v1563, %v1562
      %v1592 = vpack.c.b16 %v1565, %v1564
      %v1593 = vpack.c.b16 %v1567, %v1566
      %v1594 = vpack.c.b16 %v1569, %v1568
      %v1595 = vpack.c.b16 %v1571, %v1570
      %1620 = vmatprep.subr.bf16.mxu0 0
      %1621 = vmatpush1.bf16.msra.mxu0 %v1572
      %1622 = vmatprep.subr.bf16.mxu0 0
      %1623 = vmatpush1.bf16.msra.mxu0 %v1573
      %1624 = vmatprep.subr.bf16.mxu0 0
      %1625 = vmatpush1.bf16.msra.mxu0 %v1574
      %1626 = vmatprep.subr.bf16.mxu0 0
      %1627 = vmatpush1.bf16.msra.mxu0 %v1575
      %1628 = vmatprep.subr.bf16.mxu0 0
      %1629 = vmatpush1.bf16.msra.mxu0 %v1576
      %1630 = vmatprep.subr.bf16.mxu0 0
      %1631 = vmatpush1.bf16.msra.mxu0 %v1577
      %1632 = vmatprep.subr.bf16.mxu0 0
      %1633 = vmatpush1.bf16.msra.mxu0 %v1578
      %1634 = vmatprep.subr.bf16.mxu0 0
      %1635 = vmatpush1.bf16.msra.mxu0 %v1579
      %1636 = vmatprep.subr.bf16.mxu0 0
      %1637 = vmatpush1.bf16.msra.mxu0 %v1580
      %1638 = vmatprep.subr.bf16.mxu0 0
      %1639 = vmatpush1.bf16.msra.mxu0 %v1581
      %1640 = vmatprep.subr.bf16.mxu0 0
      %1641 = vmatpush1.bf16.msra.mxu0 %v1582
      %1642 = vmatprep.subr.bf16.mxu0 0
      %1643 = vmatpush1.bf16.msra.mxu0 %v1583
      %1644 = vmatprep.subr.bf16.mxu0 0
      %1645 = vmatpush1.bf16.msra.mxu0 %v1584
      %1646 = vmatprep.subr.bf16.mxu0 0
      %1647 = vmatpush1.bf16.msra.mxu0 %v1585
      %1648 = vmatprep.subr.bf16.mxu0 0
      %1649 = vmatpush1.bf16.msra.mxu0 %v1586
      %1650 = vmatprep.subr.bf16.mxu0 0
      %1651 = vmatpush1.bf16.msra.mxu0 %v1587
      %1652 = vmatprep.mubr.bf16.mxu0 %v1413
      %1653 = vmatmul.mubr.bf16.gmra.mrb[0].mxu0 %v1409
      %v1654 = vpop.f32.mrb[0].mxu0
      %v1655 = vadd.f32 %v1474, %v1654
      %v1656 = vpop.f32.mrb[0].mxu0
      %v1657 = vpop.f32.mrb[0].mxu0
      %v1658 = vpop.f32.mrb[0].mxu0
      %1659 = vdwg.mxu0
      %1660 = vmatprep.subr.bf16.mxu0 0
      %1661 = vmatpush1.bf16.msra.mxu0 %v1588
      %1662 = vmatprep.subr.bf16.mxu0 0
      %1663 = vmatpush1.bf16.msra.mxu0 %v1589
      %1664 = vmatprep.subr.bf16.mxu0 0
      %1665 = vmatpush1.bf16.msra.mxu0 %v1590
      %1666 = vmatprep.subr.bf16.mxu0 0
      %1667 = vmatpush1.bf16.msra.mxu0 %v1591
      %1668 = vmatprep.subr.bf16.mxu0 0
      %1669 = vmatpush1.bf16.msra.mxu0 %v1592
      %1670 = vmatprep.subr.bf16.mxu0 0
      %1671 = vmatpush1.bf16.msra.mxu0 %v1593
      %1672 = vmatprep.subr.bf16.mxu0 0
      %1673 = vmatpush1.bf16.msra.mxu0 %v1594
      %1674 = vmatprep.subr.bf16.mxu0 0
      %1675 = vmatpush1.bf16.msra.mxu0 %v1595
      %1676 = vmatprep.subr.bf16.mxu0 0
      %1677 = vmatpush1.bf16.msra.mxu0 0
      %1678 = vmatprep.subr.bf16.mxu0 0
      %1679 = vmatpush1.bf16.msra.mxu0 0
      %1680 = vmatprep.subr.bf16.mxu0 0
      %1681 = vmatpush1.bf16.msra.mxu0 0
      %1682 = vmatprep.subr.bf16.mxu0 0
      %1683 = vmatpush1.bf16.msra.mxu0 0
      %1684 = vmatprep.subr.bf16.mxu0 0
      %1685 = vmatpush1.bf16.msra.mxu0 0
      %1686 = vmatprep.subr.bf16.mxu0 0
      %1687 = vmatpush1.bf16.msra.mxu0 0
      %1688 = vmatprep.subr.bf16.mxu0 0
      %1689 = vmatpush1.bf16.msra.mxu0 0
      %1690 = vmatprep.subr.bf16.mxu0 0
      %1691 = vmatpush1.bf16.msra.mxu0 0
      %1692 = vmatprep.mubr.bf16.mxu0 0
      %1693 = vmatmul.mubr.bf16.gmra.mrb[0].mxu0 %v1417
      %v1694 = vpop.f32.mrb[0].mxu0
      %v1695 = vadd.f32 %v1655, %v1694
      %v1696 = vpop.f32.mrb[0].mxu0
      %v1697 = vpop.f32.mrb[0].mxu0
      %v1698 = vpop.f32.mrb[0].mxu0
      %1699 = vdwg.mxu0
      %v1700 = vmax.f32 %v1695, 0.0
      %v1702 = vrot.slane %v1700, 1
      %v1704 = vmax.f32 %v1700, %v1702
      %v1705 = vld [vmem:[%s373] sm:$0xf]
      %v1706 = vld [vmem:[%s373 + $0x4] sm:$0xf]
      %v1707 = vld [vmem:[%s373 + $0x8] sm:$0xf]
      %v1708 = vld [vmem:[%s373 + $0xc] sm:$0xf]
      %v1709 = vld [vmem:[%s373 + $0x10] sm:$0xf]
      %v1710 = vld [vmem:[%s373 + $0x14] sm:$0xf]
      %v1711 = vld [vmem:[%s373 + $0x18] sm:$0xf]
      %v1712 = vld [vmem:[%s373 + $0x1c] sm:$0xf]
      %v1713 = vld [vmem:[%s373 + $0x20] sm:$0xf]
      %v1714 = vld [vmem:[%s373 + $0x24] sm:$0xf]
      %v1715 = vld [vmem:[%s373 + $0x28] sm:$0xf]
      %v1716 = vld [vmem:[%s373 + $0x2c] sm:$0xf]
      %v1717 = vld [vmem:[%s373 + $0x30] sm:$0xf]
      %v1718 = vld [vmem:[%s373 + $0x34] sm:$0xf]
      %v1719 = vld [vmem:[%s373 + $0x38] sm:$0xf]
      %v1720 = vld [vmem:[%s373 + $0x3c] sm:$0xf]
      %v1721 = vld [vmem:[%s373 + $0x40] sm:$0xf]
      %v1722 = vld [vmem:[%s373 + $0x44] sm:$0xf]
      %v1723 = vld [vmem:[%s373 + $0x48] sm:$0xf]
      %v1724 = vld [vmem:[%s373 + $0x4c] sm:$0xf]
      %v1725 = vld [vmem:[%s373 + $0x50] sm:$0xf]
      %v1726 = vld [vmem:[%s373 + $0x54] sm:$0xf]
      %v1727 = vld [vmem:[%s373 + $0x58] sm:$0xf]
      %v1728 = vld [vmem:[%s373 + $0x5c] sm:$0xf]
      %v1729 = vld [vmem:[%s373 + $0x60] sm:$0xf]
      %v1730 = vld [vmem:[%s373 + $0x64] sm:$0xf]
      %v1731 = vld [vmem:[%s373 + $0x68] sm:$0xf]
      %v1732 = vld [vmem:[%s373 + $0x6c] sm:$0xf]
      %v1733 = vld [vmem:[%s373 + $0x70] sm:$0xf]
      %v1734 = vld [vmem:[%s6] sm:$0xf]
      %v1735 = vld [vmem:[%s6 + $0x4] sm:$0xf]
      %v1736 = vld [vmem:[%s6 + $0x8] sm:$0xf]
      %v1737 = vld [vmem:[%s6 + $0xc] sm:$0xf]
      %v1738 = vld [vmem:[%s6 + $0x10] sm:$0xf]
      %v1739 = vld [vmem:[%s6 + $0x14] sm:$0xf]
      %v1740 = vld [vmem:[%s6 + $0x18] sm:$0xf]
      %v1741 = vld [vmem:[%s6 + $0x1c] sm:$0xf]
      %v1742 = vld [vmem:[%s7] sm:$0x1]
      %v1744 = vlaneseq
      %v1745 = vshrl.u32 %v1744, 7
      %v1746 = vsub.s32 0, %v1745
      %v1747 = vrot.slane %v1742, %v1746
      %v1778 = vunpack.c.l.b16 %v1705
      %v1779 = vunpack.c.l.b16 %v1706
      %v1780 = vunpack.c.l.b16 %v1707
      %v1781 = vunpack.c.l.b16 %v1708
      %v1782 = vunpack.c.l.b16 %v1709
      %v1783 = vunpack.c.l.b16 %v1710
      %v1784 = vunpack.c.l.b16 %v1711
      %v1785 = vunpack.c.l.b16 %v1712
      %v1786 = vunpack.c.l.b16 %v1713
      %v1787 = vunpack.c.l.b16 %v1714
      %v1788 = vunpack.c.l.b16 %v1715
      %v1789 = vunpack.c.l.b16 %v1716
      %v1790 = vunpack.c.l.b16 %v1717
      %v1791 = vunpack.c.l.b16 %v1718
      %v1792 = vunpack.c.l.b16 %v1719
      %v1793 = vunpack.c.l.b16 %v1720
      %v1794 = vunpack.c.l.b16 %v1721
      %v1795 = vunpack.c.l.b16 %v1722
      %v1796 = vunpack.c.l.b16 %v1723
      %v1797 = vunpack.c.l.b16 %v1724
      %v1798 = vunpack.c.l.b16 %v1725
      %v1799 = vunpack.c.l.b16 %v1726
      %v1800 = vunpack.c.l.b16 %v1727
      %v1801 = vunpack.c.l.b16 %v1728
      %v1802 = vunpack.c.l.b16 %v1729
      %v1803 = vunpack.c.l.b16 %v1730
      %v1804 = vunpack.c.l.b16 %v1731
      %v1805 = vunpack.c.l.b16 %v1732
      %v1806 = vunpack.c.l.b16 %v1733
      %v1807 = vpack.c.b16 %v1779, %v1778
      %v1808 = vpack.c.b16 %v1781, %v1780
      %v1809 = vpack.c.b16 %v1783, %v1782
      %v1810 = vpack.c.b16 %v1785, %v1784
      %v1811 = vpack.c.b16 %v1787, %v1786
      %v1812 = vpack.c.b16 %v1789, %v1788
      %v1813 = vpack.c.b16 %v1791, %v1790
      %v1814 = vpack.c.b16 %v1793, %v1792
      %v1815 = vpack.c.b16 %v1795, %v1794
      %v1816 = vpack.c.b16 %v1797, %v1796
      %v1817 = vpack.c.b16 %v1799, %v1798
      %v1818 = vpack.c.b16 %v1801, %v1800
      %v1819 = vpack.c.b16 %v1803, %v1802
      %v1820 = vpack.c.b16 %v1805, %v1804
      %v1821 = vpack.c.b16 %v1806, %v1806
      %v1830 = vunpack.c.l.b16 %v1734
      %v1831 = vunpack.c.l.b16 %v1735
      %v1832 = vunpack.c.l.b16 %v1736
      %v1833 = vunpack.c.l.b16 %v1737
      %v1834 = vunpack.c.l.b16 %v1738
      %v1835 = vunpack.c.l.b16 %v1739
      %v1836 = vunpack.c.l.b16 %v1740
      %v1837 = vunpack.c.l.b16 %v1741
      %v1838 = vpack.c.b16 %v1831, %v1830
      %v1839 = vpack.c.b16 %v1833, %v1832
      %v1840 = vpack.c.b16 %v1835, %v1834
      %v1841 = vpack.c.b16 %v1837, %v1836
      %v1847 = vsel %vm771, %v1807, 0
      %v1850 = vsel %vm771, %v1808, 0
      %v1853 = vsel %vm771, %v1809, 0
      %v1856 = vsel %vm771, %v1810, 0
      %v1859 = vsel %vm771, %v1811, 0
      %v1862 = vsel %vm771, %v1812, 0
      %v1865 = vsel %vm771, %v1813, 0
      %v1868 = vsel %vm771, %v1814, 0
      %v1871 = vsel %vm771, %v1815, 0
      %v1874 = vsel %vm771, %v1816, 0
      %v1877 = vsel %vm771, %v1817, 0
      %v1880 = vsel %vm771, %v1818, 0
      %v1883 = vsel %vm771, %v1819, 0
      %v1886 = vsel %vm771, %v1820, 0
      %v1889 = vsel %vm771, %v1821, 0
      %1891 = vmatprep.subr.bf16.mxu0 0
      %1892 = vmatpush1.bf16.msra.mxu0 %v1838
      %1893 = vmatprep.subr.bf16.mxu0 0
      %1894 = vmatpush1.bf16.msra.mxu0 %v1839
      %1895 = vmatprep.subr.bf16.mxu0 0
      %1896 = vmatpush1.bf16.msra.mxu0 %v1840
      %1897 = vmatprep.subr.bf16.mxu0 0
      %1898 = vmatpush1.bf16.msra.mxu0 %v1841
      %1899 = vmatprep.subr.bf16.mxu0 0
      %1900 = vmatpush1.bf16.msra.mxu0 0
      %1901 = vmatprep.subr.bf16.mxu0 0
      %1902 = vmatpush1.bf16.msra.mxu0 0
      %1903 = vmatprep.subr.bf16.mxu0 0
      %1904 = vmatpush1.bf16.msra.mxu0 0
      %1905 = vmatprep.subr.bf16.mxu0 0
      %1906 = vmatpush1.bf16.msra.mxu0 0
      %1907 = vmatprep.subr.bf16.mxu0 0
      %1908 = vmatpush1.bf16.msra.mxu0 0
      %1909 = vmatprep.subr.bf16.mxu0 0
      %1910 = vmatpush1.bf16.msra.mxu0 0
      %1911 = vmatprep.subr.bf16.mxu0 0
      %1912 = vmatpush1.bf16.msra.mxu0 0
      %1913 = vmatprep.subr.bf16.mxu0 0
      %1914 = vmatpush1.bf16.msra.mxu0 0
      %1915 = vmatprep.subr.bf16.mxu0 0
      %1916 = vmatpush1.bf16.msra.mxu0 0
      %1917 = vmatprep.subr.bf16.mxu0 0
      %1918 = vmatpush1.bf16.msra.mxu0 0
      %1919 = vmatprep.subr.bf16.mxu0 0
      %1920 = vmatpush1.bf16.msra.mxu0 0
      %1921 = vmatprep.subr.bf16.mxu0 0
      %1922 = vmatpush1.bf16.msra.mxu0 0
      %1923 = vmatprep.mubr.bf16.mxu0 0
      %1924 = vmatmul.mubr.bf16.gmra.mrb[0].mxu0 %v1847
      %v1925 = vpop.f32.mrb[0].mxu0
      %v1926 = vadd.f32 %v1747, %v1925
      %v1927 = vpop.f32.mrb[0].mxu0
      %v1928 = vpop.f32.mrb[0].mxu0
      %v1929 = vadd.f32 %v1747, %v1928
      %v1930 = vpop.f32.mrb[0].mxu0
      %1931 = vmatprep.mubr.bf16.mxu0 0
      %1932 = vmatmul.mubr.bf16.gmra.mrb[0].mxu0 %v1850
      %v1933 = vpop.f32.mrb[0].mxu0
      %v1934 = vadd.f32 %v1747, %v1933
      %v1935 = vpop.f32.mrb[0].mxu0
      %v1936 = vpop.f32.mrb[0].mxu0
      %v1937 = vadd.f32 %v1747, %v1936
      %v1938 = vpop.f32.mrb[0].mxu0
      %1939 = vmatprep.mubr.bf16.mxu0 0
      %1940 = vmatmul.mubr.bf16.gmra.mrb[0].mxu0 %v1853
      %v1941 = vpop.f32.mrb[0].mxu0
      %v1942 = vadd.f32 %v1747, %v1941
      %v1943 = vpop.f32.mrb[0].mxu0
      %v1944 = vpop.f32.mrb[0].mxu0
      %v1945 = vadd.f32 %v1747, %v1944
      %v1946 = vpop.f32.mrb[0].mxu0
      %1947 = vmatprep.mubr.bf16.mxu0 0
      %1948 = vmatmul.mubr.bf16.gmra.mrb[0].mxu0 %v1856
      %v1949 = vpop.f32.mrb[0].mxu0
      %v1950 = vadd.f32 %v1747, %v1949
      %v1951 = vpop.f32.mrb[0].mxu0
      %v1952 = vpop.f32.mrb[0].mxu0
      %v1953 = vadd.f32 %v1747, %v1952
      %v1954 = vpop.f32.mrb[0].mxu0
      %1955 = vmatprep.mubr.bf16.mxu0 0
      %1956 = vmatmul.mubr.bf16.gmra.mrb[0].mxu0 %v1859
      %v1957 = vpop.f32.mrb[0].mxu0
      %v1958 = vadd.f32 %v1747, %v1957
      %v1959 = vpop.f32.mrb[0].mxu0
      %v1960 = vpop.f32.mrb[0].mxu0
      %v1961 = vadd.f32 %v1747, %v1960
      %v1962 = vpop.f32.mrb[0].mxu0
      %1963 = vmatprep.mubr.bf16.mxu0 0
      %1964 = vmatmul.mubr.bf16.gmra.mrb[0].mxu0 %v1862
      %v1965 = vpop.f32.mrb[0].mxu0
      %v1966 = vadd.f32 %v1747, %v1965
      %v1967 = vpop.f32.mrb[0].mxu0
      %v1968 = vpop.f32.mrb[0].mxu0
      %v1969 = vadd.f32 %v1747, %v1968
      %v1970 = vpop.f32.mrb[0].mxu0
      %1971 = vmatprep.mubr.bf16.mxu0 0
      %1972 = vmatmul.mubr.bf16.gmra.mrb[0].mxu0 %v1865
      %v1973 = vpop.f32.mrb[0].mxu0
      %v1974 = vadd.f32 %v1747, %v1973
      %v1975 = vpop.f32.mrb[0].mxu0
      %v1976 = vpop.f32.mrb[0].mxu0
      %v1977 = vadd.f32 %v1747, %v1976
      %v1978 = vpop.f32.mrb[0].mxu0
      %1979 = vmatprep.mubr.bf16.mxu0 0
      %1980 = vmatmul.mubr.bf16.gmra.mrb[0].mxu0 %v1868
      %v1981 = vpop.f32.mrb[0].mxu0
      %v1982 = vadd.f32 %v1747, %v1981
      %v1983 = vpop.f32.mrb[0].mxu0
      %v1984 = vpop.f32.mrb[0].mxu0
      %v1985 = vadd.f32 %v1747, %v1984
      %v1986 = vpop.f32.mrb[0].mxu0
      %1987 = vmatprep.mubr.bf16.mxu0 0
      %1988 = vmatmul.mubr.bf16.gmra.mrb[0].mxu0 %v1871
      %v1989 = vpop.f32.mrb[0].mxu0
      %v1990 = vadd.f32 %v1747, %v1989
      %v1991 = vpop.f32.mrb[0].mxu0
      %v1992 = vpop.f32.mrb[0].mxu0
      %v1993 = vadd.f32 %v1747, %v1992
      %v1994 = vpop.f32.mrb[0].mxu0
      %1995 = vmatprep.mubr.bf16.mxu0 0
      %1996 = vmatmul.mubr.bf16.gmra.mrb[0].mxu0 %v1874
      %v1997 = vpop.f32.mrb[0].mxu0
      %v1998 = vadd.f32 %v1747, %v1997
      %v1999 = vpop.f32.mrb[0].mxu0
      %v2000 = vpop.f32.mrb[0].mxu0
      %v2001 = vadd.f32 %v1747, %v2000
      %v2002 = vpop.f32.mrb[0].mxu0
      %2003 = vmatprep.mubr.bf16.mxu0 0
      %2004 = vmatmul.mubr.bf16.gmra.mrb[0].mxu0 %v1877
      %v2005 = vpop.f32.mrb[0].mxu0
      %v2006 = vadd.f32 %v1747, %v2005
      %v2007 = vpop.f32.mrb[0].mxu0
      %v2008 = vpop.f32.mrb[0].mxu0
      %v2009 = vadd.f32 %v1747, %v2008
      %v2010 = vpop.f32.mrb[0].mxu0
      %2011 = vmatprep.mubr.bf16.mxu0 0
      %2012 = vmatmul.mubr.bf16.gmra.mrb[0].mxu0 %v1880
      %v2013 = vpop.f32.mrb[0].mxu0
      %v2014 = vadd.f32 %v1747, %v2013
      %v2015 = vpop.f32.mrb[0].mxu0
      %v2016 = vpop.f32.mrb[0].mxu0
      %v2017 = vadd.f32 %v1747, %v2016
      %v2018 = vpop.f32.mrb[0].mxu0
      %2019 = vmatprep.mubr.bf16.mxu0 0
      %2020 = vmatmul.mubr.bf16.gmra.mrb[0].mxu0 %v1883
      %v2021 = vpop.f32.mrb[0].mxu0
      %v2022 = vadd.f32 %v1747, %v2021
      %v2023 = vpop.f32.mrb[0].mxu0
      %v2024 = vpop.f32.mrb[0].mxu0
      %v2025 = vadd.f32 %v1747, %v2024
      %v2026 = vpop.f32.mrb[0].mxu0
      %2027 = vmatprep.mubr.bf16.mxu0 0
      %2028 = vmatmul.mubr.bf16.gmra.mrb[0].mxu0 %v1886
      %v2029 = vpop.f32.mrb[0].mxu0
      %v2030 = vadd.f32 %v1747, %v2029
      %v2031 = vpop.f32.mrb[0].mxu0
      %v2032 = vpop.f32.mrb[0].mxu0
      %v2033 = vadd.f32 %v1747, %v2032
      %v2034 = vpop.f32.mrb[0].mxu0
      %2035 = vmatprep.mubr.bf16.mxu0 0
      %2036 = vmatmul.mubr.bf16.gmra.mrb[0].mxu0 %v1889
      %v2037 = vpop.f32.mrb[0].mxu0
      %v2038 = vadd.f32 %v1747, %v2037
      %v2039 = vpop.f32.mrb[0].mxu0
      %v2040 = vpop.f32.mrb[0].mxu0
      %v2041 = vpop.f32.mrb[0].mxu0
      %2042 = vdwg.mxu0
      %v2043 = vmax.f32 %v1926, 0.0
      %v2044 = vmax.f32 %v1929, 0.0
      %v2045 = vmax.f32 %v1934, 0.0
      %v2046 = vmax.f32 %v1937, 0.0
      %v2047 = vmax.f32 %v1942, 0.0
      %v2048 = vmax.f32 %v1945, 0.0
      %v2049 = vmax.f32 %v1950, 0.0
      %v2050 = vmax.f32 %v1953, 0.0
      %v2051 = vmax.f32 %v1958, 0.0
      %v2052 = vmax.f32 %v1961, 0.0
      %v2053 = vmax.f32 %v1966, 0.0
      %v2054 = vmax.f32 %v1969, 0.0
      %v2055 = vmax.f32 %v1974, 0.0
      %v2056 = vmax.f32 %v1977, 0.0
      %v2057 = vmax.f32 %v1982, 0.0
      %v2058 = vmax.f32 %v1985, 0.0
      %v2059 = vmax.f32 %v1990, 0.0
      %v2060 = vmax.f32 %v1993, 0.0
      %v2061 = vmax.f32 %v1998, 0.0
      %v2062 = vmax.f32 %v2001, 0.0
      %v2063 = vmax.f32 %v2006, 0.0
      %v2064 = vmax.f32 %v2009, 0.0
      %v2065 = vmax.f32 %v2014, 0.0
      %v2066 = vmax.f32 %v2017, 0.0
      %v2067 = vmax.f32 %v2022, 0.0
      %v2068 = vmax.f32 %v2025, 0.0
      %v2069 = vmax.f32 %v2030, 0.0
      %v2070 = vmax.f32 %v2033, 0.0
      %v2071 = vmax.f32 %v2038, 0.0
      %v2077 = vrot.slane %v2046, 5
      %v2078 = vrot.slane %v2047, 5
      %v2079 = vsel %vm677, %v2077, %v2078
      %v2080 = vrot.slane %v2048, 5
      %v2081 = vsel %vm677, %v2078, %v2080
      %v2082 = vrot.slane %v2049, 5
      %v2083 = vsel %vm677, %v2080, %v2082
      %v2084 = vrot.slane %v2050, 5
      %v2085 = vsel %vm677, %v2082, %v2084
      %v2090 = vmax.f32 %v2043, %v2079
      %v2091 = vmax.f32 %v2044, %v2081
      %v2092 = vmax.f32 %v2045, %v2083
      %v2093 = vmax.f32 %v2046, %v2085
      %v2097 = vrot.slane %v2050, 2
      %v2098 = vrot.slane %v2051, 2
      %v2099 = vsel %vm693, %v2097, %v2098
      %v2100 = vrot.slane %v2052, 2
      %v2101 = vsel %vm693, %v2098, %v2100
      %v2102 = vrot.slane %v2053, 2
      %v2103 = vsel %vm693, %v2100, %v2102
      %v2108 = vmax.f32 %v2090, %v2099
      %v2109 = vmax.f32 %v2091, %v2101
      %v2110 = vmax.f32 %v2092, %v2103
      %v2111 = vmax.f32 %v2093, %v2102
      %v2116 = vrot.slane %v2053, 7
      %v2117 = vrot.slane %v2054, 7
      %v2118 = vsel %vm708, %v2116, %v2117
      %v2119 = vrot.slane %v2055, 7
      %v2120 = vsel %vm708, %v2117, %v2119
      %v2121 = vrot.slane %v2056, 7
      %v2122 = vsel %vm708, %v2119, %v2121
      %v2123 = vrot.slane %v2057, 7
      %v2124 = vsel %vm708, %v2121, %v2123
      %v2129 = vmax.f32 %v2108, %v2118
      %v2130 = vmax.f32 %v2109, %v2120
      %v2131 = vmax.f32 %v2110, %v2122
      %v2132 = vmax.f32 %v2111, %v2124
      %vm2137 = vcmask 1043456
      %v2138 = vrot.slane %v2057, 4
      %v2139 = vrot.slane %v2058, 4
      %v2140 = vsel %vm2137, %v2138, %v2139
      %v2141 = vrot.slane %v2059, 4
      %v2142 = vsel %vm2137, %v2139, %v2141
      %v2143 = vrot.slane %v2060, 4
      %v2144 = vsel %vm2137, %v2141, %v2143
      %v2145 = vrot.slane %v2061, 4
      %v2146 = vsel %vm2137, %v2143, %v2145
      %v2151 = vmax.f32 %v2129, %v2140
      %v2152 = vmax.f32 %v2130, %v2142
      %v2153 = vmax.f32 %v2131, %v2144
      %v2154 = vmax.f32 %v2132, %v2146
      %vm2158 = vcmask 1046528
      %v2159 = vrot.slane %v2061, 1
      %v2160 = vrot.slane %v2062, 1
      %v2161 = vsel %vm2158, %v2159, %v2160
      %v2162 = vrot.slane %v2063, 1
      %v2163 = vsel %vm2158, %v2160, %v2162
      %v2164 = vrot.slane %v2064, 1
      %v2165 = vsel %vm2158, %v2162, %v2164
      %v2170 = vmax.f32 %v2151, %v2161
      %v2171 = vmax.f32 %v2152, %v2163
      %v2172 = vmax.f32 %v2153, %v2165
      %v2173 = vmax.f32 %v2154, %v2164
      %vm2178 = vcmask 1041408
      %v2179 = vrot.slane %v2064, 6
      %v2180 = vrot.slane %v2065, 6
      %v2181 = vsel %vm2178, %v2179, %v2180
      %v2182 = vrot.slane %v2066, 6
      %v2183 = vsel %vm2178, %v2180, %v2182
      %v2184 = vrot.slane %v2067, 6
      %v2185 = vsel %vm2178, %v2182, %v2184
      %v2186 = vrot.slane %v2068, 6
      %v2187 = vsel %vm2178, %v2184, %v2186
      %v2192 = vmax.f32 %v2170, %v2181
      %v2193 = vmax.f32 %v2171, %v2183
      %v2194 = vmax.f32 %v2172, %v2185
      %v2195 = vmax.f32 %v2173, %v2187
      %vm2199 = vcmask 1044480
      %v2200 = vrot.slane %v2068, 3
      %v2201 = vrot.slane %v2069, 3
      %v2202 = vsel %vm2199, %v2200, %v2201
      %v2203 = vrot.slane %v2070, 3
      %v2204 = vsel %vm2199, %v2201, %v2203
      %v2205 = vrot.slane %v2071, 3
      %v2206 = vsel %vm2199, %v2203, %v2205
      %v2211 = vmax.f32 %v2192, %v2202
      %v2212 = vmax.f32 %v2193, %v2204
      %v2213 = vmax.f32 %v2194, %v2206
      %v2214 = vmax.f32 %v2195, %v2205
      %v2215 = vpack.c.bf16 %v2212, %v2211
      %v2216 = vpack.c.bf16 %v2214, %v2213
      %v2218 = vshrl.u32 %v2215, 16
      %v2220 = vshll.u32 %v2215, 16
      %v2222 = vrot.slane %v2220, 1
      %v2223 = vor.u32 %v2218, %v2222
      %v2225 = vshll.u32 %v2216, 16
      %v2227 = vrot.slane %v2225, 1
      %v2228 = vsel %vm724, %v2223, %v2227
      %v2229 = vshrl.u32 %v2216, 16
      %v2231 = vor.u32 %v2229, %v2227
      %2232 = vrot.lane.b32.xlu0 %v2228, 64
      %v2233 = vpop.permute.xlu0 %2232
      %2234 = vrot.lane.b32.xlu0 %v2231, 64
      %v2235 = vpop.permute.xlu0 %2234
      %v2238 = vrot.slane %v2215, 1
      %v2239 = vrot.slane %v2216, 1
      %v2240 = vsel %vm741, %v2238, %v2239
      %v2241 = vrot.slane %v2218, 1
      %v2242 = vrot.slane %v2220, 2
      %v2243 = vor.u32 %v2241, %v2242
      %v2244 = vrot.slane %v2229, 1
      %v2245 = vrot.slane %v2225, 2
      %v2246 = vor.u32 %v2244, %v2245
      %v2247 = vsel %vm745, %v2243, %v2246
      %2248 = vrot.lane.b32.xlu0 %v2247, 64
      %v2249 = vpop.permute.xlu0 %2248
      %2250 = vrot.lane.b32.xlu0 %v2246, 64
      %v2251 = vpop.permute.xlu0 %2250
      %v2252 = vrot.slane %v2215, 2
      %v2253 = vrot.slane %v2216, 2
      %v2254 = vsel %vm757, %v2252, %v2253
      %v2255 = vrot.slane %v2218, 2
      %v2256 = vrot.slane %v2220, 3
      %v2257 = vor.u32 %v2255, %v2256
      %v2258 = vrot.slane %v2229, 2
      %v2259 = vrot.slane %v2225, 3
      %v2260 = vor.u32 %v2258, %v2259
      %v2261 = vsel %vm761, %v2257, %v2260
      %2262 = vrot.lane.b32.xlu0 %v2261, 64
      %v2263 = vpop.permute.xlu0 %2262
      %2264 = vrot.lane.b32.xlu0 %v2260, 64
      %v2265 = vpop.permute.xlu0 %2264
      %vm2266 = vcmask 1044480
      %v2267 = vrot.slane %v2215, 3
      %v2268 = vrot.slane %v2216, 3
      %v2269 = vsel %vm2266, %v2267, %v2268
      %vm2270 = vsmask.f32 4352
      %v2271 = vrot.slane %v2218, 3
      %v2272 = vrot.slane %v2220, 4
      %v2273 = vor.u32 %v2271, %v2272
      %v2274 = vrot.slane %v2229, 3
      %v2275 = vrot.slane %v2225, 4
      %v2276 = vor.u32 %v2274, %v2275
      %v2277 = vsel %vm2270, %v2273, %v2276
      %2278 = vrot.lane.b32.xlu0 %v2277, 64
      %v2279 = vpop.permute.xlu0 %2278
      %2280 = vrot.lane.b32.xlu0 %v2276, 64
      %v2281 = vpop.permute.xlu0 %2280
      %v2283 = vsel %vm771, %v2215, %v2233
      %v2286 = vsel %vm771, %v2216, %v2235
      %v2290 = vsel %vm771, %v2240, %v2249
      %v2294 = vsel %vm771, %v2239, %v2251
      %v2298 = vsel %vm771, %v2254, %v2263
      %v2302 = vsel %vm771, %v2253, %v2265
      %v2306 = vsel %vm771, %v2269, %v2279
      %v2310 = vsel %vm771, %v2268, %v2281
      %v2312 = vld [vmem:[%s8] sm:$0xf]
      %v2313 = vld [vmem:[%s8 + $0x4] sm:$0xf]
      %v2314 = vld [vmem:[%s8 + $0x8] sm:$0xf]
      %v2315 = vld [vmem:[%s8 + $0xc] sm:$0xf]
      %v2316 = vld [vmem:[%s8 + $0x10] sm:$0xf]
      %v2317 = vld [vmem:[%s8 + $0x14] sm:$0xf]
      %v2318 = vld [vmem:[%s8 + $0x18] sm:$0xf]
      %v2319 = vld [vmem:[%s8 + $0x1c] sm:$0xf]
      %v2320 = vld [vmem:[%s8 + $0x20] sm:$0xf]
      %v2321 = vld [vmem:[%s8 + $0x24] sm:$0xf]
      %v2322 = vld [vmem:[%s8 + $0x28] sm:$0xf]
      %v2323 = vld [vmem:[%s8 + $0x2c] sm:$0xf]
      %v2324 = vld [vmem:[%s8 + $0x30] sm:$0xf]
      %v2325 = vld [vmem:[%s8 + $0x34] sm:$0xf]
      %v2326 = vld [vmem:[%s8 + $0x38] sm:$0xf]
      %v2327 = vld [vmem:[%s8 + $0x3c] sm:$0xf]
      %v2328 = vld [vmem:[%s8 + $0x40] sm:$0xf]
      %v2329 = vld [vmem:[%s8 + $0x44] sm:$0xf]
      %v2330 = vld [vmem:[%s8 + $0x48] sm:$0xf]
      %v2331 = vld [vmem:[%s8 + $0x4c] sm:$0xf]
      %v2332 = vld [vmem:[%s8 + $0x50] sm:$0xf]
      %v2333 = vld [vmem:[%s8 + $0x54] sm:$0xf]
      %v2334 = vld [vmem:[%s8 + $0x58] sm:$0xf]
      %v2335 = vld [vmem:[%s8 + $0x5c] sm:$0xf]
      %v2336 = vld [vmem:[%s8 + $0x60] sm:$0xf]
      %v2337 = vld [vmem:[%s8 + $0x64] sm:$0xf]
      %v2338 = vld [vmem:[%s8 + $0x68] sm:$0xf]
      %v2339 = vld [vmem:[%s8 + $0x6c] sm:$0xf]
      %v2340 = vld [vmem:[%s8 + $0x70] sm:$0xf]
      %v2341 = vld [vmem:[%s8 + $0x74] sm:$0xf]
      %v2342 = vld [vmem:[%s8 + $0x78] sm:$0xf]
      %v2343 = vld [vmem:[%s8 + $0x7c] sm:$0xf]
      %v2344 = vld [vmem:[%s8 + $0x80] sm:$0xf]
      %v2345 = vld [vmem:[%s8 + $0x84] sm:$0xf]
      %v2346 = vld [vmem:[%s8 + $0x88] sm:$0xf]
      %v2347 = vld [vmem:[%s8 + $0x8c] sm:$0xf]
      %v2348 = vld [vmem:[%s8 + $0x90] sm:$0xf]
      %v2349 = vld [vmem:[%s8 + $0x94] sm:$0xf]
      %v2350 = vld [vmem:[%s8 + $0x98] sm:$0xf]
      %v2351 = vld [vmem:[%s8 + $0x9c] sm:$0xf]
      %v2352 = vld [vmem:[%s8 + $0xa0] sm:$0xf]
      %v2353 = vld [vmem:[%s8 + $0xa4] sm:$0xf]
      %v2354 = vld [vmem:[%s8 + $0xa8] sm:$0xf]
      %v2355 = vld [vmem:[%s8 + $0xac] sm:$0xf]
      %v2356 = vld [vmem:[%s8 + $0xb0] sm:$0xf]
      %v2357 = vld [vmem:[%s8 + $0xb4] sm:$0xf]
      %v2358 = vld [vmem:[%s8 + $0xb8] sm:$0xf]
      %v2359 = vld [vmem:[%s8 + $0xbc] sm:$0xf]
      %v2360 = vld [vmem:[%s8 + $0xc0] sm:$0xf]
      %v2361 = vld [vmem:[%s8 + $0xc4] sm:$0xf]
      %v2362 = vld [vmem:[%s8 + $0xc8] sm:$0xf]
      %v2363 = vld [vmem:[%s8 + $0xcc] sm:$0xf]
      %v2364 = vld [vmem:[%s8 + $0xd0] sm:$0xf]
      %v2365 = vld [vmem:[%s8 + $0xd4] sm:$0xf]
      %v2366 = vld [vmem:[%s8 + $0xd8] sm:$0xf]
      %v2367 = vld [vmem:[%s8 + $0xdc] sm:$0xf]
      %v2368 = vld [vmem:[%s8 + $0xe0] sm:$0xf]
      %v2369 = vld [vmem:[%s8 + $0xe4] sm:$0xf]
      %v2370 = vld [vmem:[%s8 + $0xe8] sm:$0xf]
      %v2371 = vld [vmem:[%s8 + $0xec] sm:$0xf]
      %v2372 = vld [vmem:[%s8 + $0xf0] sm:$0xf]
      %v2373 = vld [vmem:[%s8 + $0xf4] sm:$0xf]
      %v2374 = vld [vmem:[%s8 + $0xf8] sm:$0xf]
      %v2375 = vld [vmem:[%s8 + $0xfc] sm:$0xf]
      %v2376 = vld [vmem:[%s9] sm:$0x1]
      %v2378 = vlaneseq
      %v2379 = vshrl.u32 %v2378, 7
      %v2380 = vsub.s32 0, %v2379
      %v2381 = vrot.slane %v2376, %v2380
      %v2447 = vunpack.c.l.b16 %v2312
      %v2448 = vunpack.c.l.b16 %v2313
      %v2449 = vunpack.c.l.b16 %v2314
      %v2450 = vunpack.c.l.b16 %v2315
      %v2451 = vunpack.c.l.b16 %v2316
      %v2452 = vunpack.c.l.b16 %v2317
      %v2453 = vunpack.c.l.b16 %v2318
      %v2454 = vunpack.c.l.b16 %v2319
      %v2455 = vunpack.c.l.b16 %v2320
      %v2456 = vunpack.c.l.b16 %v2321
      %v2457 = vunpack.c.l.b16 %v2322
      %v2458 = vunpack.c.l.b16 %v2323
      %v2459 = vunpack.c.l.b16 %v2324
      %v2460 = vunpack.c.l.b16 %v2325
      %v2461 = vunpack.c.l.b16 %v2326
      %v2462 = vunpack.c.l.b16 %v2327
      %v2463 = vunpack.c.l.b16 %v2328
      %v2464 = vunpack.c.l.b16 %v2329
      %v2465 = vunpack.c.l.b16 %v2330
      %v2466 = vunpack.c.l.b16 %v2331
      %v2467 = vunpack.c.l.b16 %v2332
      %v2468 = vunpack.c.l.b16 %v2333
      %v2469 = vunpack.c.l.b16 %v2334
      %v2470 = vunpack.c.l.b16 %v2335
      %v2471 = vunpack.c.l.b16 %v2336
      %v2472 = vunpack.c.l.b16 %v2337
      %v2473 = vunpack.c.l.b16 %v2338
      %v2474 = vunpack.c.l.b16 %v2339
      %v2475 = vunpack.c.l.b16 %v2340
      %v2476 = vunpack.c.l.b16 %v2341
      %v2477 = vunpack.c.l.b16 %v2342
      %v2478 = vunpack.c.l.b16 %v2343
      %v2479 = vunpack.c.l.b16 %v2344
      %v2480 = vunpack.c.l.b16 %v2345
      %v2481 = vunpack.c.l.b16 %v2346
      %v2482 = vunpack.c.l.b16 %v2347
      %v2483 = vunpack.c.l.b16 %v2348
      %v2484 = vunpack.c.l.b16 %v2349
      %v2485 = vunpack.c.l.b16 %v2350
      %v2486 = vunpack.c.l.b16 %v2351
      %v2487 = vunpack.c.l.b16 %v2352
      %v2488 = vunpack.c.l.b16 %v2353
      %v2489 = vunpack.c.l.b16 %v2354
      %v2490 = vunpack.c.l.b16 %v2355
      %v2491 = vunpack.c.l.b16 %v2356
      %v2492 = vunpack.c.l.b16 %v2357
      %v2493 = vunpack.c.l.b16 %v2358
      %v2494 = vunpack.c.l.b16 %v2359
      %v2495 = vunpack.c.l.b16 %v2360
      %v2496 = vunpack.c.l.b16 %v2361
      %v2497 = vunpack.c.l.b16 %v2362
      %v2498 = vunpack.c.l.b16 %v2363
      %v2499 = vunpack.c.l.b16 %v2364
      %v2500 = vunpack.c.l.b16 %v2365
      %v2501 = vunpack.c.l.b16 %v2366
      %v2502 = vunpack.c.l.b16 %v2367
      %v2503 = vunpack.c.l.b16 %v2368
      %v2504 = vunpack.c.l.b16 %v2369
      %v2505 = vunpack.c.l.b16 %v2370
      %v2506 = vunpack.c.l.b16 %v2371
      %v2507 = vunpack.c.l.b16 %v2372
      %v2508 = vunpack.c.l.b16 %v2373
      %v2509 = vunpack.c.l.b16 %v2374
      %v2510 = vunpack.c.l.b16 %v2375
      %v2511 = vpack.c.b16 %v2448, %v2447
      %v2512 = vpack.c.b16 %v2450, %v2449
      %v2513 = vpack.c.b16 %v2452, %v2451
      %v2514 = vpack.c.b16 %v2454, %v2453
      %v2515 = vpack.c.b16 %v2456, %v2455
      %v2516 = vpack.c.b16 %v2458, %v2457
      %v2517 = vpack.c.b16 %v2460, %v2459
      %v2518 = vpack.c.b16 %v2462, %v2461
      %v2519 = vpack.c.b16 %v2464, %v2463
      %v2520 = vpack.c.b16 %v2466, %v2465
      %v2521 = vpack.c.b16 %v2468, %v2467
      %v2522 = vpack.c.b16 %v2470, %v2469
      %v2523 = vpack.c.b16 %v2472, %v2471
      %v2524 = vpack.c.b16 %v2474, %v2473
      %v2525 = vpack.c.b16 %v2476, %v2475
      %v2526 = vpack.c.b16 %v2478, %v2477
      %v2527 = vpack.c.b16 %v2480, %v2479
      %v2528 = vpack.c.b16 %v2482, %v2481
      %v2529 = vpack.c.b16 %v2484, %v2483
      %v2530 = vpack.c.b16 %v2486, %v2485
      %v2531 = vpack.c.b16 %v2488, %v2487
      %v2532 = vpack.c.b16 %v2490, %v2489
      %v2533 = vpack.c.b16 %v2492, %v2491
      %v2534 = vpack.c.b16 %v2494, %v2493
      %v2535 = vpack.c.b16 %v2496, %v2495
      %v2536 = vpack.c.b16 %v2498, %v2497
      %v2537 = vpack.c.b16 %v2500, %v2499
      %v2538 = vpack.c.b16 %v2502, %v2501
      %v2539 = vpack.c.b16 %v2504, %v2503
      %v2540 = vpack.c.b16 %v2506, %v2505
      %v2541 = vpack.c.b16 %v2508, %v2507
      %v2542 = vpack.c.b16 %v2510, %v2509
      %2575 = vmatprep.subr.bf16.mxu0 0
      %2576 = vmatpush1.bf16.msra.mxu0 %v2511
      %2577 = vmatprep.subr.bf16.mxu0 0
      %2578 = vmatpush1.bf16.msra.mxu0 %v2512
      %2579 = vmatprep.subr.bf16.mxu0 0
      %2580 = vmatpush1.bf16.msra.mxu0 %v2513
      %2581 = vmatprep.subr.bf16.mxu0 0
      %2582 = vmatpush1.bf16.msra.mxu0 %v2514
      %2583 = vmatprep.subr.bf16.mxu0 0
      %2584 = vmatpush1.bf16.msra.mxu0 %v2515
      %2585 = vmatprep.subr.bf16.mxu0 0
      %2586 = vmatpush1.bf16.msra.mxu0 %v2516
      %2587 = vmatprep.subr.bf16.mxu0 0
      %2588 = vmatpush1.bf16.msra.mxu0 %v2517
      %2589 = vmatprep.subr.bf16.mxu0 0
      %2590 = vmatpush1.bf16.msra.mxu0 %v2518
      %2591 = vmatprep.subr.bf16.mxu0 0
      %2592 = vmatpush1.bf16.msra.mxu0 %v2519
      %2593 = vmatprep.subr.bf16.mxu0 0
      %2594 = vmatpush1.bf16.msra.mxu0 %v2520
      %2595 = vmatprep.subr.bf16.mxu0 0
      %2596 = vmatpush1.bf16.msra.mxu0 %v2521
      %2597 = vmatprep.subr.bf16.mxu0 0
      %2598 = vmatpush1.bf16.msra.mxu0 %v2522
      %2599 = vmatprep.subr.bf16.mxu0 0
      %2600 = vmatpush1.bf16.msra.mxu0 %v2523
      %2601 = vmatprep.subr.bf16.mxu0 0
      %2602 = vmatpush1.bf16.msra.mxu0 %v2524
      %2603 = vmatprep.subr.bf16.mxu0 0
      %2604 = vmatpush1.bf16.msra.mxu0 %v2525
      %2605 = vmatprep.subr.bf16.mxu0 0
      %2606 = vmatpush1.bf16.msra.mxu0 %v2526
      %2607 = vmatprep.mubr.bf16.mxu0 %v2290
      %2608 = vmatmul.mubr.bf16.gmra.mrb[0].mxu0 %v2283
      %v2609 = vpop.f32.mrb[0].mxu0
      %v2610 = vadd.f32 %v2381, %v2609
      %v2611 = vpop.f32.mrb[0].mxu0
      %v2612 = vpop.f32.mrb[0].mxu0
      %v2613 = vadd.f32 %v2381, %v2612
      %v2614 = vpop.f32.mrb[0].mxu0
      %2615 = vmatprep.mubr.bf16.mxu0 %v2294
      %2616 = vmatmul.mubr.bf16.gmra.mrb[0].mxu0 %v2286
      %v2617 = vpop.f32.mrb[0].mxu0
      %v2618 = vadd.f32 %v2381, %v2617
      %v2619 = vpop.f32.mrb[0].mxu0
      %v2620 = vpop.f32.mrb[0].mxu0
      %v2621 = vpop.f32.mrb[0].mxu0
      %2622 = vdwg.mxu0
      %2623 = vmatprep.subr.bf16.mxu0 0
      %2624 = vmatpush1.bf16.msra.mxu0 %v2527
      %2625 = vmatprep.subr.bf16.mxu0 0
      %2626 = vmatpush1.bf16.msra.mxu0 %v2528
      %2627 = vmatprep.subr.bf16.mxu0 0
      %2628 = vmatpush1.bf16.msra.mxu0 %v2529
      %2629 = vmatprep.subr.bf16.mxu0 0
      %2630 = vmatpush1.bf16.msra.mxu0 %v2530
      %2631 = vmatprep.subr.bf16.mxu0 0
      %2632 = vmatpush1.bf16.msra.mxu0 %v2531
      %2633 = vmatprep.subr.bf16.mxu0 0
      %2634 = vmatpush1.bf16.msra.mxu0 %v2532
      %2635 = vmatprep.subr.bf16.mxu0 0
      %2636 = vmatpush1.bf16.msra.mxu0 %v2533
      %2637 = vmatprep.subr.bf16.mxu0 0
      %2638 = vmatpush1.bf16.msra.mxu0 %v2534
      %2639 = vmatprep.subr.bf16.mxu0 0
      %2640 = vmatpush1.bf16.msra.mxu0 %v2535
      %2641 = vmatprep.subr.bf16.mxu0 0
      %2642 = vmatpush1.bf16.msra.mxu0 %v2536
      %2643 = vmatprep.subr.bf16.mxu0 0
      %2644 = vmatpush1.bf16.msra.mxu0 %v2537
      %2645 = vmatprep.subr.bf16.mxu0 0
      %2646 = vmatpush1.bf16.msra.mxu0 %v2538
      %2647 = vmatprep.subr.bf16.mxu0 0
      %2648 = vmatpush1.bf16.msra.mxu0 %v2539
      %2649 = vmatprep.subr.bf16.mxu0 0
      %2650 = vmatpush1.bf16.msra.mxu0 %v2540
      %2651 = vmatprep.subr.bf16.mxu0 0
      %2652 = vmatpush1.bf16.msra.mxu0 %v2541
      %2653 = vmatprep.subr.bf16.mxu0 0
      %2654 = vmatpush1.bf16.msra.mxu0 %v2542
      %2655 = vmatprep.mubr.bf16.mxu0 %v2306
      %2656 = vmatmul.mubr.bf16.gmra.mrb[0].mxu0 %v2298
      %v2657 = vpop.f32.mrb[0].mxu0
      %v2658 = vadd.f32 %v2610, %v2657
      %v2659 = vpop.f32.mrb[0].mxu0
      %v2660 = vpop.f32.mrb[0].mxu0
      %v2661 = vadd.f32 %v2613, %v2660
      %v2662 = vpop.f32.mrb[0].mxu0
      %2663 = vmatprep.mubr.bf16.mxu0 %v2310
      %2664 = vmatmul.mubr.bf16.gmra.mrb[0].mxu0 %v2302
      %v2665 = vpop.f32.mrb[0].mxu0
      %v2666 = vadd.f32 %v2618, %v2665
      %v2667 = vpop.f32.mrb[0].mxu0
      %v2668 = vpop.f32.mrb[0].mxu0
      %v2669 = vpop.f32.mrb[0].mxu0
      %2670 = vdwg.mxu0
      %v2671 = vmax.f32 %v2658, 0.0
      %v2672 = vmax.f32 %v2661, 0.0
      %v2673 = vmax.f32 %v2666, 0.0
      %v2674 = vpack.c.bf16 %v2672, %v2671
      %v2675 = vpack.c.bf16 %v2673, %v2673
      %v2677 = vshrl.u32 %v2674, 16
      %v2679 = vshll.u32 %v2674, 16
      %v2681 = vrot.slane %v2679, 1
      %v2682 = vor.u32 %v2677, %v2681
      %2683 = vrot.lane.b32.xlu0 %v2682, 64
      %v2684 = vpop.permute.xlu0 %2683
      %v2687 = vrot.slane %v2674, 1
      %v2688 = vrot.slane %v2675, 1
      %v2689 = vsel %vm741, %v2687, %v2688
      %v2690 = vrot.slane %v2677, 1
      %v2691 = vrot.slane %v2679, 2
      %v2692 = vor.u32 %v2690, %v2691
      %v2694 = vshrl.u32 %v2675, 16
      %v2696 = vrot.slane %v2694, 1
      %v2697 = vshll.u32 %v2675, 16
      %v2699 = vrot.slane %v2697, 2
      %v2700 = vor.u32 %v2696, %v2699
      %v2701 = vsel %vm745, %v2692, %v2700
      %2702 = vrot.lane.b32.xlu0 %v2701, 64
      %v2703 = vpop.permute.xlu0 %2702
      %v2704 = vrot.slane %v2674, 2
      %v2705 = vrot.slane %v2675, 2
      %v2706 = vsel %vm757, %v2704, %v2705
      %v2707 = vrot.slane %v2677, 2
      %v2708 = vrot.slane %v2679, 3
      %v2709 = vor.u32 %v2707, %v2708
      %v2710 = vrot.slane %v2694, 2
      %v2711 = vrot.slane %v2697, 3
      %v2712 = vor.u32 %v2710, %v2711
      %v2713 = vsel %vm761, %v2709, %v2712
      %2714 = vrot.lane.b32.xlu0 %v2713, 64
      %v2715 = vpop.permute.xlu0 %2714
      %v2716 = vrot.slane %v2674, 3
      %v2717 = vrot.slane %v2675, 3
      %v2718 = vsel %vm2266, %v2716, %v2717
      %v2719 = vrot.slane %v2677, 3
      %v2720 = vrot.slane %v2679, 4
      %v2721 = vor.u32 %v2719, %v2720
      %v2722 = vrot.slane %v2694, 3
      %v2723 = vrot.slane %v2697, 4
      %v2724 = vor.u32 %v2722, %v2723
      %v2725 = vsel %vm2270, %v2721, %v2724
      %2726 = vrot.lane.b32.xlu0 %v2725, 64
      %v2727 = vpop.permute.xlu0 %2726
      %v2729 = vsel %vm771, %v2674, %v2684
      %v2733 = vsel %vm771, %v2689, %v2703
      %v2737 = vsel %vm771, %v2706, %v2715
      %v2741 = vsel %vm771, %v2718, %v2727
      %s2743 = scalar_lea.vmem %s8, 256
      %v2744 = vld [vmem:[%s2743] sm:$0xf]
      %v2745 = vld [vmem:[%s2743 + $0x4] sm:$0xf]
      %v2746 = vld [vmem:[%s2743 + $0x8] sm:$0xf]
      %v2747 = vld [vmem:[%s2743 + $0xc] sm:$0xf]
      %v2748 = vld [vmem:[%s2743 + $0x10] sm:$0xf]
      %v2749 = vld [vmem:[%s2743 + $0x14] sm:$0xf]
      %v2750 = vld [vmem:[%s2743 + $0x18] sm:$0xf]
      %v2751 = vld [vmem:[%s2743 + $0x1c] sm:$0xf]
      %v2752 = vld [vmem:[%s2743 + $0x20] sm:$0xf]
      %v2753 = vld [vmem:[%s2743 + $0x24] sm:$0xf]
      %v2754 = vld [vmem:[%s2743 + $0x28] sm:$0xf]
      %v2755 = vld [vmem:[%s2743 + $0x2c] sm:$0xf]
      %v2756 = vld [vmem:[%s2743 + $0x30] sm:$0xf]
      %v2757 = vld [vmem:[%s2743 + $0x34] sm:$0xf]
      %v2758 = vld [vmem:[%s2743 + $0x38] sm:$0xf]
      %v2759 = vld [vmem:[%s2743 + $0x3c] sm:$0xf]
      %v2760 = vld [vmem:[%s2743 + $0x40] sm:$0xf]
      %v2761 = vld [vmem:[%s2743 + $0x44] sm:$0xf]
      %v2762 = vld [vmem:[%s2743 + $0x48] sm:$0xf]
      %v2763 = vld [vmem:[%s2743 + $0x4c] sm:$0xf]
      %v2764 = vld [vmem:[%s2743 + $0x50] sm:$0xf]
      %v2765 = vld [vmem:[%s2743 + $0x54] sm:$0xf]
      %v2766 = vld [vmem:[%s2743 + $0x58] sm:$0xf]
      %v2767 = vld [vmem:[%s2743 + $0x5c] sm:$0xf]
      %v2768 = vld [vmem:[%s2743 + $0x60] sm:$0xf]
      %v2769 = vld [vmem:[%s2743 + $0x64] sm:$0xf]
      %v2770 = vld [vmem:[%s2743 + $0x68] sm:$0xf]
      %v2771 = vld [vmem:[%s2743 + $0x6c] sm:$0xf]
      %v2772 = vld [vmem:[%s2743 + $0x70] sm:$0xf]
      %v2773 = vld [vmem:[%s2743 + $0x74] sm:$0xf]
      %v2774 = vld [vmem:[%s2743 + $0x78] sm:$0xf]
      %v2775 = vld [vmem:[%s2743 + $0x7c] sm:$0xf]
      %v2776 = vld [vmem:[%s2743 + $0x80] sm:$0xf]
      %v2777 = vld [vmem:[%s2743 + $0x84] sm:$0xf]
      %v2778 = vld [vmem:[%s2743 + $0x88] sm:$0xf]
      %v2779 = vld [vmem:[%s2743 + $0x8c] sm:$0xf]
      %v2780 = vld [vmem:[%s2743 + $0x90] sm:$0xf]
      %v2781 = vld [vmem:[%s2743 + $0x94] sm:$0xf]
      %v2782 = vld [vmem:[%s2743 + $0x98] sm:$0xf]
      %v2783 = vld [vmem:[%s2743 + $0x9c] sm:$0xf]
      %v2784 = vld [vmem:[%s2743 + $0xa0] sm:$0xf]
      %v2785 = vld [vmem:[%s2743 + $0xa4] sm:$0xf]
      %v2786 = vld [vmem:[%s2743 + $0xa8] sm:$0xf]
      %v2787 = vld [vmem:[%s2743 + $0xac] sm:$0xf]
      %v2788 = vld [vmem:[%s2743 + $0xb0] sm:$0xf]
      %v2789 = vld [vmem:[%s2743 + $0xb4] sm:$0xf]
      %v2790 = vld [vmem:[%s2743 + $0xb8] sm:$0xf]
      %v2791 = vld [vmem:[%s2743 + $0xbc] sm:$0xf]
      %v2792 = vld [vmem:[%s2743 + $0xc0] sm:$0xf]
      %v2793 = vld [vmem:[%s2743 + $0xc4] sm:$0xf]
      %v2794 = vld [vmem:[%s2743 + $0xc8] sm:$0xf]
      %v2795 = vld [vmem:[%s2743 + $0xcc] sm:$0xf]
      %v2796 = vld [vmem:[%s2743 + $0xd0] sm:$0xf]
      %v2797 = vld [vmem:[%s2743 + $0xd4] sm:$0xf]
      %v2798 = vld [vmem:[%s2743 + $0xd8] sm:$0xf]
      %v2799 = vld [vmem:[%s2743 + $0xdc] sm:$0xf]
      %v2800 = vld [vmem:[%s2743 + $0xe0] sm:$0xf]
      %v2801 = vld [vmem:[%s2743 + $0xe4] sm:$0xf]
      %v2802 = vld [vmem:[%s2743 + $0xe8] sm:$0xf]
      %v2803 = vld [vmem:[%s2743 + $0xec] sm:$0xf]
      %v2804 = vld [vmem:[%s2743 + $0xf0] sm:$0xf]
      %v2805 = vld [vmem:[%s2743 + $0xf4] sm:$0xf]
      %v2806 = vld [vmem:[%s2743 + $0xf8] sm:$0xf]
      %v2807 = vld [vmem:[%s2743 + $0xfc] sm:$0xf]
      %s2808 = scalar_lea.vmem %s9, 1
      %v2809 = vld [vmem:[%s2808] sm:$0x1]
      %v2811 = vlaneseq
      %v2812 = vshrl.u32 %v2811, 7
      %v2813 = vsub.s32 0, %v2812
      %v2814 = vrot.slane %v2809, %v2813
      %v2880 = vunpack.c.l.b16 %v2744
      %v2881 = vunpack.c.l.b16 %v2745
      %v2882 = vunpack.c.l.b16 %v2746
      %v2883 = vunpack.c.l.b16 %v2747
      %v2884 = vunpack.c.l.b16 %v2748
      %v2885 = vunpack.c.l.b16 %v2749
      %v2886 = vunpack.c.l.b16 %v2750
      %v2887 = vunpack.c.l.b16 %v2751
      %v2888 = vunpack.c.l.b16 %v2752
      %v2889 = vunpack.c.l.b16 %v2753
      %v2890 = vunpack.c.l.b16 %v2754
      %v2891 = vunpack.c.l.b16 %v2755
      %v2892 = vunpack.c.l.b16 %v2756
      %v2893 = vunpack.c.l.b16 %v2757
      %v2894 = vunpack.c.l.b16 %v2758
      %v2895 = vunpack.c.l.b16 %v2759
      %v2896 = vunpack.c.l.b16 %v2760
      %v2897 = vunpack.c.l.b16 %v2761
      %v2898 = vunpack.c.l.b16 %v2762
      %v2899 = vunpack.c.l.b16 %v2763
      %v2900 = vunpack.c.l.b16 %v2764
      %v2901 = vunpack.c.l.b16 %v2765
      %v2902 = vunpack.c.l.b16 %v2766
      %v2903 = vunpack.c.l.b16 %v2767
      %v2904 = vunpack.c.l.b16 %v2768
      %v2905 = vunpack.c.l.b16 %v2769
      %v2906 = vunpack.c.l.b16 %v2770
      %v2907 = vunpack.c.l.b16 %v2771
      %v2908 = vunpack.c.l.b16 %v2772
      %v2909 = vunpack.c.l.b16 %v2773
      %v2910 = vunpack.c.l.b16 %v2774
      %v2911 = vunpack.c.l.b16 %v2775
      %v2912 = vunpack.c.l.b16 %v2776
      %v2913 = vunpack.c.l.b16 %v2777
      %v2914 = vunpack.c.l.b16 %v2778
      %v2915 = vunpack.c.l.b16 %v2779
      %v2916 = vunpack.c.l.b16 %v2780
      %v2917 = vunpack.c.l.b16 %v2781
      %v2918 = vunpack.c.l.b16 %v2782
      %v2919 = vunpack.c.l.b16 %v2783
      %v2920 = vunpack.c.l.b16 %v2784
      %v2921 = vunpack.c.l.b16 %v2785
      %v2922 = vunpack.c.l.b16 %v2786
      %v2923 = vunpack.c.l.b16 %v2787
      %v2924 = vunpack.c.l.b16 %v2788
      %v2925 = vunpack.c.l.b16 %v2789
      %v2926 = vunpack.c.l.b16 %v2790
      %v2927 = vunpack.c.l.b16 %v2791
      %v2928 = vunpack.c.l.b16 %v2792
      %v2929 = vunpack.c.l.b16 %v2793
      %v2930 = vunpack.c.l.b16 %v2794
      %v2931 = vunpack.c.l.b16 %v2795
      %v2932 = vunpack.c.l.b16 %v2796
      %v2933 = vunpack.c.l.b16 %v2797
      %v2934 = vunpack.c.l.b16 %v2798
      %v2935 = vunpack.c.l.b16 %v2799
      %v2936 = vunpack.c.l.b16 %v2800
      %v2937 = vunpack.c.l.b16 %v2801
      %v2938 = vunpack.c.l.b16 %v2802
      %v2939 = vunpack.c.l.b16 %v2803
      %v2940 = vunpack.c.l.b16 %v2804
      %v2941 = vunpack.c.l.b16 %v2805
      %v2942 = vunpack.c.l.b16 %v2806
      %v2943 = vunpack.c.l.b16 %v2807
      %v2944 = vpack.c.b16 %v2881, %v2880
      %v2945 = vpack.c.b16 %v2883, %v2882
      %v2946 = vpack.c.b16 %v2885, %v2884
      %v2947 = vpack.c.b16 %v2887, %v2886
      %v2948 = vpack.c.b16 %v2889, %v2888
      %v2949 = vpack.c.b16 %v2891, %v2890
      %v2950 = vpack.c.b16 %v2893, %v2892
      %v2951 = vpack.c.b16 %v2895, %v2894
      %v2952 = vpack.c.b16 %v2897, %v2896
      %v2953 = vpack.c.b16 %v2899, %v2898
      %v2954 = vpack.c.b16 %v2901, %v2900
      %v2955 = vpack.c.b16 %v2903, %v2902
      %v2956 = vpack.c.b16 %v2905, %v2904
      %v2957 = vpack.c.b16 %v2907, %v2906
      %v2958 = vpack.c.b16 %v2909, %v2908
      %v2959 = vpack.c.b16 %v2911, %v2910
      %v2960 = vpack.c.b16 %v2913, %v2912
      %v2961 = vpack.c.b16 %v2915, %v2914
      %v2962 = vpack.c.b16 %v2917, %v2916
      %v2963 = vpack.c.b16 %v2919, %v2918
      %v2964 = vpack.c.b16 %v2921, %v2920
      %v2965 = vpack.c.b16 %v2923, %v2922
      %v2966 = vpack.c.b16 %v2925, %v2924
      %v2967 = vpack.c.b16 %v2927, %v2926
      %v2968 = vpack.c.b16 %v2929, %v2928
      %v2969 = vpack.c.b16 %v2931, %v2930
      %v2970 = vpack.c.b16 %v2933, %v2932
      %v2971 = vpack.c.b16 %v2935, %v2934
      %v2972 = vpack.c.b16 %v2937, %v2936
      %v2973 = vpack.c.b16 %v2939, %v2938
      %v2974 = vpack.c.b16 %v2941, %v2940
      %v2975 = vpack.c.b16 %v2943, %v2942
      %3008 = vmatprep.subr.bf16.mxu0 0
      %3009 = vmatpush1.bf16.msra.mxu0 %v2944
      %3010 = vmatprep.subr.bf16.mxu0 0
      %3011 = vmatpush1.bf16.msra.mxu0 %v2945
      %3012 = vmatprep.subr.bf16.mxu0 0
      %3013 = vmatpush1.bf16.msra.mxu0 %v2946
      %3014 = vmatprep.subr.bf16.mxu0 0
      %3015 = vmatpush1.bf16.msra.mxu0 %v2947
      %3016 = vmatprep.subr.bf16.mxu0 0
      %3017 = vmatpush1.bf16.msra.mxu0 %v2948
      %3018 = vmatprep.subr.bf16.mxu0 0
      %3019 = vmatpush1.bf16.msra.mxu0 %v2949
      %3020 = vmatprep.subr.bf16.mxu0 0
      %3021 = vmatpush1.bf16.msra.mxu0 %v2950
      %3022 = vmatprep.subr.bf16.mxu0 0
      %3023 = vmatpush1.bf16.msra.mxu0 %v2951
      %3024 = vmatprep.subr.bf16.mxu0 0
      %3025 = vmatpush1.bf16.msra.mxu0 %v2952
      %3026 = vmatprep.subr.bf16.mxu0 0
      %3027 = vmatpush1.bf16.msra.mxu0 %v2953
      %3028 = vmatprep.subr.bf16.mxu0 0
      %3029 = vmatpush1.bf16.msra.mxu0 %v2954
      %3030 = vmatprep.subr.bf16.mxu0 0
      %3031 = vmatpush1.bf16.msra.mxu0 %v2955
      %3032 = vmatprep.subr.bf16.mxu0 0
      %3033 = vmatpush1.bf16.msra.mxu0 %v2956
      %3034 = vmatprep.subr.bf16.mxu0 0
      %3035 = vmatpush1.bf16.msra.mxu0 %v2957
      %3036 = vmatprep.subr.bf16.mxu0 0
      %3037 = vmatpush1.bf16.msra.mxu0 %v2958
      %3038 = vmatprep.subr.bf16.mxu0 0
      %3039 = vmatpush1.bf16.msra.mxu0 %v2959
      %3040 = vmatprep.mubr.bf16.mxu0 %v2733
      %3041 = vmatmul.mubr.bf16.gmra.mrb[0].mxu0 %v2729
      %v3042 = vpop.f32.mrb[0].mxu0
      %v3043 = vadd.f32 %v2814, %v3042
      %v3044 = vpop.f32.mrb[0].mxu0
      %v3045 = vpop.f32.mrb[0].mxu0
      %v3046 = vadd.f32 %v2814, %v3045
      %v3047 = vpop.f32.mrb[0].mxu0
      %3048 = vdwg.mxu0
      %3049 = vmatprep.subr.bf16.mxu0 0
      %3050 = vmatpush1.bf16.msra.mxu0 %v2960
      %3051 = vmatprep.subr.bf16.mxu0 0
      %3052 = vmatpush1.bf16.msra.mxu0 %v2961
      %3053 = vmatprep.subr.bf16.mxu0 0
      %3054 = vmatpush1.bf16.msra.mxu0 %v2962
      %3055 = vmatprep.subr.bf16.mxu0 0
      %3056 = vmatpush1.bf16.msra.mxu0 %v2963
      %3057 = vmatprep.subr.bf16.mxu0 0
      %3058 = vmatpush1.bf16.msra.mxu0 %v2964
      %3059 = vmatprep.subr.bf16.mxu0 0
      %3060 = vmatpush1.bf16.msra.mxu0 %v2965
      %3061 = vmatprep.subr.bf16.mxu0 0
      %3062 = vmatpush1.bf16.msra.mxu0 %v2966
      %3063 = vmatprep.subr.bf16.mxu0 0
      %3064 = vmatpush1.bf16.msra.mxu0 %v2967
      %3065 = vmatprep.subr.bf16.mxu0 0
      %3066 = vmatpush1.bf16.msra.mxu0 %v2968
      %3067 = vmatprep.subr.bf16.mxu0 0
      %3068 = vmatpush1.bf16.msra.mxu0 %v2969
      %3069 = vmatprep.subr.bf16.mxu0 0
      %3070 = vmatpush1.bf16.msra.mxu0 %v2970
      %3071 = vmatprep.subr.bf16.mxu0 0
      %3072 = vmatpush1.bf16.msra.mxu0 %v2971
      %3073 = vmatprep.subr.bf16.mxu0 0
      %3074 = vmatpush1.bf16.msra.mxu0 %v2972
      %3075 = vmatprep.subr.bf16.mxu0 0
      %3076 = vmatpush1.bf16.msra.mxu0 %v2973
      %3077 = vmatprep.subr.bf16.mxu0 0
      %3078 = vmatpush1.bf16.msra.mxu0 %v2974
      %3079 = vmatprep.subr.bf16.mxu0 0
      %3080 = vmatpush1.bf16.msra.mxu0 %v2975
      %3081 = vmatprep.mubr.bf16.mxu0 %v2741
      %3082 = vmatmul.mubr.bf16.gmra.mrb[0].mxu0 %v2737
      %v3083 = vpop.f32.mrb[0].mxu0
      %v3084 = vadd.f32 %v3043, %v3083
      %v3085 = vpop.f32.mrb[0].mxu0
      %v3086 = vpop.f32.mrb[0].mxu0
      %v3087 = vadd.f32 %v3046, %v3086
      %v3088 = vpop.f32.mrb[0].mxu0
      %3089 = vdwg.mxu0
      %v3090 = vmax.f32 %v3084, 0.0
      %v3091 = vmax.f32 %v3087, 0.0
      %v3092 = vpack.c.bf16 %v3091, %v3090
      %v3094 = vshrl.u32 %v3092, 16
      %v3096 = vshll.u32 %v3092, 16
      %v3098 = vrot.slane %v3096, 1
      %v3099 = vor.u32 %v3094, %v3098
      %3100 = vrot.lane.b32.xlu0 %v3099, 64
      %v3101 = vpop.permute.xlu0 %3100
      %v3103 = vrot.slane %v3092, 1
      %v3104 = vrot.slane %v3094, 1
      %v3105 = vrot.slane %v3096, 2
      %v3106 = vor.u32 %v3104, %v3105
      %3107 = vrot.lane.b32.xlu0 %v3106, 64
      %v3108 = vpop.permute.xlu0 %3107
      %v3109 = vrot.slane %v3092, 2
      %v3110 = vrot.slane %v3094, 2
      %v3111 = vrot.slane %v3096, 3
      %v3112 = vor.u32 %v3110, %v3111
      %3113 = vrot.lane.b32.xlu0 %v3112, 64
      %v3114 = vpop.permute.xlu0 %3113
      %v3115 = vrot.slane %v3092, 3
      %v3116 = vrot.slane %v3094, 3
      %v3117 = vrot.slane %v3096, 4
      %v3118 = vor.u32 %v3116, %v3117
      %3119 = vrot.lane.b32.xlu0 %v3118, 64
      %v3120 = vpop.permute.xlu0 %3119
      %v3122 = vsel %vm771, %v3092, %v3101
      %v3126 = vsel %vm771, %v3103, %v3108
      %v3130 = vsel %vm771, %v3109, %v3114
      %v3134 = vsel %vm771, %v3115, %v3120
      %s3136 = scalar_lea.vmem %s8, 512
      %v3137 = vld [vmem:[%s3136] sm:$0xf]
      %v3138 = vld [vmem:[%s3136 + $0x4] sm:$0xf]
      %v3139 = vld [vmem:[%s3136 + $0x8] sm:$0xf]
      %v3140 = vld [vmem:[%s3136 + $0xc] sm:$0xf]
      %v3141 = vld [vmem:[%s3136 + $0x10] sm:$0xf]
      %v3142 = vld [vmem:[%s3136 + $0x14] sm:$0xf]
      %v3143 = vld [vmem:[%s3136 + $0x18] sm:$0xf]
      %v3144 = vld [vmem:[%s3136 + $0x1c] sm:$0xf]
      %v3145 = vld [vmem:[%s3136 + $0x20] sm:$0xf]
      %v3146 = vld [vmem:[%s3136 + $0x24] sm:$0xf]
      %v3147 = vld [vmem:[%s3136 + $0x28] sm:$0xf]
      %v3148 = vld [vmem:[%s3136 + $0x2c] sm:$0xf]
      %v3149 = vld [vmem:[%s3136 + $0x30] sm:$0xf]
      %v3150 = vld [vmem:[%s3136 + $0x34] sm:$0xf]
      %v3151 = vld [vmem:[%s3136 + $0x38] sm:$0xf]
      %v3152 = vld [vmem:[%s3136 + $0x3c] sm:$0xf]
      %v3153 = vld [vmem:[%s3136 + $0x40] sm:$0xf]
      %v3154 = vld [vmem:[%s3136 + $0x44] sm:$0xf]
      %v3155 = vld [vmem:[%s3136 + $0x48] sm:$0xf]
      %v3156 = vld [vmem:[%s3136 + $0x4c] sm:$0xf]
      %v3157 = vld [vmem:[%s3136 + $0x50] sm:$0xf]
      %v3158 = vld [vmem:[%s3136 + $0x54] sm:$0xf]
      %v3159 = vld [vmem:[%s3136 + $0x58] sm:$0xf]
      %v3160 = vld [vmem:[%s3136 + $0x5c] sm:$0xf]
      %v3161 = vld [vmem:[%s3136 + $0x60] sm:$0xf]
      %v3162 = vld [vmem:[%s3136 + $0x64] sm:$0xf]
      %v3163 = vld [vmem:[%s3136 + $0x68] sm:$0xf]
      %v3164 = vld [vmem:[%s3136 + $0x6c] sm:$0xf]
      %v3165 = vld [vmem:[%s3136 + $0x70] sm:$0xf]
      %v3166 = vld [vmem:[%s3136 + $0x74] sm:$0xf]
      %v3167 = vld [vmem:[%s3136 + $0x78] sm:$0xf]
      %v3168 = vld [vmem:[%s3136 + $0x7c] sm:$0xf]
      %v3169 = vld [vmem:[%s3136 + $0x80] sm:$0xf]
      %v3170 = vld [vmem:[%s3136 + $0x84] sm:$0xf]
      %v3171 = vld [vmem:[%s3136 + $0x88] sm:$0xf]
      %v3172 = vld [vmem:[%s3136 + $0x8c] sm:$0xf]
      %v3173 = vld [vmem:[%s3136 + $0x90] sm:$0xf]
      %v3174 = vld [vmem:[%s3136 + $0x94] sm:$0xf]
      %v3175 = vld [vmem:[%s3136 + $0x98] sm:$0xf]
      %v3176 = vld [vmem:[%s3136 + $0x9c] sm:$0xf]
      %v3177 = vld [vmem:[%s3136 + $0xa0] sm:$0xf]
      %v3178 = vld [vmem:[%s3136 + $0xa4] sm:$0xf]
      %v3179 = vld [vmem:[%s3136 + $0xa8] sm:$0xf]
      %v3180 = vld [vmem:[%s3136 + $0xac] sm:$0xf]
      %v3181 = vld [vmem:[%s3136 + $0xb0] sm:$0xf]
      %v3182 = vld [vmem:[%s3136 + $0xb4] sm:$0xf]
      %v3183 = vld [vmem:[%s3136 + $0xb8] sm:$0xf]
      %v3184 = vld [vmem:[%s3136 + $0xbc] sm:$0xf]
      %v3185 = vld [vmem:[%s3136 + $0xc0] sm:$0xf]
      %v3186 = vld [vmem:[%s3136 + $0xc4] sm:$0xf]
      %v3187 = vld [vmem:[%s3136 + $0xc8] sm:$0xf]
      %v3188 = vld [vmem:[%s3136 + $0xcc] sm:$0xf]
      %v3189 = vld [vmem:[%s3136 + $0xd0] sm:$0xf]
      %v3190 = vld [vmem:[%s3136 + $0xd4] sm:$0xf]
      %v3191 = vld [vmem:[%s3136 + $0xd8] sm:$0xf]
      %v3192 = vld [vmem:[%s3136 + $0xdc] sm:$0xf]
      %v3193 = vld [vmem:[%s3136 + $0xe0] sm:$0xf]
      %v3194 = vld [vmem:[%s3136 + $0xe4] sm:$0xf]
      %v3195 = vld [vmem:[%s3136 + $0xe8] sm:$0xf]
      %v3196 = vld [vmem:[%s3136 + $0xec] sm:$0xf]
      %v3197 = vld [vmem:[%s3136 + $0xf0] sm:$0xf]
      %v3198 = vld [vmem:[%s3136 + $0xf4] sm:$0xf]
      %v3199 = vld [vmem:[%s3136 + $0xf8] sm:$0xf]
      %v3200 = vld [vmem:[%s3136 + $0xfc] sm:$0xf]
      %s3201 = scalar_lea.vmem %s9, 2
      %v3202 = vld [vmem:[%s3201] sm:$0x1]
      %v3204 = vlaneseq
      %v3205 = vshrl.u32 %v3204, 7
      %v3206 = vsub.s32 0, %v3205
      %v3207 = vrot.slane %v3202, %v3206
      %v3273 = vunpack.c.l.b16 %v3137
      %v3274 = vunpack.c.l.b16 %v3138
      %v3275 = vunpack.c.l.b16 %v3139
      %v3276 = vunpack.c.l.b16 %v3140
      %v3277 = vunpack.c.l.b16 %v3141
      %v3278 = vunpack.c.l.b16 %v3142
      %v3279 = vunpack.c.l.b16 %v3143
      %v3280 = vunpack.c.l.b16 %v3144
      %v3281 = vunpack.c.l.b16 %v3145
      %v3282 = vunpack.c.l.b16 %v3146
      %v3283 = vunpack.c.l.b16 %v3147
      %v3284 = vunpack.c.l.b16 %v3148
      %v3285 = vunpack.c.l.b16 %v3149
      %v3286 = vunpack.c.l.b16 %v3150
      %v3287 = vunpack.c.l.b16 %v3151
      %v3288 = vunpack.c.l.b16 %v3152
      %v3289 = vunpack.c.l.b16 %v3153
      %v3290 = vunpack.c.l.b16 %v3154
      %v3291 = vunpack.c.l.b16 %v3155
      %v3292 = vunpack.c.l.b16 %v3156
      %v3293 = vunpack.c.l.b16 %v3157
      %v3294 = vunpack.c.l.b16 %v3158
      %v3295 = vunpack.c.l.b16 %v3159
      %v3296 = vunpack.c.l.b16 %v3160
      %v3297 = vunpack.c.l.b16 %v3161
      %v3298 = vunpack.c.l.b16 %v3162
      %v3299 = vunpack.c.l.b16 %v3163
      %v3300 = vunpack.c.l.b16 %v3164
      %v3301 = vunpack.c.l.b16 %v3165
      %v3302 = vunpack.c.l.b16 %v3166
      %v3303 = vunpack.c.l.b16 %v3167
      %v3304 = vunpack.c.l.b16 %v3168
      %v3305 = vunpack.c.l.b16 %v3169
      %v3306 = vunpack.c.l.b16 %v3170
      %v3307 = vunpack.c.l.b16 %v3171
      %v3308 = vunpack.c.l.b16 %v3172
      %v3309 = vunpack.c.l.b16 %v3173
      %v3310 = vunpack.c.l.b16 %v3174
      %v3311 = vunpack.c.l.b16 %v3175
      %v3312 = vunpack.c.l.b16 %v3176
      %v3313 = vunpack.c.l.b16 %v3177
      %v3314 = vunpack.c.l.b16 %v3178
      %v3315 = vunpack.c.l.b16 %v3179
      %v3316 = vunpack.c.l.b16 %v3180
      %v3317 = vunpack.c.l.b16 %v3181
      %v3318 = vunpack.c.l.b16 %v3182
      %v3319 = vunpack.c.l.b16 %v3183
      %v3320 = vunpack.c.l.b16 %v3184
      %v3321 = vunpack.c.l.b16 %v3185
      %v3322 = vunpack.c.l.b16 %v3186
      %v3323 = vunpack.c.l.b16 %v3187
      %v3324 = vunpack.c.l.b16 %v3188
      %v3325 = vunpack.c.l.b16 %v3189
      %v3326 = vunpack.c.l.b16 %v3190
      %v3327 = vunpack.c.l.b16 %v3191
      %v3328 = vunpack.c.l.b16 %v3192
      %v3329 = vunpack.c.l.b16 %v3193
      %v3330 = vunpack.c.l.b16 %v3194
      %v3331 = vunpack.c.l.b16 %v3195
      %v3332 = vunpack.c.l.b16 %v3196
      %v3333 = vunpack.c.l.b16 %v3197
      %v3334 = vunpack.c.l.b16 %v3198
      %v3335 = vunpack.c.l.b16 %v3199
      %v3336 = vunpack.c.l.b16 %v3200
      %v3337 = vpack.c.b16 %v3274, %v3273
      %v3338 = vpack.c.b16 %v3276, %v3275
      %v3339 = vpack.c.b16 %v3278, %v3277
      %v3340 = vpack.c.b16 %v3280, %v3279
      %v3341 = vpack.c.b16 %v3282, %v3281
      %v3342 = vpack.c.b16 %v3284, %v3283
      %v3343 = vpack.c.b16 %v3286, %v3285
      %v3344 = vpack.c.b16 %v3288, %v3287
      %v3345 = vpack.c.b16 %v3290, %v3289
      %v3346 = vpack.c.b16 %v3292, %v3291
      %v3347 = vpack.c.b16 %v3294, %v3293
      %v3348 = vpack.c.b16 %v3296, %v3295
      %v3349 = vpack.c.b16 %v3298, %v3297
      %v3350 = vpack.c.b16 %v3300, %v3299
      %v3351 = vpack.c.b16 %v3302, %v3301
      %v3352 = vpack.c.b16 %v3304, %v3303
      %v3353 = vpack.c.b16 %v3306, %v3305
      %v3354 = vpack.c.b16 %v3308, %v3307
      %v3355 = vpack.c.b16 %v3310, %v3309
      %v3356 = vpack.c.b16 %v3312, %v3311
      %v3357 = vpack.c.b16 %v3314, %v3313
      %v3358 = vpack.c.b16 %v3316, %v3315
      %v3359 = vpack.c.b16 %v3318, %v3317
      %v3360 = vpack.c.b16 %v3320, %v3319
      %v3361 = vpack.c.b16 %v3322, %v3321
      %v3362 = vpack.c.b16 %v3324, %v3323
      %v3363 = vpack.c.b16 %v3326, %v3325
      %v3364 = vpack.c.b16 %v3328, %v3327
      %v3365 = vpack.c.b16 %v3330, %v3329
      %v3366 = vpack.c.b16 %v3332, %v3331
      %v3367 = vpack.c.b16 %v3334, %v3333
      %v3368 = vpack.c.b16 %v3336, %v3335
      %3401 = vmatprep.subr.bf16.mxu0 0
      %3402 = vmatpush1.bf16.msra.mxu0 %v3337
      %3403 = vmatprep.subr.bf16.mxu0 0
      %3404 = vmatpush1.bf16.msra.mxu0 %v3338
      %3405 = vmatprep.subr.bf16.mxu0 0
      %3406 = vmatpush1.bf16.msra.mxu0 %v3339
      %3407 = vmatprep.subr.bf16.mxu0 0
      %3408 = vmatpush1.bf16.msra.mxu0 %v3340
      %3409 = vmatprep.subr.bf16.mxu0 0
      %3410 = vmatpush1.bf16.msra.mxu0 %v3341
      %3411 = vmatprep.subr.bf16.mxu0 0
      %3412 = vmatpush1.bf16.msra.mxu0 %v3342
      %3413 = vmatprep.subr.bf16.mxu0 0
      %3414 = vmatpush1.bf16.msra.mxu0 %v3343
      %3415 = vmatprep.subr.bf16.mxu0 0
      %3416 = vmatpush1.bf16.msra.mxu0 %v3344
      %3417 = vmatprep.subr.bf16.mxu0 0
      %3418 = vmatpush1.bf16.msra.mxu0 %v3345
      %3419 = vmatprep.subr.bf16.mxu0 0
      %3420 = vmatpush1.bf16.msra.mxu0 %v3346
      %3421 = vmatprep.subr.bf16.mxu0 0
      %3422 = vmatpush1.bf16.msra.mxu0 %v3347
      %3423 = vmatprep.subr.bf16.mxu0 0
      %3424 = vmatpush1.bf16.msra.mxu0 %v3348
      %3425 = vmatprep.subr.bf16.mxu0 0
      %3426 = vmatpush1.bf16.msra.mxu0 %v3349
      %3427 = vmatprep.subr.bf16.mxu0 0
      %3428 = vmatpush1.bf16.msra.mxu0 %v3350
      %3429 = vmatprep.subr.bf16.mxu0 0
      %3430 = vmatpush1.bf16.msra.mxu0 %v3351
      %3431 = vmatprep.subr.bf16.mxu0 0
      %3432 = vmatpush1.bf16.msra.mxu0 %v3352
      %3433 = vmatprep.mubr.bf16.mxu0 %v3126
      %3434 = vmatmul.mubr.bf16.gmra.mrb[0].mxu0 %v3122
      %v3435 = vpop.f32.mrb[0].mxu0
      %v3436 = vadd.f32 %v3207, %v3435
      %v3437 = vpop.f32.mrb[0].mxu0
      %v3438 = vpop.f32.mrb[0].mxu0
      %v3439 = vpop.f32.mrb[0].mxu0
      %3440 = vdwg.mxu0
      %3441 = vmatprep.subr.bf16.mxu0 0
      %3442 = vmatpush1.bf16.msra.mxu0 %v3353
      %3443 = vmatprep.subr.bf16.mxu0 0
      %3444 = vmatpush1.bf16.msra.mxu0 %v3354
      %3445 = vmatprep.subr.bf16.mxu0 0
      %3446 = vmatpush1.bf16.msra.mxu0 %v3355
      %3447 = vmatprep.subr.bf16.mxu0 0
      %3448 = vmatpush1.bf16.msra.mxu0 %v3356
      %3449 = vmatprep.subr.bf16.mxu0 0
      %3450 = vmatpush1.bf16.msra.mxu0 %v3357
      %3451 = vmatprep.subr.bf16.mxu0 0
      %3452 = vmatpush1.bf16.msra.mxu0 %v3358
      %3453 = vmatprep.subr.bf16.mxu0 0
      %3454 = vmatpush1.bf16.msra.mxu0 %v3359
      %3455 = vmatprep.subr.bf16.mxu0 0
      %3456 = vmatpush1.bf16.msra.mxu0 %v3360
      %3457 = vmatprep.subr.bf16.mxu0 0
      %3458 = vmatpush1.bf16.msra.mxu0 %v3361
      %3459 = vmatprep.subr.bf16.mxu0 0
      %3460 = vmatpush1.bf16.msra.mxu0 %v3362
      %3461 = vmatprep.subr.bf16.mxu0 0
      %3462 = vmatpush1.bf16.msra.mxu0 %v3363
      %3463 = vmatprep.subr.bf16.mxu0 0
      %3464 = vmatpush1.bf16.msra.mxu0 %v3364
      %3465 = vmatprep.subr.bf16.mxu0 0
      %3466 = vmatpush1.bf16.msra.mxu0 %v3365
      %3467 = vmatprep.subr.bf16.mxu0 0
      %3468 = vmatpush1.bf16.msra.mxu0 %v3366
      %3469 = vmatprep.subr.bf16.mxu0 0
      %3470 = vmatpush1.bf16.msra.mxu0 %v3367
      %3471 = vmatprep.subr.bf16.mxu0 0
      %3472 = vmatpush1.bf16.msra.mxu0 %v3368
      %3473 = vmatprep.mubr.bf16.mxu0 %v3134
      %3474 = vmatmul.mubr.bf16.gmra.mrb[0].mxu0 %v3130
      %v3475 = vpop.f32.mrb[0].mxu0
      %v3476 = vadd.f32 %v3436, %v3475
      %v3477 = vpop.f32.mrb[0].mxu0
      %v3478 = vpop.f32.mrb[0].mxu0
      %v3479 = vpop.f32.mrb[0].mxu0
      %3480 = vdwg.mxu0
      %v3481 = vmax.f32 %v3476, 0.0
      %v3483 = vrot.slane %v3481, 1
      %v3485 = vmax.f32 %v3481, %v3483
      %v3486 = vrot.slane %v3481, 2
      %v3488 = vmax.f32 %v3485, %v3486
      %v3489 = vrot.slane %v3481, 3
      %v3491 = vmax.f32 %v3488, %v3489
      %v3493 = vrot.slane %v1704, 1
      %v3495 = vrot.slane %v1704, 2
      %v3498 = vrot.slane %v3491, 5
      %v3500 = vsel %vm708, %v1704, %v3493
      %v3501 = vsel %vm2178, %v3500, %v3495
      %v3502 = vsel %vm677, %v3501, %v3498
      %v3503 = vsel %vm2137, %v3502, %v3491
      %vm3504 = vcmask 520192
      %3505 = vst.msk [vmem:[%s377] sm:$0x1f] %vm3504, %v3503
      %p3506 = scmp.lt.s32.totalorder %s21, 1
      %s3507 = scalar_select %p3506, %s21, 1
      %s3508 = smul.addr %s3507, 8
      %s3509 = scalar_lea.vmem %s10, %s3508
      // Predicated region
      $region61: #{feature_extractor_forward.1} parent=59 // pred_check
        %p3510 = pneg %p259
      $region62: #{feature_extractor_forward.1} parent=59 // pred_check_branch
        %3512 = sbr.rel (%p3510) target = $region64
      $region63: #{feature_extractor_forward.1} parent=59 // pred_region
        _
      $region64: #{feature_extractor_forward.1} parent=59 // pred_fallthru
        _
    $region60: #{feature_extractor_forward.1} parent=5 // pred_fallthru
      _
    %p3513 = scmp.le.s32.totalorder 2, %s16
    // Predicated region
    $region65: #{feature_extractor_forward.1} parent=5 // pred_check
      %p3514 = pneg %p3513
    $region66: #{feature_extractor_forward.1} parent=5 // pred_check_branch
      %3516 = sbr.rel (%p3514) target = $region68
    $region67: #{feature_extractor_forward.1} parent=5 // pred_region
      %s3517 = ssub.s32 %s16, 2
      // Predicated region
      $region69: #{feature_extractor_forward.1} parent=67 // pred_check
        %p3518 = pneg %p265
      $region70: #{feature_extractor_forward.1} parent=67 // pred_check_branch
        %3520 = sbr.rel (%p3518) target = $region72
      $region71: #{feature_extractor_forward.1} parent=67 // pred_region
        %p3521 = scmp.lt.s32.totalorder %s22, 1
        %s3522 = scalar_select %p3521, %s22, 1
        %s3523 = smul.addr %s3522, 8
        %s3524 = scalar_lea.vmem %s10, %s3523
      $region72: #{feature_extractor_forward.1} parent=67 // pred_fallthru
        _
    $region68: #{feature_extractor_forward.1} parent=5 // pred_fallthru
      _
  $region6: #{feature_extractor_forward.1} parent=0 // loop_footer
    %s20 = sadd.s32 1, %s16
  $region7: #{feature_extractor_forward.1} parent=0 // loop_footer_branch
    %15 = sbr.rel target = $region3
  $region8: #{feature_extractor_forward.1} parent=0 // loop_exit
    _

</llo_original>
